<compile_context>
chip_gen: v6e
topology: v6e:2x2x1
jax: 0.10.0
libtpu: 0.0.40
codegen_flags: <defaults>
</compile_context>

<pallas_src>
import functools
import math

import jax
import jax.numpy as jnp
from jax.experimental import pallas as pl
from jax.experimental.pallas import tpu as pltpu

_LANE = 128  # TPU vreg lane count (minor tile dim)


def _round_up(x: int, mult: int) -> int:
    return ((x + mult - 1) // mult) * mult


# ---------------------------------------------------------------------------
# Kernel bodies.  Every variant emits one lane-dense [TM, 2T] store:
#     out = sin(position[:, None] * inv_timescales[None, :] + phase[None, :])
# with phase = pi/2 on the second half of the lanes (sin(x + pi/2) == cos(x)),
# so the whole row is produced by a single full-width transcendental stream.
# ---------------------------------------------------------------------------


def _store_signal(out_ref, pos_col, inv_ref, phase_ref):
    scaled = pos_col * inv_ref[...] + phase_ref[...]          # [TM, 2T] f32
    out_ref[...] = jnp.sin(scaled).astype(out_ref.dtype)


def _iota_kernel(inv_ref, phase_ref, out_ref):
    """seq_length path: positions generated in-kernel (no position input)."""
    tm = out_ref.shape[0]
    base = pl.program_id(0) * tm
    row = jax.lax.broadcasted_iota(jnp.int32, (tm, 1), 0)     # sublane iota
    pos_col = (base + row).astype(jnp.float32)                # [TM, 1]
    _store_signal(out_ref, pos_col, inv_ref, phase_ref)


def _row_kernel(inv_ref, phase_ref, pos_ref, out_ref, *, relayout):
    """Explicit-position path: lane-dense [1, TM] input + in-kernel relayout."""
    tm = out_ref.shape[0]
    row = pos_ref[...]                                        # [1, TM]
    if relayout == "transpose":
        pos_col = jnp.transpose(row, (1, 0))                  # [TM, 1]
    else:
        pos_col = row.reshape(tm, 1)                          # [TM, 1]
    _store_signal(out_ref, pos_col, inv_ref, phase_ref)


def _col_kernel(inv_ref, phase_ref, pos_ref, out_ref):
    """Explicit-position fallback: [TM, 1] column input (lane-padded DMA)."""
    _store_signal(out_ref, pos_ref[...], inv_ref, phase_ref)


@functools.cache
def _row_to_col_relayout():
    """One-time probe: can Mosaic turn a lane-dense [1, N] row into an [N, 1]
    column inside a kernel?  Returns 'reshape' / 'transpose' / None."""
    n = 2 * _LANE

    def run(method):
        def kernel(pos_ref, out_ref):
            row = pos_ref[...]
            if method == "transpose":
                col = jnp.transpose(row, (1, 0))
            else:
                col = row.reshape(n, 1)
            out_ref[...] = col * jnp.ones((1, _LANE), jnp.float32)

        x = jnp.arange(n, dtype=jnp.float32).reshape(1, n)
        y = pl.pallas_call(
            kernel,
            out_shape=jax.ShapeDtypeStruct((n, _LANE), jnp.float32),
            grid=(1,),
            in_specs=[pl.BlockSpec((1, n), lambda i: (0, 0))],
            out_specs=pl.BlockSpec((n, _LANE), lambda i: (i, 0)),
        )(x)
        y = jax.block_until_ready(y)
        want = jnp.broadcast_to(x.reshape(n, 1), (n, _LANE))
        return bool(jnp.allclose(y, want))

    for method in ("reshape", "transpose"):
        try:
            if run(method):
                return method
        except Exception:
            continue
    return None


# ---------------------------------------------------------------------------
# VMEM-aware tile sizing.
# ---------------------------------------------------------------------------


def _tpu_vmem_bytes() -> int:
    """Per-TensorCore VMEM capacity (conservatively clamped)."""
    vmem = 64 << 20
    try:
        vmem = int(pltpu.get_tpu_info().vmem_capacity_bytes)
    except Exception:
        pass
    try:
        kind = jax.devices()[0].device_kind.lower()
    except Exception:
        kind = ""
    if "v7" in kind or "7x" in kind:
        # v7x has 64 MiB per TensorCore; clamp in case the query reports the
        # per-chip (2-core) number.
        vmem = min(vmem, 64 << 20)
    return int(max(min(vmem, 128 << 20), 32 << 20))


def _choose_tile_m(m: int, two_t: int, itemsize: int, vmem_bytes: int) -> int:
    """Output tile rows.

    Budget ~2/3 of per-core VMEM across the double-buffered output tile plus
    ~2 full-tile f32 temporaries (Mosaic materialises the f32 `scaled`
    intermediate), cap at 8192 rows (per-step ~0.35us overhead becomes
    negligible), use a 128-row granule (lane multiple for the [1, TM] position
    block and >= the native sublane tile of f32/bf16/int8 outputs), and keep
    >= 4 grid steps for big problems so v7x's two TensorCores stay balanced.
    """
    bytes_per_row = two_t * (2 * itemsize + 8)
    budget = (2 * vmem_bytes) // 3
    tm = budget // max(bytes_per_row, 1)
    tm = max(_LANE, min(int(tm), 8192))
    tm = (tm // _LANE) * _LANE
    if m <= tm and m < 4096:
        return m                         # single full-extent block (always legal)
    tm = min(tm, _round_up(pl.cdiv(m, 4), _LANE))
    return max(tm, _LANE)


def _vmem_limit(tm, two_t, itemsize, vmem_cap, pos_block_bytes):
    # double-buffered output + ~2 full-tile f32 temporaries + double-buffered
    # position block + tiny inv/phase blocks + Mosaic internal-scratch margin.
    need = tm * two_t * (2 * itemsize + 8)
    need += 2 * pos_block_bytes
    need += 2 * 2 * 8 * _round_up(two_t, _LANE) * 4
    need += 8 << 20
    return int(min(vmem_cap, max(need, 32 << 20)))


# ---------------------------------------------------------------------------
# Wrappers.
# ---------------------------------------------------------------------------


def _positional_embedding_jnp(position, num_timescales, log_inc, min_timescale,
                              out_dtype):
    inv = (float(min_timescale)
           * jnp.exp(jnp.arange(num_timescales, dtype=jnp.float32)
                     * jnp.float32(-log_inc)))
    scaled = position.astype(jnp.float32)[:, :, None] * inv[None, None, :]
    return jnp.concatenate([jnp.sin(scaled), jnp.cos(scaled)],
                           axis=-1).astype(out_dtype)


def _pallas_signal(position, b, s, num_timescales, log_inc, min_timescale,
                   out_dtype, tile_m):
    two_t = 2 * num_timescales
    m = b * s
    itemsize = jnp.dtype(out_dtype).itemsize

    vmem_cap = _tpu_vmem_bytes()
    if tile_m is not None:
        tm = min(m, max(8, (int(tile_m) // 8) * 8))
    else:
        tm = _choose_tile_m(m, two_t, itemsize, vmem_cap)
    grid = (pl.cdiv(m, tm),)

    # inv_timescales / phase rows: computed once host-side, passed as two tiny
    # [1, 2T] operands whose block index never changes -> fetched into VMEM
    # once; the per-tile VALU work stays on the sin polynomial.
    k = jnp.arange(num_timescales, dtype=jnp.float32)
    inv_half = float(min_timescale) * jnp.exp(k * jnp.float32(-log_inc))
    inv_row = jnp.concatenate([inv_half, inv_half]).reshape(1, two_t)
    phase_row = jnp.concatenate(
        [jnp.zeros((num_timescales,), jnp.float32),
         jnp.full((num_timescales,), math.pi / 2.0, dtype=jnp.float32)],
    ).reshape(1, two_t)                                # sin(x + pi/2) == cos(x)

    const_spec = pl.BlockSpec((1, two_t), lambda i: (0, 0))
    out_spec = pl.BlockSpec((tm, two_t), lambda i: (i, 0))
    out_shape = jax.ShapeDtypeStruct((m, two_t), out_dtype)

    if position is None:
        # seq_length path: in-kernel iota positions, no position operand.
        kernel = _iota_kernel
        in_specs = [const_spec, const_spec]
        operands = (inv_row, phase_row)
        pos_block_bytes = 0
    else:
        pos_flat = position.astype(jnp.float32).reshape(1, m)
        relayout = _row_to_col_relayout()
        if relayout is not None and (tm % _LANE == 0 or tm == m):
            kernel = functools.partial(_row_kernel, relayout=relayout)
            in_specs = [const_spec, const_spec,
                        pl.BlockSpec((1, tm), lambda i: (0, i))]
            operands = (inv_row, phase_row, pos_flat)
            pos_block_bytes = 8 * tm * 4     # (1, TM) pads to 8 sublanes
        else:
            # Known-good fallback: lane-padded [TM, 1] column DMA.
            kernel = _col_kernel
            in_specs = [const_spec, const_spec,
                        pl.BlockSpec((tm, 1), lambda i: (i, 0))]
            operands = (inv_row, phase_row, pos_flat.reshape(m, 1))
            pos_block_bytes = tm * _LANE * 4  # (TM, 1) pads to 128 lanes

    out = pl.pallas_call(
        kernel,
        out_shape=out_shape,
        grid=grid,
        in_specs=in_specs,
        out_specs=out_spec,
        compiler_params=pltpu.CompilerParams(
            dimension_semantics=("parallel",),   # v7x: tiles split across 2 TCs
            vmem_limit_bytes=_vmem_limit(tm, two_t, itemsize, vmem_cap,
                                         pos_block_bytes)),
    )(*operands)
    return out.reshape(b, s, two_t)


def positional_embedding(embedding_dims: int,
                         seq_length: int | None = None,
                         position: jax.Array | None = None,
                         min_timescale: int = 1,
                         max_timescale: int = 10000,
                         out_dtype=jnp.float32,
                         tile_m: int | None = None) -> jax.Array:
    """Pallas TPU port of TimesFM PositionalEmbedding.forward.

    Returns [B, S(+d%2), 2*(embedding_dims//2)].  out_dtype defaults to f32 to
    match PyTorch; pass bfloat16 to halve HBM store traffic on the store-bound
    v5e/v6e chips.  tile_m overrides the VMEM-derived tile size (testing).
    """
    num_timescales = embedding_dims // 2
    two_t = 2 * num_timescales
    log_inc = (math.log(float(max_timescale) / float(min_timescale))
               / max(num_timescales - 1, 1))

    if position is None:
        assert seq_length is not None
        b, s = 1, int(seq_length)
    else:
        assert position.ndim == 2, position.shape
        b, s = position.shape
    m = b * s

    if two_t < _LANE or m < 8:
        # Tiny problem: masked (<128-lane) stores + per-step kernel overhead
        # would dominate -- let XLA fuse the plain-jnp version.
        if position is None:
            position = jnp.arange(seq_length, dtype=jnp.float32)[None, :]
        signal = _positional_embedding_jnp(position, num_timescales, log_inc,
                                           min_timescale, out_dtype)
    else:
        signal = _pallas_signal(position, b, s, num_timescales, log_inc,
                                min_timescale, out_dtype, tile_m)

    # Reproduce F.pad(signal, (0, 0, 0, embedding_dims % 2)) exactly: PyTorch
    # pads dim -1 by (0, 0) and dim -2 (the SEQUENCE axis) by (0, d % 2).
    pad = embedding_dims % 2
    if pad:
        signal = jnp.pad(signal, ((0, 0), (0, pad), (0, 0)))
    return signal


if __name__ == "__main__":
    key = jax.random.PRNGKey(0)
    k1, k2 = jax.random.split(key)

    def ref_fn(pos, d, min_ts=1, max_ts=10000):
        nt = d // 2
        inc = math.log(float(max_ts) / float(min_ts)) / max(nt - 1, 1)
        inv = min_ts * jnp.exp(jnp.arange(nt, dtype=jnp.float32) * -inc)
        sc = pos.astype(jnp.float32)[:, :, None] * inv[None, None, :]
        sig = jnp.concatenate([jnp.sin(sc), jnp.cos(sc)], axis=-1)
        if d % 2:
            sig = jnp.pad(sig, ((0, 0), (0, d % 2), (0, 0)))
        return sig

    def tol(max_pos):
        # cos is emitted as sin(x + pi/2); the f32 rounding of (x + pi/2)
        # perturbs the argument by ~ulp(max_pos), bounding the output diff.
        return 1e-5 + 2.0e-7 * float(max_pos)

    # 1) explicit-position path (small, single tile)
    B, S, D = 2, 64, 256
    position = jax.random.randint(k1, (B, S), 0, 64).astype(jnp.float32)
    out = jax.block_until_ready(positional_embedding(D, position=position))
    assert out.shape == (B, S, D), out.shape
    assert jnp.allclose(out, ref_fn(position, D), atol=tol(64), rtol=0.0)

    # 2) seq_length path (in-kernel iota positions, single tile)
    out = jax.block_until_ready(positional_embedding(D, seq_length=S))
    seq_pos = jnp.arange(S, dtype=jnp.float32)[None, :]
    assert out.shape == (1, S, D), out.shape
    assert jnp.allclose(out, ref_fn(seq_pos, D), atol=tol(S), rtol=0.0)

    # 3) multi-tile grid: seq_length path, forced small tile -> 4 grid steps
    S3 = 1024
    out = jax.block_until_ready(
        positional_embedding(D, seq_length=S3, tile_m=256))
    seq_pos3 = jnp.arange(S3, dtype=jnp.float32)[None, :]
    assert out.shape == (1, S3, D), out.shape
    assert jnp.allclose(out, ref_fn(seq_pos3, D), atol=tol(S3), rtol=0.0)

    # 4) multi-tile grid: explicit-position path (lane-dense row input)
    B4, S4 = 2, 512
    pos4 = jax.random.randint(k2, (B4, S4), 0, 1024).astype(jnp.float32)
    out = jax.block_until_ready(
        positional_embedding(D, position=pos4, tile_m=256))
    assert out.shape == (B4, S4, D), out.shape
    assert jnp.allclose(out, ref_fn(pos4, D), atol=tol(1024), rtol=0.0)

    # 5) bf16 output (halves HBM store traffic on the store-bound v5e/v6e)
    out_bf16 = jax.block_until_ready(
        positional_embedding(D, seq_length=S, out_dtype=jnp.bfloat16))
    assert out_bf16.dtype == jnp.bfloat16
    assert jnp.allclose(out_bf16.astype(jnp.float32), ref_fn(seq_pos, D),
                        atol=1e-2, rtol=0.0)

    # 6) tiny-D config (2T = 32 < 128 lanes): plain-jnp fallback path
    Bs, Ss, Ds = 2, 8, 32
    pos_small = jax.random.randint(jax.random.PRNGKey(1), (Bs, Ss), 0, 64
                                   ).astype(jnp.float32)
    out_small = jax.block_until_ready(
        positional_embedding(Ds, position=pos_small))
    assert out_small.shape == (Bs, Ss, Ds), out_small.shape
    assert jnp.allclose(out_small, ref_fn(pos_small, Ds), atol=tol(64),
                        rtol=0.0)

    print("KERNEL_OK")
</pallas_src>

<mosaic_0001>
module attributes {stable_mosaic.version = 11 : i64} {
  func.func @kernel(%arg0: i32, %arg1: memref<1x256xf32, #tpu.memory_space<vmem>>, %arg2: memref<256x128xf32, #tpu.memory_space<vmem>>) attributes {dimension_semantics = [#tpu.dimension_semantics<arbitrary>], iteration_bounds = array<i64: 1>, scalar_prefetch = 0 : i64, scratch_operands = 0 : i64, tpu.core_type = #tpu.core_type<tc>, window_params = [{pipeline_mode = #tpu.pipeline_mode<synchronous>, transform_indices = @transform_0, window_bounds = array<i64: 1, 256>}, {transform_indices = @transform_1, window_bounds = array<i64: 256, 128>}]} {
    %c0 = arith.constant 0 : index
    %c0_0 = arith.constant 0 : index
    %0 = vector.load %arg1[%c0, %c0_0] : memref<1x256xf32, #tpu.memory_space<vmem>>, vector<1x256xf32>
    %1 = vector.shape_cast %0 : vector<1x256xf32> to vector<256x1xf32>
    %cst = arith.constant 1.000000e+00 : f32
    %2 = vector.broadcast %cst : f32 to vector<1x128xf32>
    %3 = vector.broadcast %1 : vector<256x1xf32> to vector<256x128xf32>
    %4 = vector.broadcast %2 : vector<1x128xf32> to vector<256x128xf32>
    %5 = arith.mulf %3, %4 : vector<256x128xf32>
    %c0_1 = arith.constant 0 : index
    %c0_2 = arith.constant 0 : index
    %6 = vector.load %arg2[%c0_1, %c0_2] : memref<256x128xf32, #tpu.memory_space<vmem>>, vector<256x128xf32>
    tpu.vector_store %arg2[%c0_1, %c0_2], %5 {strides = array<i32>} : memref<256x128xf32, #tpu.memory_space<vmem>>, vector<256x128xf32>,
    return
  }
  func.func @transform_0(%arg0: i32) -> (i32, i32) {
    %c0_i32 = arith.constant 0 : i32
    %c0_i32_0 = arith.constant 0 : i32
    %c0_i32_1 = arith.constant 0 : i32
    return %c0_i32, %c0_i32_0 : i32, i32
  }
  func.func @transform_1(%arg0: i32) -> (i32, i32) {
    %c0_i32 = arith.constant 0 : i32
    %c0_i32_0 = arith.constant 0 : i32
    return %arg0, %c0_i32 : i32, i32
  }
}

module attributes {stable_mosaic.version = 11 : i64} {
  func.func @kernel(%arg0: i32, %arg1: memref<1x256xf32, #tpu.memory_space<vmem>>, %arg2: memref<256x128xf32, #tpu.memory_space<vmem>>) attributes {dimension_semantics = [#tpu.dimension_semantics<arbitrary>], iteration_bounds = array<i64: 1>, scalar_prefetch = 0 : i64, scratch_operands = 0 : i64, tpu.core_type = #tpu.core_type<tc>, window_params = [{pipeline_mode = #tpu.pipeline_mode<synchronous>, transform_indices = @transform_0, window_bounds = array<i64: 1, 256>}, {transform_indices = @transform_1, window_bounds = array<i64: 256, 128>}]} {
    %c0 = arith.constant 0 : index
    %c0_0 = arith.constant 0 : index
    %0 = vector.load %arg1[%c0, %c0_0] : memref<1x256xf32, #tpu.memory_space<vmem>>, vector<1x256xf32>
    %1 = tpu.transpose %0, [1, 0] : vector<1x256xf32> -> vector<256x1xf32>
    %cst = arith.constant 1.000000e+00 : f32
    %2 = vector.broadcast %cst : f32 to vector<1x128xf32>
    %3 = vector.broadcast %1 : vector<256x1xf32> to vector<256x128xf32>
    %4 = vector.broadcast %2 : vector<1x128xf32> to vector<256x128xf32>
    %5 = arith.mulf %3, %4 : vector<256x128xf32>
    %c0_1 = arith.constant 0 : index
    %c0_2 = arith.constant 0 : index
    %6 = vector.load %arg2[%c0_1, %c0_2] : memref<256x128xf32, #tpu.memory_space<vmem>>, vector<256x128xf32>
    tpu.vector_store %arg2[%c0_1, %c0_2], %5 {strides = array<i32>} : memref<256x128xf32, #tpu.memory_space<vmem>>, vector<256x128xf32>,
    return
  }
  func.func @transform_0(%arg0: i32) -> (i32, i32) {
    %c0_i32 = arith.constant 0 : i32
    %c0_i32_0 = arith.constant 0 : i32
    %c0_i32_1 = arith.constant 0 : i32
    return %c0_i32, %c0_i32_0 : i32, i32
  }
  func.func @transform_1(%arg0: i32) -> (i32, i32) {
    %c0_i32 = arith.constant 0 : i32
    %c0_i32_0 = arith.constant 0 : i32
    return %arg0, %c0_i32 : i32, i32
  }
}

module attributes {stable_mosaic.version = 11 : i64} {
  func.func @_col_kernel(%arg0: i32, %arg1: memref<1x256xf32, #tpu.memory_space<vmem>>, %arg2: memref<1x256xf32, #tpu.memory_space<vmem>>, %arg3: memref<128x1xf32, #tpu.memory_space<vmem>>, %arg4: memref<128x256xf32, #tpu.memory_space<vmem>>) attributes {dimension_semantics = [#tpu.dimension_semantics<parallel>], iteration_bounds = array<i64: 1>, scalar_prefetch = 0 : i64, scratch_operands = 0 : i64, tpu.core_type = #tpu.core_type<tc>, window_params = [{pipeline_mode = #tpu.pipeline_mode<synchronous>, transform_indices = @transform_0, window_bounds = array<i64: 1, 256>}, {pipeline_mode = #tpu.pipeline_mode<synchronous>, transform_indices = @transform_1, window_bounds = array<i64: 1, 256>}, {transform_indices = @transform_2, window_bounds = array<i64: 128, 1>}, {transform_indices = @transform_3, window_bounds = array<i64: 128, 256>}]} {
    %c0 = arith.constant 0 : index
    %c0_0 = arith.constant 0 : index
    %0 = vector.load %arg3[%c0, %c0_0] : memref<128x1xf32, #tpu.memory_space<vmem>>, vector<128x1xf32>
    %c0_1 = arith.constant 0 : index
    %c0_2 = arith.constant 0 : index
    %1 = vector.load %arg1[%c0_1, %c0_2] : memref<1x256xf32, #tpu.memory_space<vmem>>, vector<1x256xf32>
    %2 = vector.broadcast %0 : vector<128x1xf32> to vector<128x256xf32>
    %3 = vector.broadcast %1 : vector<1x256xf32> to vector<128x256xf32>
    %4 = arith.mulf %2, %3 : vector<128x256xf32>
    %c0_3 = arith.constant 0 : index
    %c0_4 = arith.constant 0 : index
    %5 = vector.load %arg2[%c0_3, %c0_4] : memref<1x256xf32, #tpu.memory_space<vmem>>, vector<1x256xf32>
    %6 = vector.broadcast %5 : vector<1x256xf32> to vector<128x256xf32>
    %7 = arith.addf %4, %6 : vector<128x256xf32>
    %8 = math.sin %7 : vector<128x256xf32>
    %c0_5 = arith.constant 0 : index
    %c0_6 = arith.constant 0 : index
    %9 = vector.load %arg4[%c0_5, %c0_6] : memref<128x256xf32, #tpu.memory_space<vmem>>, vector<128x256xf32>
    tpu.vector_store %arg4[%c0_5, %c0_6], %8 {strides = array<i32>} : memref<128x256xf32, #tpu.memory_space<vmem>>, vector<128x256xf32>,
    return
  }
  func.func @transform_0(%arg0: i32) -> (i32, i32) {
    %c0_i32 = arith.constant 0 : i32
    %c0_i32_0 = arith.constant 0 : i32
    %c0_i32_1 = arith.constant 0 : i32
    return %c0_i32, %c0_i32_0 : i32, i32
  }
  func.func @transform_1(%arg0: i32) -> (i32, i32) {
    %c0_i32 = arith.constant 0 : i32
    %c0_i32_0 = arith.constant 0 : i32
    %c0_i32_1 = arith.constant 0 : i32
    return %c0_i32, %c0_i32_0 : i32, i32
  }
  func.func @transform_2(%arg0: i32) -> (i32, i32) {
    %c0_i32 = arith.constant 0 : i32
    %c0_i32_0 = arith.constant 0 : i32
    return %arg0, %c0_i32 : i32, i32
  }
  func.func @transform_3(%arg0: i32) -> (i32, i32) {
    %c0_i32 = arith.constant 0 : i32
    %c0_i32_0 = arith.constant 0 : i32
    return %arg0, %c0_i32 : i32, i32
  }
}

</mosaic_0001>

<llo_original>
// kernel: tpu_custom_call.1
$region0: #{tpu_custom_call.1}
  #allocation0 [shape = 'u32[]', space=smem, size = 0x4, offset = 0x4, fixed_abs, tag = 'smem constant byte address 0x4 - core index']
  #allocation1 [shape = 'u32[144,128]{1,0:T(1,128)}', space=vmem, size = 0x12000, scoped, tag = 'internal scratch']
  %s0 = inlined_call_operand.hbm [shape: f32[1,256], index: 0, kind: input, shape index: {}]
  %s1 = inlined_call_operand.hbm [shape: f32[256,128], index: 1, kind: output, shape index: {}]
  %s2 = sld [smem:[#allocation0]]
  $region18: #{tpu_custom_call.1} parent=0
    _
  %s4 = ssub.s32 1, %s2
  %s5 = scalar_select 0, %s4, %s2
  $region1: #{tpu_custom_call.1} parent=0
    #allocation2 [shape = 'u8[1024]{0}', space=vmem, size = 0x400, scoped, tag = 'input window, operand 0, single buffered']
    #allocation3 [shape = 's32[1]{0}', space=sflag, size = 0x4, scoped, tag = 'scoped memory for tpu_custom_call.1']
    #allocation4 [shape = 's32[1]{0}', space=sflag, size = 0x4, scoped, tag = 'scoped memory for tpu_custom_call.1']
    #allocation5 [shape = 'u8[131072]{0}', space=vmem, size = 0x20000, scoped, tag = 'output window, operand 0, single buffered']
    %6 = vsyncpa [#allocation3], 0
    %7 = vsyncpa [#allocation4], 0
    // Predicated region
    $region2: #{tpu_custom_call.1} parent=1 // pred_check
      _
    $region3: #{tpu_custom_call.1} parent=1 // pred_check_branch
      %9 = sbr.rel (0) target = $region5
    $region4: #{tpu_custom_call.1} parent=1 // pred_region
      %s11 = ssub.s32 32, 32
      %12 = vsyncadd [#allocation3], %s11
      %s14 = sshll.u32 [#allocation2], 4
      %s15 = int_to_ptr.vmem [resolvable:$true] %s14
      %17 = dma.hbm_to_vmem [thread:$0]  %s0, 32, %s15, [#allocation3]
    $region5: #{tpu_custom_call.1} parent=1 // pred_fallthru
      _
    // Predicated region
    $region6: #{tpu_custom_call.1} parent=1 // pred_check
      _
    $region7: #{tpu_custom_call.1} parent=1 // pred_check_branch
      %19 = sbr.rel (0) target = $region9
    $region8: #{tpu_custom_call.1} parent=1 // pred_region
      %20 = dma.done [#allocation3], 32
    $region9: #{tpu_custom_call.1} parent=1 // pred_fallthru
      _
    %v21 = vld [vmem:[#allocation2] sm:$0x3]
    %v23 = vlaneseq
    %v24 = vshrl.u32 %v23, 7
    %v25 = vsub.s32 0, %v24
    %v26 = vrot.slane %v21, %v25
    %v27 = vlaneseq
    %v28 = vshrl.u32 %v27, 7
    %v29 = vsub.s32 1, %v28
    %v30 = vrot.slane %v21, %v29
    %v33 = vlaneseq
    %v34 = vshrl.u32 %v33, 7
    %v35 = vsub.s32 0, %v34
    %v36 = vrot.slane %v26, %v35
    %38 = vbcast.lane.b32.xlu0 %v36, 256
    %v39 = vpop.permute.xlu0 %38
    %s41 = sor.u32 256, 8
    %42 = vbcast.lane.b32.xlu0 %v36, %s41
    %v43 = vpop.permute.xlu0 %42
    %s45 = sor.u32 256, 16
    %46 = vbcast.lane.b32.xlu0 %v36, %s45
    %v47 = vpop.permute.xlu0 %46
    %s49 = sor.u32 256, 24
    %50 = vbcast.lane.b32.xlu0 %v36, %s49
    %v51 = vpop.permute.xlu0 %50
    %s53 = sor.u32 256, 32
    %54 = vbcast.lane.b32.xlu0 %v36, %s53
    %v55 = vpop.permute.xlu0 %54
    %s57 = sor.u32 256, 40
    %58 = vbcast.lane.b32.xlu0 %v36, %s57
    %v59 = vpop.permute.xlu0 %58
    %s61 = sor.u32 256, 48
    %62 = vbcast.lane.b32.xlu0 %v36, %s61
    %v63 = vpop.permute.xlu0 %62
    %s65 = sor.u32 256, 56
    %66 = vbcast.lane.b32.xlu0 %v36, %s65
    %v67 = vpop.permute.xlu0 %66
    %s69 = sor.u32 256, 64
    %70 = vbcast.lane.b32.xlu0 %v36, %s69
    %v71 = vpop.permute.xlu0 %70
    %s73 = sor.u32 256, 72
    %74 = vbcast.lane.b32.xlu0 %v36, %s73
    %v75 = vpop.permute.xlu0 %74
    %s77 = sor.u32 256, 80
    %78 = vbcast.lane.b32.xlu0 %v36, %s77
    %v79 = vpop.permute.xlu0 %78
    %s81 = sor.u32 256, 88
    %82 = vbcast.lane.b32.xlu0 %v36, %s81
    %v83 = vpop.permute.xlu0 %82
    %s85 = sor.u32 256, 96
    %86 = vbcast.lane.b32.xlu0 %v36, %s85
    %v87 = vpop.permute.xlu0 %86
    %s89 = sor.u32 256, 104
    %90 = vbcast.lane.b32.xlu0 %v36, %s89
    %v91 = vpop.permute.xlu0 %90
    %s93 = sor.u32 256, 112
    %94 = vbcast.lane.b32.xlu0 %v36, %s93
    %v95 = vpop.permute.xlu0 %94
    %s97 = sor.u32 256, 120
    %98 = vbcast.lane.b32.xlu0 %v36, %s97
    %v99 = vpop.permute.xlu0 %98
    %v100 = vlaneseq
    %v101 = vshrl.u32 %v100, 7
    %v102 = vsub.s32 0, %v101
    %v103 = vrot.slane %v30, %v102
    %105 = vbcast.lane.b32.xlu0 %v103, 256
    %v106 = vpop.permute.xlu0 %105
    %s108 = sor.u32 256, 8
    %109 = vbcast.lane.b32.xlu0 %v103, %s108
    %v110 = vpop.permute.xlu0 %109
    %s112 = sor.u32 256, 16
    %113 = vbcast.lane.b32.xlu0 %v103, %s112
    %v114 = vpop.permute.xlu0 %113
    %s116 = sor.u32 256, 24
    %117 = vbcast.lane.b32.xlu0 %v103, %s116
    %v118 = vpop.permute.xlu0 %117
    %s120 = sor.u32 256, 32
    %121 = vbcast.lane.b32.xlu0 %v103, %s120
    %v122 = vpop.permute.xlu0 %121
    %s124 = sor.u32 256, 40
    %125 = vbcast.lane.b32.xlu0 %v103, %s124
    %v126 = vpop.permute.xlu0 %125
    %s128 = sor.u32 256, 48
    %129 = vbcast.lane.b32.xlu0 %v103, %s128
    %v130 = vpop.permute.xlu0 %129
    %s132 = sor.u32 256, 56
    %133 = vbcast.lane.b32.xlu0 %v103, %s132
    %v134 = vpop.permute.xlu0 %133
    %s136 = sor.u32 256, 64
    %137 = vbcast.lane.b32.xlu0 %v103, %s136
    %v138 = vpop.permute.xlu0 %137
    %s140 = sor.u32 256, 72
    %141 = vbcast.lane.b32.xlu0 %v103, %s140
    %v142 = vpop.permute.xlu0 %141
    %s144 = sor.u32 256, 80
    %145 = vbcast.lane.b32.xlu0 %v103, %s144
    %v146 = vpop.permute.xlu0 %145
    %s148 = sor.u32 256, 88
    %149 = vbcast.lane.b32.xlu0 %v103, %s148
    %v150 = vpop.permute.xlu0 %149
    %s152 = sor.u32 256, 96
    %153 = vbcast.lane.b32.xlu0 %v103, %s152
    %v154 = vpop.permute.xlu0 %153
    %s156 = sor.u32 256, 104
    %157 = vbcast.lane.b32.xlu0 %v103, %s156
    %v158 = vpop.permute.xlu0 %157
    %s160 = sor.u32 256, 112
    %161 = vbcast.lane.b32.xlu0 %v103, %s160
    %v162 = vpop.permute.xlu0 %161
    %s164 = sor.u32 256, 120
    %165 = vbcast.lane.b32.xlu0 %v103, %s164
    %v166 = vpop.permute.xlu0 %165
    %167 = vst [vmem:[#allocation5] sm:$0xff] %v39
    %168 = vst [vmem:[#allocation5 + $0x8] sm:$0xff] %v43
    %169 = vst [vmem:[#allocation5 + $0x10] sm:$0xff] %v47
    %170 = vst [vmem:[#allocation5 + $0x18] sm:$0xff] %v51
    %171 = vst [vmem:[#allocation5 + $0x20] sm:$0xff] %v55
    %172 = vst [vmem:[#allocation5 + $0x28] sm:$0xff] %v59
    %173 = vst [vmem:[#allocation5 + $0x30] sm:$0xff] %v63
    %174 = vst [vmem:[#allocation5 + $0x38] sm:$0xff] %v67
    %175 = vst [vmem:[#allocation5 + $0x40] sm:$0xff] %v71
    %176 = vst [vmem:[#allocation5 + $0x48] sm:$0xff] %v75
    %177 = vst [vmem:[#allocation5 + $0x50] sm:$0xff] %v79
    %178 = vst [vmem:[#allocation5 + $0x58] sm:$0xff] %v83
    %179 = vst [vmem:[#allocation5 + $0x60] sm:$0xff] %v87
    %180 = vst [vmem:[#allocation5 + $0x68] sm:$0xff] %v91
    %181 = vst [vmem:[#allocation5 + $0x70] sm:$0xff] %v95
    %182 = vst [vmem:[#allocation5 + $0x78] sm:$0xff] %v99
    %183 = vst [vmem:[#allocation5 + $0x80] sm:$0xff] %v106
    %184 = vst [vmem:[#allocation5 + $0x88] sm:$0xff] %v110
    %185 = vst [vmem:[#allocation5 + $0x90] sm:$0xff] %v114
    %186 = vst [vmem:[#allocation5 + $0x98] sm:$0xff] %v118
    %187 = vst [vmem:[#allocation5 + $0xa0] sm:$0xff] %v122
    %188 = vst [vmem:[#allocation5 + $0xa8] sm:$0xff] %v126
    %189 = vst [vmem:[#allocation5 + $0xb0] sm:$0xff] %v130
    %190 = vst [vmem:[#allocation5 + $0xb8] sm:$0xff] %v134
    %191 = vst [vmem:[#allocation5 + $0xc0] sm:$0xff] %v138
    %192 = vst [vmem:[#allocation5 + $0xc8] sm:$0xff] %v142
    %193 = vst [vmem:[#allocation5 + $0xd0] sm:$0xff] %v146
    %194 = vst [vmem:[#allocation5 + $0xd8] sm:$0xff] %v150
    %195 = vst [vmem:[#allocation5 + $0xe0] sm:$0xff] %v154
    %196 = vst [vmem:[#allocation5 + $0xe8] sm:$0xff] %v158
    %197 = vst [vmem:[#allocation5 + $0xf0] sm:$0xff] %v162
    %198 = vst [vmem:[#allocation5 + $0xf8] sm:$0xff] %v166
    // Predicated region
    $region10: #{tpu_custom_call.1} parent=1 // pred_check
      _
    $region11: #{tpu_custom_call.1} parent=1 // pred_check_branch
      %200 = sbr.rel (0) target = $region13
    $region12: #{tpu_custom_call.1} parent=1 // pred_region
      %s202 = ssub.s32 4096, 4096
      %203 = vsyncadd [#allocation4], %s202
      %s204 = sshll.u32 [#allocation5], 4
      %s205 = int_to_ptr.vmem [resolvable:$true] %s204
      %210 = dma.vmem_to_hbm [thread:$0]  %s205, 4096, %s1, [#allocation4], 128, 128, 8
    $region13: #{tpu_custom_call.1} parent=1 // pred_fallthru
      _
    // Predicated region
    $region14: #{tpu_custom_call.1} parent=1 // pred_check
      _
    $region15: #{tpu_custom_call.1} parent=1 // pred_check_branch
      %212 = sbr.rel (0) target = $region17
    $region16: #{tpu_custom_call.1} parent=1 // pred_region
      %213 = dma.done [#allocation4], 4096
    $region17: #{tpu_custom_call.1} parent=1 // pred_fallthru
      _
    %214 = vsyncpa [#allocation3], 1
    %215 = vsyncpa [#allocation4], 1

// kernel: tpu_custom_call.1
$region0: #{tpu_custom_call.1}
  #allocation0 [shape = 'u32[]', space=smem, size = 0x4, offset = 0x4, fixed_abs, tag = 'smem constant byte address 0x4 - core index']
  #allocation1 [shape = 'u32[144,128]{1,0:T(1,128)}', space=vmem, size = 0x12000, scoped, tag = 'internal scratch']
  %s0 = inlined_call_operand.hbm [shape: f32[1,256], index: 0, kind: input, shape index: {}]
  %s1 = inlined_call_operand.hbm [shape: f32[256,128], index: 1, kind: output, shape index: {}]
  %s2 = sld [smem:[#allocation0]]
  $region18: #{tpu_custom_call.1} parent=0
    _
  %s4 = ssub.s32 1, %s2
  %s5 = scalar_select 0, %s4, %s2
  $region1: #{tpu_custom_call.1} parent=0
    #allocation2 [shape = 'u8[1024]{0}', space=vmem, size = 0x400, scoped, tag = 'input window, operand 0, single buffered']
    #allocation3 [shape = 's32[1]{0}', space=sflag, size = 0x4, scoped, tag = 'scoped memory for tpu_custom_call.1']
    #allocation4 [shape = 's32[1]{0}', space=sflag, size = 0x4, scoped, tag = 'scoped memory for tpu_custom_call.1']
    #allocation5 [shape = 'u8[131072]{0}', space=vmem, size = 0x20000, scoped, tag = 'output window, operand 0, single buffered']
    %6 = vsyncpa [#allocation3], 0
    %7 = vsyncpa [#allocation4], 0
    // Predicated region
    $region2: #{tpu_custom_call.1} parent=1 // pred_check
      _
    $region3: #{tpu_custom_call.1} parent=1 // pred_check_branch
      %9 = sbr.rel (0) target = $region5
    $region4: #{tpu_custom_call.1} parent=1 // pred_region
      %s11 = ssub.s32 32, 32
      %12 = vsyncadd [#allocation3], %s11
      %s14 = sshll.u32 [#allocation2], 4
      %s15 = int_to_ptr.vmem [resolvable:$true] %s14
      %17 = dma.hbm_to_vmem [thread:$0]  %s0, 32, %s15, [#allocation3]
    $region5: #{tpu_custom_call.1} parent=1 // pred_fallthru
      _
    // Predicated region
    $region6: #{tpu_custom_call.1} parent=1 // pred_check
      _
    $region7: #{tpu_custom_call.1} parent=1 // pred_check_branch
      %19 = sbr.rel (0) target = $region9
    $region8: #{tpu_custom_call.1} parent=1 // pred_region
      %20 = dma.done [#allocation3], 32
    $region9: #{tpu_custom_call.1} parent=1 // pred_fallthru
      _
    %v21 = vld [vmem:[#allocation2] sm:$0x3]
    %v23 = vlaneseq
    %v24 = vshrl.u32 %v23, 7
    %v25 = vsub.s32 0, %v24
    %v26 = vrot.slane %v21, %v25
    %v27 = vlaneseq
    %v28 = vshrl.u32 %v27, 7
    %v29 = vsub.s32 1, %v28
    %v30 = vrot.slane %v21, %v29
    %33 = vxpose.xlu0.b32.start [1/16] %v26, 128
    %34 = vxpose.xlu0.b32.cont [2/16] 0.0, 128
    %35 = vxpose.xlu0.b32.cont [3/16] 0.0, 128
    %36 = vxpose.xlu0.b32.cont [4/16] 0.0, 128
    %37 = vxpose.xlu0.b32.cont [5/16] 0.0, 128
    %38 = vxpose.xlu0.b32.cont [6/16] 0.0, 128
    %39 = vxpose.xlu0.b32.cont [7/16] 0.0, 128
    %40 = vxpose.xlu0.b32.cont [8/16] 0.0, 128
    %41 = vxpose.xlu0.b32.cont [9/16] 0.0, 128
    %42 = vxpose.xlu0.b32.cont [10/16] 0.0, 128
    %43 = vxpose.xlu0.b32.cont [11/16] 0.0, 128
    %44 = vxpose.xlu0.b32.cont [12/16] 0.0, 128
    %45 = vxpose.xlu0.b32.cont [13/16] 0.0, 128
    %46 = vxpose.xlu0.b32.cont [14/16] 0.0, 128
    %47 = vxpose.xlu0.b32.cont [15/16] 0.0, 128
    %48 = vxpose.xlu0.b32.end [16/16] 0.0, 128
    %v49 = vpop.trf.xlu0
    %v50 = vpop.trf.xlu0
    %v51 = vpop.trf.xlu0
    %v52 = vpop.trf.xlu0
    %v53 = vpop.trf.xlu0
    %v54 = vpop.trf.xlu0
    %v55 = vpop.trf.xlu0
    %v56 = vpop.trf.xlu0
    %v57 = vpop.trf.xlu0
    %v58 = vpop.trf.xlu0
    %v59 = vpop.trf.xlu0
    %v60 = vpop.trf.xlu0
    %v61 = vpop.trf.xlu0
    %v62 = vpop.trf.xlu0
    %v63 = vpop.trf.xlu0
    %v64 = vpop.trf.xlu0
    %65 = vxpose.xlu0.b32.start [1/16] %v30, 128
    %66 = vxpose.xlu0.b32.cont [2/16] 0.0, 128
    %67 = vxpose.xlu0.b32.cont [3/16] 0.0, 128
    %68 = vxpose.xlu0.b32.cont [4/16] 0.0, 128
    %69 = vxpose.xlu0.b32.cont [5/16] 0.0, 128
    %70 = vxpose.xlu0.b32.cont [6/16] 0.0, 128
    %71 = vxpose.xlu0.b32.cont [7/16] 0.0, 128
    %72 = vxpose.xlu0.b32.cont [8/16] 0.0, 128
    %73 = vxpose.xlu0.b32.cont [9/16] 0.0, 128
    %74 = vxpose.xlu0.b32.cont [10/16] 0.0, 128
    %75 = vxpose.xlu0.b32.cont [11/16] 0.0, 128
    %76 = vxpose.xlu0.b32.cont [12/16] 0.0, 128
    %77 = vxpose.xlu0.b32.cont [13/16] 0.0, 128
    %78 = vxpose.xlu0.b32.cont [14/16] 0.0, 128
    %79 = vxpose.xlu0.b32.cont [15/16] 0.0, 128
    %80 = vxpose.xlu0.b32.end [16/16] 0.0, 128
    %v81 = vpop.trf.xlu0
    %v82 = vpop.trf.xlu0
    %v83 = vpop.trf.xlu0
    %v84 = vpop.trf.xlu0
    %v85 = vpop.trf.xlu0
    %v86 = vpop.trf.xlu0
    %v87 = vpop.trf.xlu0
    %v88 = vpop.trf.xlu0
    %v89 = vpop.trf.xlu0
    %v90 = vpop.trf.xlu0
    %v91 = vpop.trf.xlu0
    %v92 = vpop.trf.xlu0
    %v93 = vpop.trf.xlu0
    %v94 = vpop.trf.xlu0
    %v95 = vpop.trf.xlu0
    %v96 = vpop.trf.xlu0
    %98 = vset.pattern.permute.xlu0 0
    %99 = vperm.xlu0 %98, %v49
    %v100 = vpop.permute.xlu0 %99
    %103 = vset.pattern.permute.xlu0 0
    %104 = vperm.xlu0 %103, %v50
    %v105 = vpop.permute.xlu0 %104
    %108 = vset.pattern.permute.xlu0 0
    %109 = vperm.xlu0 %108, %v51
    %v110 = vpop.permute.xlu0 %109
    %113 = vset.pattern.permute.xlu0 0
    %114 = vperm.xlu0 %113, %v52
    %v115 = vpop.permute.xlu0 %114
    %118 = vset.pattern.permute.xlu0 0
    %119 = vperm.xlu0 %118, %v53
    %v120 = vpop.permute.xlu0 %119
    %123 = vset.pattern.permute.xlu0 0
    %124 = vperm.xlu0 %123, %v54
    %v125 = vpop.permute.xlu0 %124
    %128 = vset.pattern.permute.xlu0 0
    %129 = vperm.xlu0 %128, %v55
    %v130 = vpop.permute.xlu0 %129
    %133 = vset.pattern.permute.xlu0 0
    %134 = vperm.xlu0 %133, %v56
    %v135 = vpop.permute.xlu0 %134
    %138 = vset.pattern.permute.xlu0 0
    %139 = vperm.xlu0 %138, %v57
    %v140 = vpop.permute.xlu0 %139
    %143 = vset.pattern.permute.xlu0 0
    %144 = vperm.xlu0 %143, %v58
    %v145 = vpop.permute.xlu0 %144
    %148 = vset.pattern.permute.xlu0 0
    %149 = vperm.xlu0 %148, %v59
    %v150 = vpop.permute.xlu0 %149
    %153 = vset.pattern.permute.xlu0 0
    %154 = vperm.xlu0 %153, %v60
    %v155 = vpop.permute.xlu0 %154
    %158 = vset.pattern.permute.xlu0 0
    %159 = vperm.xlu0 %158, %v61
    %v160 = vpop.permute.xlu0 %159
    %163 = vset.pattern.permute.xlu0 0
    %164 = vperm.xlu0 %163, %v62
    %v165 = vpop.permute.xlu0 %164
    %168 = vset.pattern.permute.xlu0 0
    %169 = vperm.xlu0 %168, %v63
    %v170 = vpop.permute.xlu0 %169
    %173 = vset.pattern.permute.xlu0 0
    %174 = vperm.xlu0 %173, %v64
    %v175 = vpop.permute.xlu0 %174
    %178 = vset.pattern.permute.xlu0 0
    %179 = vperm.xlu0 %178, %v81
    %v180 = vpop.permute.xlu0 %179
    %183 = vset.pattern.permute.xlu0 0
    %184 = vperm.xlu0 %183, %v82
    %v185 = vpop.permute.xlu0 %184
    %188 = vset.pattern.permute.xlu0 0
    %189 = vperm.xlu0 %188, %v83
    %v190 = vpop.permute.xlu0 %189
    %193 = vset.pattern.permute.xlu0 0
    %194 = vperm.xlu0 %193, %v84
    %v195 = vpop.permute.xlu0 %194
    %198 = vset.pattern.permute.xlu0 0
    %199 = vperm.xlu0 %198, %v85
    %v200 = vpop.permute.xlu0 %199
    %203 = vset.pattern.permute.xlu0 0
    %204 = vperm.xlu0 %203, %v86
    %v205 = vpop.permute.xlu0 %204
    %208 = vset.pattern.permute.xlu0 0
    %209 = vperm.xlu0 %208, %v87
    %v210 = vpop.permute.xlu0 %209
    %213 = vset.pattern.permute.xlu0 0
    %214 = vperm.xlu0 %213, %v88
    %v215 = vpop.permute.xlu0 %214
    %218 = vset.pattern.permute.xlu0 0
    %219 = vperm.xlu0 %218, %v89
    %v220 = vpop.permute.xlu0 %219
    %223 = vset.pattern.permute.xlu0 0
    %224 = vperm.xlu0 %223, %v90
    %v225 = vpop.permute.xlu0 %224
    %228 = vset.pattern.permute.xlu0 0
    %229 = vperm.xlu0 %228, %v91
    %v230 = vpop.permute.xlu0 %229
    %233 = vset.pattern.permute.xlu0 0
    %234 = vperm.xlu0 %233, %v92
    %v235 = vpop.permute.xlu0 %234
    %238 = vset.pattern.permute.xlu0 0
    %239 = vperm.xlu0 %238, %v93
    %v240 = vpop.permute.xlu0 %239
    %243 = vset.pattern.permute.xlu0 0
    %244 = vperm.xlu0 %243, %v94
    %v245 = vpop.permute.xlu0 %244
    %248 = vset.pattern.permute.xlu0 0
    %249 = vperm.xlu0 %248, %v95
    %v250 = vpop.permute.xlu0 %249
    %253 = vset.pattern.permute.xlu0 0
    %254 = vperm.xlu0 %253, %v96
    %v255 = vpop.permute.xlu0 %254
    %257 = vst [vmem:[#allocation5] sm:$0xff] %v100
    %258 = vst [vmem:[#allocation5 + $0x8] sm:$0xff] %v105
    %259 = vst [vmem:[#allocation5 + $0x10] sm:$0xff] %v110
    %260 = vst [vmem:[#allocation5 + $0x18] sm:$0xff] %v115
    %261 = vst [vmem:[#allocation5 + $0x20] sm:$0xff] %v120
    %262 = vst [vmem:[#allocation5 + $0x28] sm:$0xff] %v125
    %263 = vst [vmem:[#allocation5 + $0x30] sm:$0xff] %v130
    %264 = vst [vmem:[#allocation5 + $0x38] sm:$0xff] %v135
    %265 = vst [vmem:[#allocation5 + $0x40] sm:$0xff] %v140
    %266 = vst [vmem:[#allocation5 + $0x48] sm:$0xff] %v145
    %267 = vst [vmem:[#allocation5 + $0x50] sm:$0xff] %v150
    %268 = vst [vmem:[#allocation5 + $0x58] sm:$0xff] %v155
    %269 = vst [vmem:[#allocation5 + $0x60] sm:$0xff] %v160
    %270 = vst [vmem:[#allocation5 + $0x68] sm:$0xff] %v165
    %271 = vst [vmem:[#allocation5 + $0x70] sm:$0xff] %v170
    %272 = vst [vmem:[#allocation5 + $0x78] sm:$0xff] %v175
    %273 = vst [vmem:[#allocation5 + $0x80] sm:$0xff] %v180
    %274 = vst [vmem:[#allocation5 + $0x88] sm:$0xff] %v185
    %275 = vst [vmem:[#allocation5 + $0x90] sm:$0xff] %v190
    %276 = vst [vmem:[#allocation5 + $0x98] sm:$0xff] %v195
    %277 = vst [vmem:[#allocation5 + $0xa0] sm:$0xff] %v200
    %278 = vst [vmem:[#allocation5 + $0xa8] sm:$0xff] %v205
    %279 = vst [vmem:[#allocation5 + $0xb0] sm:$0xff] %v210
    %280 = vst [vmem:[#allocation5 + $0xb8] sm:$0xff] %v215
    %281 = vst [vmem:[#allocation5 + $0xc0] sm:$0xff] %v220
    %282 = vst [vmem:[#allocation5 + $0xc8] sm:$0xff] %v225
    %283 = vst [vmem:[#allocation5 + $0xd0] sm:$0xff] %v230
    %284 = vst [vmem:[#allocation5 + $0xd8] sm:$0xff] %v235
    %285 = vst [vmem:[#allocation5 + $0xe0] sm:$0xff] %v240
    %286 = vst [vmem:[#allocation5 + $0xe8] sm:$0xff] %v245
    %287 = vst [vmem:[#allocation5 + $0xf0] sm:$0xff] %v250
    %288 = vst [vmem:[#allocation5 + $0xf8] sm:$0xff] %v255
    // Predicated region
    $region10: #{tpu_custom_call.1} parent=1 // pred_check
      _
    $region11: #{tpu_custom_call.1} parent=1 // pred_check_branch
      %290 = sbr.rel (0) target = $region13
    $region12: #{tpu_custom_call.1} parent=1 // pred_region
      %s292 = ssub.s32 4096, 4096
      %293 = vsyncadd [#allocation4], %s292
      %s294 = sshll.u32 [#allocation5], 4
      %s295 = int_to_ptr.vmem [resolvable:$true] %s294
      %300 = dma.vmem_to_hbm [thread:$0]  %s295, 4096, %s1, [#allocation4], 128, 128, 8
    $region13: #{tpu_custom_call.1} parent=1 // pred_fallthru
      _
    // Predicated region
    $region14: #{tpu_custom_call.1} parent=1 // pred_check
      _
    $region15: #{tpu_custom_call.1} parent=1 // pred_check_branch
      %302 = sbr.rel (0) target = $region17
    $region16: #{tpu_custom_call.1} parent=1 // pred_region
      %303 = dma.done [#allocation4], 4096
    $region17: #{tpu_custom_call.1} parent=1 // pred_fallthru
      _
    %304 = vsyncpa [#allocation3], 1
    %305 = vsyncpa [#allocation4], 1

// kernel: tpu_custom_call.1
$region0: #{tpu_custom_call.1}
  #allocation0 [shape = 'u32[]', space=smem, size = 0x4, offset = 0x4, fixed_abs, tag = 'smem constant byte address 0x4 - core index']
  #allocation1 [shape = 'u32[144,128]{1,0:T(1,128)}', space=vmem, size = 0x12000, scoped, tag = 'internal scratch']
  %s0 = inlined_call_operand.vmem [shape: f32[1,256], index: 0, kind: input, shape index: {}]
  %s1 = inlined_call_operand.vmem [shape: f32[1,256], index: 1, kind: input, shape index: {}]
  %s2 = inlined_call_operand.vmem [shape: f32[128,1], index: 2, kind: input, shape index: {}]
  %s3 = inlined_call_operand.hbm [shape: f32[128,256], index: 3, kind: output, shape index: {}]
  %s4 = sld [smem:[#allocation0]]
  $region22: #{tpu_custom_call.1} parent=0
    _
  %s6 = ssub.s32 1, %s4
  %s7 = scalar_select 0, %s6, %s4
  $region1: #{tpu_custom_call.1} parent=0
    #allocation2 [shape = 'u8[131072]{0}', space=vmem, size = 0x20000, scoped, tag = 'output window, operand 0, single buffered']
    #allocation3 [shape = 's32[1]{0}', space=sflag, size = 0x4, scoped, tag = 'scoped memory for tpu_custom_call.1']
    %8 = vsyncpa [#allocation3], 0
    // Predicated region
    $region2: #{tpu_custom_call.1} parent=1 // pred_check
      _
    $region3: #{tpu_custom_call.1} parent=1 // pred_check_branch
      %10 = sbr.rel (0) target = $region5
    $region4: #{tpu_custom_call.1} parent=1 // pred_region
      _
    $region5: #{tpu_custom_call.1} parent=1 // pred_fallthru
      _
    // Predicated region
    $region6: #{tpu_custom_call.1} parent=1 // pred_check
      _
    $region7: #{tpu_custom_call.1} parent=1 // pred_check_branch
      %12 = sbr.rel (0) target = $region9
    $region8: #{tpu_custom_call.1} parent=1 // pred_region
      _
    $region9: #{tpu_custom_call.1} parent=1 // pred_fallthru
      _
    // Predicated region
    $region10: #{tpu_custom_call.1} parent=1 // pred_check
      _
    $region11: #{tpu_custom_call.1} parent=1 // pred_check_branch
      %14 = sbr.rel (0) target = $region13
    $region12: #{tpu_custom_call.1} parent=1 // pred_region
      _
    $region13: #{tpu_custom_call.1} parent=1 // pred_fallthru
      _
    %v15 = vld [vmem:[%s2] sm:$0xff]
    %v16 = vld [vmem:[%s2 + $0x8] sm:$0xff]
    %v17 = vld [vmem:[%s2 + $0x10] sm:$0xff]
    %v18 = vld [vmem:[%s2 + $0x18] sm:$0xff]
    %v19 = vld [vmem:[%s2 + $0x20] sm:$0xff]
    %v20 = vld [vmem:[%s2 + $0x28] sm:$0xff]
    %v21 = vld [vmem:[%s2 + $0x30] sm:$0xff]
    %v22 = vld [vmem:[%s2 + $0x38] sm:$0xff]
    %v23 = vld [vmem:[%s2 + $0x40] sm:$0xff]
    %v24 = vld [vmem:[%s2 + $0x48] sm:$0xff]
    %v25 = vld [vmem:[%s2 + $0x50] sm:$0xff]
    %v26 = vld [vmem:[%s2 + $0x58] sm:$0xff]
    %v27 = vld [vmem:[%s2 + $0x60] sm:$0xff]
    %v28 = vld [vmem:[%s2 + $0x68] sm:$0xff]
    %v29 = vld [vmem:[%s2 + $0x70] sm:$0xff]
    %v30 = vld [vmem:[%s2 + $0x78] sm:$0xff]
    %v31 = vld [vmem:[%s0] sm:$0x3]
    %33 = vset.pattern.permute.xlu0 0
    %34 = vperm.xlu0 %33, %v15
    %v35 = vpop.permute.xlu0 %34
    %38 = vset.pattern.permute.xlu0 0
    %39 = vperm.xlu0 %38, %v16
    %v40 = vpop.permute.xlu0 %39
    %43 = vset.pattern.permute.xlu0 0
    %44 = vperm.xlu0 %43, %v17
    %v45 = vpop.permute.xlu0 %44
    %48 = vset.pattern.permute.xlu0 0
    %49 = vperm.xlu0 %48, %v18
    %v50 = vpop.permute.xlu0 %49
    %53 = vset.pattern.permute.xlu0 0
    %54 = vperm.xlu0 %53, %v19
    %v55 = vpop.permute.xlu0 %54
    %58 = vset.pattern.permute.xlu0 0
    %59 = vperm.xlu0 %58, %v20
    %v60 = vpop.permute.xlu0 %59
    %63 = vset.pattern.permute.xlu0 0
    %64 = vperm.xlu0 %63, %v21
    %v65 = vpop.permute.xlu0 %64
    %68 = vset.pattern.permute.xlu0 0
    %69 = vperm.xlu0 %68, %v22
    %v70 = vpop.permute.xlu0 %69
    %73 = vset.pattern.permute.xlu0 0
    %74 = vperm.xlu0 %73, %v23
    %v75 = vpop.permute.xlu0 %74
    %78 = vset.pattern.permute.xlu0 0
    %79 = vperm.xlu0 %78, %v24
    %v80 = vpop.permute.xlu0 %79
    %83 = vset.pattern.permute.xlu0 0
    %84 = vperm.xlu0 %83, %v25
    %v85 = vpop.permute.xlu0 %84
    %88 = vset.pattern.permute.xlu0 0
    %89 = vperm.xlu0 %88, %v26
    %v90 = vpop.permute.xlu0 %89
    %93 = vset.pattern.permute.xlu0 0
    %94 = vperm.xlu0 %93, %v27
    %v95 = vpop.permute.xlu0 %94
    %98 = vset.pattern.permute.xlu0 0
    %99 = vperm.xlu0 %98, %v28
    %v100 = vpop.permute.xlu0 %99
    %103 = vset.pattern.permute.xlu0 0
    %104 = vperm.xlu0 %103, %v29
    %v105 = vpop.permute.xlu0 %104
    %108 = vset.pattern.permute.xlu0 0
    %109 = vperm.xlu0 %108, %v30
    %v110 = vpop.permute.xlu0 %109
    %v113 = vlaneseq
    %v114 = vshrl.u32 %v113, 7
    %v115 = vsub.s32 0, %v114
    %v116 = vrot.slane %v31, %v115
    %v117 = vlaneseq
    %v118 = vshrl.u32 %v117, 7
    %v119 = vsub.s32 1, %v118
    %v120 = vrot.slane %v31, %v119
    %v123 = vmul.f32 %v35, %v116
    %v124 = vmul.f32 %v35, %v120
    %v125 = vmul.f32 %v40, %v116
    %v126 = vmul.f32 %v40, %v120
    %v127 = vmul.f32 %v45, %v116
    %v128 = vmul.f32 %v45, %v120
    %v129 = vmul.f32 %v50, %v116
    %v130 = vmul.f32 %v50, %v120
    %v131 = vmul.f32 %v55, %v116
    %v132 = vmul.f32 %v55, %v120
    %v133 = vmul.f32 %v60, %v116
    %v134 = vmul.f32 %v60, %v120
    %v135 = vmul.f32 %v65, %v116
    %v136 = vmul.f32 %v65, %v120
    %v137 = vmul.f32 %v70, %v116
    %v138 = vmul.f32 %v70, %v120
    %v139 = vmul.f32 %v75, %v116
    %v140 = vmul.f32 %v75, %v120
    %v141 = vmul.f32 %v80, %v116
    %v142 = vmul.f32 %v80, %v120
    %v143 = vmul.f32 %v85, %v116
    %v144 = vmul.f32 %v85, %v120
    %v145 = vmul.f32 %v90, %v116
    %v146 = vmul.f32 %v90, %v120
    %v147 = vmul.f32 %v95, %v116
    %v148 = vmul.f32 %v95, %v120
    %v149 = vmul.f32 %v100, %v116
    %v150 = vmul.f32 %v100, %v120
    %v151 = vmul.f32 %v105, %v116
    %v152 = vmul.f32 %v105, %v120
    %v153 = vmul.f32 %v110, %v116
    %v154 = vmul.f32 %v110, %v120
    %v155 = vld [vmem:[%s1] sm:$0x3]
    %v157 = vlaneseq
    %v158 = vshrl.u32 %v157, 7
    %v159 = vsub.s32 0, %v158
    %v160 = vrot.slane %v155, %v159
    %v161 = vlaneseq
    %v162 = vshrl.u32 %v161, 7
    %v163 = vsub.s32 1, %v162
    %v164 = vrot.slane %v155, %v163
    %v167 = vadd.f32 %v123, %v160
    %v168 = vadd.f32 %v124, %v164
    %v169 = vadd.f32 %v125, %v160
    %v170 = vadd.f32 %v126, %v164
    %v171 = vadd.f32 %v127, %v160
    %v172 = vadd.f32 %v128, %v164
    %v173 = vadd.f32 %v129, %v160
    %v174 = vadd.f32 %v130, %v164
    %v175 = vadd.f32 %v131, %v160
    %v176 = vadd.f32 %v132, %v164
    %v177 = vadd.f32 %v133, %v160
    %v178 = vadd.f32 %v134, %v164
    %v179 = vadd.f32 %v135, %v160
    %v180 = vadd.f32 %v136, %v164
    %v181 = vadd.f32 %v137, %v160
    %v182 = vadd.f32 %v138, %v164
    %v183 = vadd.f32 %v139, %v160
    %v184 = vadd.f32 %v140, %v164
    %v185 = vadd.f32 %v141, %v160
    %v186 = vadd.f32 %v142, %v164
    %v187 = vadd.f32 %v143, %v160
    %v188 = vadd.f32 %v144, %v164
    %v189 = vadd.f32 %v145, %v160
    %v190 = vadd.f32 %v146, %v164
    %v191 = vadd.f32 %v147, %v160
    %v192 = vadd.f32 %v148, %v164
    %v193 = vadd.f32 %v149, %v160
    %v194 = vadd.f32 %v150, %v164
    %v195 = vadd.f32 %v151, %v160
    %v196 = vadd.f32 %v152, %v164
    %v197 = vadd.f32 %v153, %v160
    %v198 = vadd.f32 %v154, %v164
    %v199 = vand.u32 2147483647, %v167
    %vm200 = vcmp.le.f32.partialorder %v199, 0.7853982
    %vm201 = vcmp.lt.s32.totalorder %v167, 0
    %v202 = vand.u32 %v167, 2139095040
    %v203 = vshrl.u32 %v202, 23
    %v204 = vsub.s32 %v203, 127
    %v205 = vand.u32 2147483647, %v167
    %v206 = vand.u32 %v205, 8388607
    %v207 = vor.u32 %v206, 8388608
    %v208 = vsub.s32 0, %v207
    %v209 = vadd.s32 %v204, 1
    %vm210 = vcmp.gt.s32.totalorder %v209, 0
    %v211 = vsel %vm210, %v209, 0
    %v212 = vshrl.u32 %v211, 5
    %v213 = vand.u32 %v211, 31
    %v214 = vsub.s32 32, %v213
    %v215 = vshrl.u32 683565275, %v214
    %v216 = vshll.u32 683565275, %v213
    %v217 = vshrl.u32 2475754826, %v214
    %v218 = vor.u32 %v216, %v217
    %v219 = vshll.u32 2475754826, %v213
    %v220 = vshrl.u32 2131351028, %v214
    %v221 = vor.u32 %v219, %v220
    %v222 = vshll.u32 2131351028, %v213
    %v223 = vshrl.u32 2102212464, %v214
    %v224 = vor.u32 %v222, %v223
    %v225 = vshll.u32 2102212464, %v213
    %v226 = vshrl.u32 920167782, %v214
    %v227 = vor.u32 %v225, %v226
    %v228 = vshll.u32 920167782, %v213
    %v229 = vshrl.u32 1326507024, %v214
    %v230 = vor.u32 %v228, %v229
    %vm231 = vcmp.lt.s32.totalorder %v212, 1
    %vm232 = vcmp.lt.s32.totalorder %v212, 2
    %vm233 = vcmp.lt.s32.totalorder %v212, 3
    %vm234 = vcmp.lt.s32.totalorder %v212, 4
    %v235 = vsel %vm231, %v215, %v218
    %v236 = vsel %vm234, %v224, 2102212464
    %v237 = vsel %vm233, %v221, %v236
    %v238 = vsel %vm232, %v235, %v237
    %v239 = vsel %vm231, %v218, %v221
    %v240 = vsel %vm234, %v227, 920167782
    %v241 = vsel %vm233, %v224, %v240
    %v242 = vsel %vm232, %v239, %v241
    %v243 = vsel %vm231, %v221, %v224
    %v244 = vsel %vm234, %v230, 1326507024
    %v245 = vsel %vm233, %v227, %v244
    %v246 = vsel %vm232, %v243, %v245
    %v247 = vshll.u32 %v207, 8
    %v248 = vmul.u32.u64.compose %v247, %v246
    %v249 = vextract.low.u32 %v248
    %v250 = vextract.high.u32 %v248
    %v251 = vmul.u32.u64.compose %v247, %v242
    %v252 = vextract.low.u32 %v251
    %v253 = vextract.high.u32 %v251
    %v254 = vmul.u32 %v247, %v238
    %v255 = vadd.s32 %v250, %v252
    %vm256 = vc.u32 %v250, %v252
    %v257 = vadd.s32 %v253, 1
    %v258 = vsel %vm256, %v257, %v253
    %v259 = vadd.s32 %v254, %v258
    %v260 = vadd.s32 %v259, 536870912
    %v261 = vshrl.u32 %v260, 30
    %v262 = vshll.u32 %v261, 30
    %v263 = vsub.s32 %v259, %v262
    %vm264 = vcmp.lt.s32.totalorder %v263, 0
    %v265 = vsub.s32 0, %v263
    %v266 = vsel %vm264, %v265, %v263
    %v267 = vclz %v266
    %v268 = vsub.s32 %v267, 2
    %vm269 = vcmp.gt.s32.totalorder 0, %v268
    %v270 = vsel %vm269, 0, %v268
    %v271 = vsub.s32 32, %v270
    %v272 = vshll.u32 %v263, %v270
    %v273 = vshrl.u32 %v255, %v271
    %v274 = vor.u32 %v272, %v273
    %v275 = vsub.s32 4294967266, %v270
    %v276 = vadd.s32 %v275, 127
    %v277 = vshll.u32 %v276, 23
    %v278 = vor.u32 4788187, %v277
    %v279 = vand.u32 2147483647, %v278
    %v281 = vcvt.s32.f32 %v274
    %v282 = vmul.f32 %v281, %v279
    %v283 = vxor.u32 %v282, 2147483648
    %v284 = vsel %vm201, %v283, %v282
    %v285 = vsub.s32 4, %v261
    %v286 = vsel %vm201, %v285, %v261
    %v287 = vsel %vm200, %v167, %v284
    %v288 = vsel %vm200, 0, %v286
    %v289 = vcosq.f32.pop %v287
    %v290 = vsinq.f32.pop %v287
    %vm291 = vweird.f32 %v167
    %v292 = vadd.s32 %v288, 3
    %v293 = vand.u32 %v292, 3
    %vm294 = vcmp.lt.s32.totalorder %v293, 2
    %vm295 = vcmp.eq.s32.totalorder %v293, 0
    %v296 = vxor.u32 %v290, 2147483648
    %v297 = vsel %vm295, %v289, %v296
    %vm298 = vcmp.eq.s32.totalorder %v293, 2
    %v299 = vxor.u32 %v289, 2147483648
    %v300 = vsel %vm298, %v299, %v290
    %v301 = vsel %vm294, %v297, %v300
    %v302 = vsel %vm291, nan, %v301
    %v303 = vand.u32 2147483647, %v168
    %vm304 = vcmp.le.f32.partialorder %v303, 0.7853982
    %vm305 = vcmp.lt.s32.totalorder %v168, 0
    %v306 = vand.u32 %v168, 2139095040
    %v307 = vshrl.u32 %v306, 23
    %v308 = vsub.s32 %v307, 127
    %v309 = vand.u32 2147483647, %v168
    %v310 = vand.u32 %v309, 8388607
    %v311 = vor.u32 %v310, 8388608
    %v312 = vsub.s32 0, %v311
    %v313 = vadd.s32 %v308, 1
    %vm314 = vcmp.gt.s32.totalorder %v313, 0
    %v315 = vsel %vm314, %v313, 0
    %v316 = vshrl.u32 %v315, 5
    %v317 = vand.u32 %v315, 31
    %v318 = vsub.s32 32, %v317
    %v319 = vshrl.u32 683565275, %v318
    %v320 = vshll.u32 683565275, %v317
    %v321 = vshrl.u32 2475754826, %v318
    %v322 = vor.u32 %v320, %v321
    %v323 = vshll.u32 2475754826, %v317
    %v324 = vshrl.u32 2131351028, %v318
    %v325 = vor.u32 %v323, %v324
    %v326 = vshll.u32 2131351028, %v317
    %v327 = vshrl.u32 2102212464, %v318
    %v328 = vor.u32 %v326, %v327
    %v329 = vshll.u32 2102212464, %v317
    %v330 = vshrl.u32 920167782, %v318
    %v331 = vor.u32 %v329, %v330
    %v332 = vshll.u32 920167782, %v317
    %v333 = vshrl.u32 1326507024, %v318
    %v334 = vor.u32 %v332, %v333
    %vm335 = vcmp.lt.s32.totalorder %v316, 1
    %vm336 = vcmp.lt.s32.totalorder %v316, 2
    %vm337 = vcmp.lt.s32.totalorder %v316, 3
    %vm338 = vcmp.lt.s32.totalorder %v316, 4
    %v339 = vsel %vm335, %v319, %v322
    %v340 = vsel %vm338, %v328, 2102212464
    %v341 = vsel %vm337, %v325, %v340
    %v342 = vsel %vm336, %v339, %v341
    %v343 = vsel %vm335, %v322, %v325
    %v344 = vsel %vm338, %v331, 920167782
    %v345 = vsel %vm337, %v328, %v344
    %v346 = vsel %vm336, %v343, %v345
    %v347 = vsel %vm335, %v325, %v328
    %v348 = vsel %vm338, %v334, 1326507024
    %v349 = vsel %vm337, %v331, %v348
    %v350 = vsel %vm336, %v347, %v349
    %v351 = vshll.u32 %v311, 8
    %v352 = vmul.u32.u64.compose %v351, %v350
    %v353 = vextract.low.u32 %v352
    %v354 = vextract.high.u32 %v352
    %v355 = vmul.u32.u64.compose %v351, %v346
    %v356 = vextract.low.u32 %v355
    %v357 = vextract.high.u32 %v355
    %v358 = vmul.u32 %v351, %v342
    %v359 = vadd.s32 %v354, %v356
    %vm360 = vc.u32 %v354, %v356
    %v361 = vadd.s32 %v357, 1
    %v362 = vsel %vm360, %v361, %v357
    %v363 = vadd.s32 %v358, %v362
    %v364 = vadd.s32 %v363, 536870912
    %v365 = vshrl.u32 %v364, 30
    %v366 = vshll.u32 %v365, 30
    %v367 = vsub.s32 %v363, %v366
    %vm368 = vcmp.lt.s32.totalorder %v367, 0
    %v369 = vsub.s32 0, %v367
    %v370 = vsel %vm368, %v369, %v367
    %v371 = vclz %v370
    %v372 = vsub.s32 %v371, 2
    %vm373 = vcmp.gt.s32.totalorder 0, %v372
    %v374 = vsel %vm373, 0, %v372
    %v375 = vsub.s32 32, %v374
    %v376 = vshll.u32 %v367, %v374
    %v377 = vshrl.u32 %v359, %v375
    %v378 = vor.u32 %v376, %v377
    %v379 = vsub.s32 4294967266, %v374
    %v380 = vadd.s32 %v379, 127
    %v381 = vshll.u32 %v380, 23
    %v382 = vor.u32 4788187, %v381
    %v383 = vand.u32 2147483647, %v382
    %v385 = vcvt.s32.f32 %v378
    %v386 = vmul.f32 %v385, %v383
    %v387 = vxor.u32 %v386, 2147483648
    %v388 = vsel %vm305, %v387, %v386
    %v389 = vsub.s32 4, %v365
    %v390 = vsel %vm305, %v389, %v365
    %v391 = vsel %vm304, %v168, %v388
    %v392 = vsel %vm304, 0, %v390
    %v393 = vcosq.f32.pop %v391
    %v394 = vsinq.f32.pop %v391
    %vm395 = vweird.f32 %v168
    %v396 = vadd.s32 %v392, 3
    %v397 = vand.u32 %v396, 3
    %vm398 = vcmp.lt.s32.totalorder %v397, 2
    %vm399 = vcmp.eq.s32.totalorder %v397, 0
    %v400 = vxor.u32 %v394, 2147483648
    %v401 = vsel %vm399, %v393, %v400
    %vm402 = vcmp.eq.s32.totalorder %v397, 2
    %v403 = vxor.u32 %v393, 2147483648
    %v404 = vsel %vm402, %v403, %v394
    %v405 = vsel %vm398, %v401, %v404
    %v406 = vsel %vm395, nan, %v405
    %v407 = vand.u32 2147483647, %v169
    %vm408 = vcmp.le.f32.partialorder %v407, 0.7853982
    %vm409 = vcmp.lt.s32.totalorder %v169, 0
    %v410 = vand.u32 %v169, 2139095040
    %v411 = vshrl.u32 %v410, 23
    %v412 = vsub.s32 %v411, 127
    %v413 = vand.u32 2147483647, %v169
    %v414 = vand.u32 %v413, 8388607
    %v415 = vor.u32 %v414, 8388608
    %v416 = vsub.s32 0, %v415
    %v417 = vadd.s32 %v412, 1
    %vm418 = vcmp.gt.s32.totalorder %v417, 0
    %v419 = vsel %vm418, %v417, 0
    %v420 = vshrl.u32 %v419, 5
    %v421 = vand.u32 %v419, 31
    %v422 = vsub.s32 32, %v421
    %v423 = vshrl.u32 683565275, %v422
    %v424 = vshll.u32 683565275, %v421
    %v425 = vshrl.u32 2475754826, %v422
    %v426 = vor.u32 %v424, %v425
    %v427 = vshll.u32 2475754826, %v421
    %v428 = vshrl.u32 2131351028, %v422
    %v429 = vor.u32 %v427, %v428
    %v430 = vshll.u32 2131351028, %v421
    %v431 = vshrl.u32 2102212464, %v422
    %v432 = vor.u32 %v430, %v431
    %v433 = vshll.u32 2102212464, %v421
    %v434 = vshrl.u32 920167782, %v422
    %v435 = vor.u32 %v433, %v434
    %v436 = vshll.u32 920167782, %v421
    %v437 = vshrl.u32 1326507024, %v422
    %v438 = vor.u32 %v436, %v437
    %vm439 = vcmp.lt.s32.totalorder %v420, 1
    %vm440 = vcmp.lt.s32.totalorder %v420, 2
    %vm441 = vcmp.lt.s32.totalorder %v420, 3
    %vm442 = vcmp.lt.s32.totalorder %v420, 4
    %v443 = vsel %vm439, %v423, %v426
    %v444 = vsel %vm442, %v432, 2102212464
    %v445 = vsel %vm441, %v429, %v444
    %v446 = vsel %vm440, %v443, %v445
    %v447 = vsel %vm439, %v426, %v429
    %v448 = vsel %vm442, %v435, 920167782
    %v449 = vsel %vm441, %v432, %v448
    %v450 = vsel %vm440, %v447, %v449
    %v451 = vsel %vm439, %v429, %v432
    %v452 = vsel %vm442, %v438, 1326507024
    %v453 = vsel %vm441, %v435, %v452
    %v454 = vsel %vm440, %v451, %v453
    %v455 = vshll.u32 %v415, 8
    %v456 = vmul.u32.u64.compose %v455, %v454
    %v457 = vextract.low.u32 %v456
    %v458 = vextract.high.u32 %v456
    %v459 = vmul.u32.u64.compose %v455, %v450
    %v460 = vextract.low.u32 %v459
    %v461 = vextract.high.u32 %v459
    %v462 = vmul.u32 %v455, %v446
    %v463 = vadd.s32 %v458, %v460
    %vm464 = vc.u32 %v458, %v460
    %v465 = vadd.s32 %v461, 1
    %v466 = vsel %vm464, %v465, %v461
    %v467 = vadd.s32 %v462, %v466
    %v468 = vadd.s32 %v467, 536870912
    %v469 = vshrl.u32 %v468, 30
    %v470 = vshll.u32 %v469, 30
    %v471 = vsub.s32 %v467, %v470
    %vm472 = vcmp.lt.s32.totalorder %v471, 0
    %v473 = vsub.s32 0, %v471
    %v474 = vsel %vm472, %v473, %v471
    %v475 = vclz %v474
    %v476 = vsub.s32 %v475, 2
    %vm477 = vcmp.gt.s32.totalorder 0, %v476
    %v478 = vsel %vm477, 0, %v476
    %v479 = vsub.s32 32, %v478
    %v480 = vshll.u32 %v471, %v478
    %v481 = vshrl.u32 %v463, %v479
    %v482 = vor.u32 %v480, %v481
    %v483 = vsub.s32 4294967266, %v478
    %v484 = vadd.s32 %v483, 127
    %v485 = vshll.u32 %v484, 23
    %v486 = vor.u32 4788187, %v485
    %v487 = vand.u32 2147483647, %v486
    %v489 = vcvt.s32.f32 %v482
    %v490 = vmul.f32 %v489, %v487
    %v491 = vxor.u32 %v490, 2147483648
    %v492 = vsel %vm409, %v491, %v490
    %v493 = vsub.s32 4, %v469
    %v494 = vsel %vm409, %v493, %v469
    %v495 = vsel %vm408, %v169, %v492
    %v496 = vsel %vm408, 0, %v494
    %v497 = vcosq.f32.pop %v495
    %v498 = vsinq.f32.pop %v495
    %vm499 = vweird.f32 %v169
    %v500 = vadd.s32 %v496, 3
    %v501 = vand.u32 %v500, 3
    %vm502 = vcmp.lt.s32.totalorder %v501, 2
    %vm503 = vcmp.eq.s32.totalorder %v501, 0
    %v504 = vxor.u32 %v498, 2147483648
    %v505 = vsel %vm503, %v497, %v504
    %vm506 = vcmp.eq.s32.totalorder %v501, 2
    %v507 = vxor.u32 %v497, 2147483648
    %v508 = vsel %vm506, %v507, %v498
    %v509 = vsel %vm502, %v505, %v508
    %v510 = vsel %vm499, nan, %v509
    %v511 = vand.u32 2147483647, %v170
    %vm512 = vcmp.le.f32.partialorder %v511, 0.7853982
    %vm513 = vcmp.lt.s32.totalorder %v170, 0
    %v514 = vand.u32 %v170, 2139095040
    %v515 = vshrl.u32 %v514, 23
    %v516 = vsub.s32 %v515, 127
    %v517 = vand.u32 2147483647, %v170
    %v518 = vand.u32 %v517, 8388607
    %v519 = vor.u32 %v518, 8388608
    %v520 = vsub.s32 0, %v519
    %v521 = vadd.s32 %v516, 1
    %vm522 = vcmp.gt.s32.totalorder %v521, 0
    %v523 = vsel %vm522, %v521, 0
    %v524 = vshrl.u32 %v523, 5
    %v525 = vand.u32 %v523, 31
    %v526 = vsub.s32 32, %v525
    %v527 = vshrl.u32 683565275, %v526
    %v528 = vshll.u32 683565275, %v525
    %v529 = vshrl.u32 2475754826, %v526
    %v530 = vor.u32 %v528, %v529
    %v531 = vshll.u32 2475754826, %v525
    %v532 = vshrl.u32 2131351028, %v526
    %v533 = vor.u32 %v531, %v532
    %v534 = vshll.u32 2131351028, %v525
    %v535 = vshrl.u32 2102212464, %v526
    %v536 = vor.u32 %v534, %v535
    %v537 = vshll.u32 2102212464, %v525
    %v538 = vshrl.u32 920167782, %v526
    %v539 = vor.u32 %v537, %v538
    %v540 = vshll.u32 920167782, %v525
    %v541 = vshrl.u32 1326507024, %v526
    %v542 = vor.u32 %v540, %v541
    %vm543 = vcmp.lt.s32.totalorder %v524, 1
    %vm544 = vcmp.lt.s32.totalorder %v524, 2
    %vm545 = vcmp.lt.s32.totalorder %v524, 3
    %vm546 = vcmp.lt.s32.totalorder %v524, 4
    %v547 = vsel %vm543, %v527, %v530
    %v548 = vsel %vm546, %v536, 2102212464
    %v549 = vsel %vm545, %v533, %v548
    %v550 = vsel %vm544, %v547, %v549
    %v551 = vsel %vm543, %v530, %v533
    %v552 = vsel %vm546, %v539, 920167782
    %v553 = vsel %vm545, %v536, %v552
    %v554 = vsel %vm544, %v551, %v553
    %v555 = vsel %vm543, %v533, %v536
    %v556 = vsel %vm546, %v542, 1326507024
    %v557 = vsel %vm545, %v539, %v556
    %v558 = vsel %vm544, %v555, %v557
    %v559 = vshll.u32 %v519, 8
    %v560 = vmul.u32.u64.compose %v559, %v558
    %v561 = vextract.low.u32 %v560
    %v562 = vextract.high.u32 %v560
    %v563 = vmul.u32.u64.compose %v559, %v554
    %v564 = vextract.low.u32 %v563
    %v565 = vextract.high.u32 %v563
    %v566 = vmul.u32 %v559, %v550
    %v567 = vadd.s32 %v562, %v564
    %vm568 = vc.u32 %v562, %v564
    %v569 = vadd.s32 %v565, 1
    %v570 = vsel %vm568, %v569, %v565
    %v571 = vadd.s32 %v566, %v570
    %v572 = vadd.s32 %v571, 536870912
    %v573 = vshrl.u32 %v572, 30
    %v574 = vshll.u32 %v573, 30
    %v575 = vsub.s32 %v571, %v574
    %vm576 = vcmp.lt.s32.totalorder %v575, 0
    %v577 = vsub.s32 0, %v575
    %v578 = vsel %vm576, %v577, %v575
    %v579 = vclz %v578
    %v580 = vsub.s32 %v579, 2
    %vm581 = vcmp.gt.s32.totalorder 0, %v580
    %v582 = vsel %vm581, 0, %v580
    %v583 = vsub.s32 32, %v582
    %v584 = vshll.u32 %v575, %v582
    %v585 = vshrl.u32 %v567, %v583
    %v586 = vor.u32 %v584, %v585
    %v587 = vsub.s32 4294967266, %v582
    %v588 = vadd.s32 %v587, 127
    %v589 = vshll.u32 %v588, 23
    %v590 = vor.u32 4788187, %v589
    %v591 = vand.u32 2147483647, %v590
    %v593 = vcvt.s32.f32 %v586
    %v594 = vmul.f32 %v593, %v591
    %v595 = vxor.u32 %v594, 2147483648
    %v596 = vsel %vm513, %v595, %v594
    %v597 = vsub.s32 4, %v573
    %v598 = vsel %vm513, %v597, %v573
    %v599 = vsel %vm512, %v170, %v596
    %v600 = vsel %vm512, 0, %v598
    %v601 = vcosq.f32.pop %v599
    %v602 = vsinq.f32.pop %v599
    %vm603 = vweird.f32 %v170
    %v604 = vadd.s32 %v600, 3
    %v605 = vand.u32 %v604, 3
    %vm606 = vcmp.lt.s32.totalorder %v605, 2
    %vm607 = vcmp.eq.s32.totalorder %v605, 0
    %v608 = vxor.u32 %v602, 2147483648
    %v609 = vsel %vm607, %v601, %v608
    %vm610 = vcmp.eq.s32.totalorder %v605, 2
    %v611 = vxor.u32 %v601, 2147483648
    %v612 = vsel %vm610, %v611, %v602
    %v613 = vsel %vm606, %v609, %v612
    %v614 = vsel %vm603, nan, %v613
    %v615 = vand.u32 2147483647, %v171
    %vm616 = vcmp.le.f32.partialorder %v615, 0.7853982
    %vm617 = vcmp.lt.s32.totalorder %v171, 0
    %v618 = vand.u32 %v171, 2139095040
    %v619 = vshrl.u32 %v618, 23
    %v620 = vsub.s32 %v619, 127
    %v621 = vand.u32 2147483647, %v171
    %v622 = vand.u32 %v621, 8388607
    %v623 = vor.u32 %v622, 8388608
    %v624 = vsub.s32 0, %v623
    %v625 = vadd.s32 %v620, 1
    %vm626 = vcmp.gt.s32.totalorder %v625, 0
    %v627 = vsel %vm626, %v625, 0
    %v628 = vshrl.u32 %v627, 5
    %v629 = vand.u32 %v627, 31
    %v630 = vsub.s32 32, %v629
    %v631 = vshrl.u32 683565275, %v630
    %v632 = vshll.u32 683565275, %v629
    %v633 = vshrl.u32 2475754826, %v630
    %v634 = vor.u32 %v632, %v633
    %v635 = vshll.u32 2475754826, %v629
    %v636 = vshrl.u32 2131351028, %v630
    %v637 = vor.u32 %v635, %v636
    %v638 = vshll.u32 2131351028, %v629
    %v639 = vshrl.u32 2102212464, %v630
    %v640 = vor.u32 %v638, %v639
    %v641 = vshll.u32 2102212464, %v629
    %v642 = vshrl.u32 920167782, %v630
    %v643 = vor.u32 %v641, %v642
    %v644 = vshll.u32 920167782, %v629
    %v645 = vshrl.u32 1326507024, %v630
    %v646 = vor.u32 %v644, %v645
    %vm647 = vcmp.lt.s32.totalorder %v628, 1
    %vm648 = vcmp.lt.s32.totalorder %v628, 2
    %vm649 = vcmp.lt.s32.totalorder %v628, 3
    %vm650 = vcmp.lt.s32.totalorder %v628, 4
    %v651 = vsel %vm647, %v631, %v634
    %v652 = vsel %vm650, %v640, 2102212464
    %v653 = vsel %vm649, %v637, %v652
    %v654 = vsel %vm648, %v651, %v653
    %v655 = vsel %vm647, %v634, %v637
    %v656 = vsel %vm650, %v643, 920167782
    %v657 = vsel %vm649, %v640, %v656
    %v658 = vsel %vm648, %v655, %v657
    %v659 = vsel %vm647, %v637, %v640
    %v660 = vsel %vm650, %v646, 1326507024
    %v661 = vsel %vm649, %v643, %v660
    %v662 = vsel %vm648, %v659, %v661
    %v663 = vshll.u32 %v623, 8
    %v664 = vmul.u32.u64.compose %v663, %v662
    %v665 = vextract.low.u32 %v664
    %v666 = vextract.high.u32 %v664
    %v667 = vmul.u32.u64.compose %v663, %v658
    %v668 = vextract.low.u32 %v667
    %v669 = vextract.high.u32 %v667
    %v670 = vmul.u32 %v663, %v654
    %v671 = vadd.s32 %v666, %v668
    %vm672 = vc.u32 %v666, %v668
    %v673 = vadd.s32 %v669, 1
    %v674 = vsel %vm672, %v673, %v669
    %v675 = vadd.s32 %v670, %v674
    %v676 = vadd.s32 %v675, 536870912
    %v677 = vshrl.u32 %v676, 30
    %v678 = vshll.u32 %v677, 30
    %v679 = vsub.s32 %v675, %v678
    %vm680 = vcmp.lt.s32.totalorder %v679, 0
    %v681 = vsub.s32 0, %v679
    %v682 = vsel %vm680, %v681, %v679
    %v683 = vclz %v682
    %v684 = vsub.s32 %v683, 2
    %vm685 = vcmp.gt.s32.totalorder 0, %v684
    %v686 = vsel %vm685, 0, %v684
    %v687 = vsub.s32 32, %v686
    %v688 = vshll.u32 %v679, %v686
    %v689 = vshrl.u32 %v671, %v687
    %v690 = vor.u32 %v688, %v689
    %v691 = vsub.s32 4294967266, %v686
    %v692 = vadd.s32 %v691, 127
    %v693 = vshll.u32 %v692, 23
    %v694 = vor.u32 4788187, %v693
    %v695 = vand.u32 2147483647, %v694
    %v697 = vcvt.s32.f32 %v690
    %v698 = vmul.f32 %v697, %v695
    %v699 = vxor.u32 %v698, 2147483648
    %v700 = vsel %vm617, %v699, %v698
    %v701 = vsub.s32 4, %v677
    %v702 = vsel %vm617, %v701, %v677
    %v703 = vsel %vm616, %v171, %v700
    %v704 = vsel %vm616, 0, %v702
    %v705 = vcosq.f32.pop %v703
    %v706 = vsinq.f32.pop %v703
    %vm707 = vweird.f32 %v171
    %v708 = vadd.s32 %v704, 3
    %v709 = vand.u32 %v708, 3
    %vm710 = vcmp.lt.s32.totalorder %v709, 2
    %vm711 = vcmp.eq.s32.totalorder %v709, 0
    %v712 = vxor.u32 %v706, 2147483648
    %v713 = vsel %vm711, %v705, %v712
    %vm714 = vcmp.eq.s32.totalorder %v709, 2
    %v715 = vxor.u32 %v705, 2147483648
    %v716 = vsel %vm714, %v715, %v706
    %v717 = vsel %vm710, %v713, %v716
    %v718 = vsel %vm707, nan, %v717
    %v719 = vand.u32 2147483647, %v172
    %vm720 = vcmp.le.f32.partialorder %v719, 0.7853982
    %vm721 = vcmp.lt.s32.totalorder %v172, 0
    %v722 = vand.u32 %v172, 2139095040
    %v723 = vshrl.u32 %v722, 23
    %v724 = vsub.s32 %v723, 127
    %v725 = vand.u32 2147483647, %v172
    %v726 = vand.u32 %v725, 8388607
    %v727 = vor.u32 %v726, 8388608
    %v728 = vsub.s32 0, %v727
    %v729 = vadd.s32 %v724, 1
    %vm730 = vcmp.gt.s32.totalorder %v729, 0
    %v731 = vsel %vm730, %v729, 0
    %v732 = vshrl.u32 %v731, 5
    %v733 = vand.u32 %v731, 31
    %v734 = vsub.s32 32, %v733
    %v735 = vshrl.u32 683565275, %v734
    %v736 = vshll.u32 683565275, %v733
    %v737 = vshrl.u32 2475754826, %v734
    %v738 = vor.u32 %v736, %v737
    %v739 = vshll.u32 2475754826, %v733
    %v740 = vshrl.u32 2131351028, %v734
    %v741 = vor.u32 %v739, %v740
    %v742 = vshll.u32 2131351028, %v733
    %v743 = vshrl.u32 2102212464, %v734
    %v744 = vor.u32 %v742, %v743
    %v745 = vshll.u32 2102212464, %v733
    %v746 = vshrl.u32 920167782, %v734
    %v747 = vor.u32 %v745, %v746
    %v748 = vshll.u32 920167782, %v733
    %v749 = vshrl.u32 1326507024, %v734
    %v750 = vor.u32 %v748, %v749
    %vm751 = vcmp.lt.s32.totalorder %v732, 1
    %vm752 = vcmp.lt.s32.totalorder %v732, 2
    %vm753 = vcmp.lt.s32.totalorder %v732, 3
    %vm754 = vcmp.lt.s32.totalorder %v732, 4
    %v755 = vsel %vm751, %v735, %v738
    %v756 = vsel %vm754, %v744, 2102212464
    %v757 = vsel %vm753, %v741, %v756
    %v758 = vsel %vm752, %v755, %v757
    %v759 = vsel %vm751, %v738, %v741
    %v760 = vsel %vm754, %v747, 920167782
    %v761 = vsel %vm753, %v744, %v760
    %v762 = vsel %vm752, %v759, %v761
    %v763 = vsel %vm751, %v741, %v744
    %v764 = vsel %vm754, %v750, 1326507024
    %v765 = vsel %vm753, %v747, %v764
    %v766 = vsel %vm752, %v763, %v765
    %v767 = vshll.u32 %v727, 8
    %v768 = vmul.u32.u64.compose %v767, %v766
    %v769 = vextract.low.u32 %v768
    %v770 = vextract.high.u32 %v768
    %v771 = vmul.u32.u64.compose %v767, %v762
    %v772 = vextract.low.u32 %v771
    %v773 = vextract.high.u32 %v771
    %v774 = vmul.u32 %v767, %v758
    %v775 = vadd.s32 %v770, %v772
    %vm776 = vc.u32 %v770, %v772
    %v777 = vadd.s32 %v773, 1
    %v778 = vsel %vm776, %v777, %v773
    %v779 = vadd.s32 %v774, %v778
    %v780 = vadd.s32 %v779, 536870912
    %v781 = vshrl.u32 %v780, 30
    %v782 = vshll.u32 %v781, 30
    %v783 = vsub.s32 %v779, %v782
    %vm784 = vcmp.lt.s32.totalorder %v783, 0
    %v785 = vsub.s32 0, %v783
    %v786 = vsel %vm784, %v785, %v783
    %v787 = vclz %v786
    %v788 = vsub.s32 %v787, 2
    %vm789 = vcmp.gt.s32.totalorder 0, %v788
    %v790 = vsel %vm789, 0, %v788
    %v791 = vsub.s32 32, %v790
    %v792 = vshll.u32 %v783, %v790
    %v793 = vshrl.u32 %v775, %v791
    %v794 = vor.u32 %v792, %v793
    %v795 = vsub.s32 4294967266, %v790
    %v796 = vadd.s32 %v795, 127
    %v797 = vshll.u32 %v796, 23
    %v798 = vor.u32 4788187, %v797
    %v799 = vand.u32 2147483647, %v798
    %v801 = vcvt.s32.f32 %v794
    %v802 = vmul.f32 %v801, %v799
    %v803 = vxor.u32 %v802, 2147483648
    %v804 = vsel %vm721, %v803, %v802
    %v805 = vsub.s32 4, %v781
    %v806 = vsel %vm721, %v805, %v781
    %v807 = vsel %vm720, %v172, %v804
    %v808 = vsel %vm720, 0, %v806
    %v809 = vcosq.f32.pop %v807
    %v810 = vsinq.f32.pop %v807
    %vm811 = vweird.f32 %v172
    %v812 = vadd.s32 %v808, 3
    %v813 = vand.u32 %v812, 3
    %vm814 = vcmp.lt.s32.totalorder %v813, 2
    %vm815 = vcmp.eq.s32.totalorder %v813, 0
    %v816 = vxor.u32 %v810, 2147483648
    %v817 = vsel %vm815, %v809, %v816
    %vm818 = vcmp.eq.s32.totalorder %v813, 2
    %v819 = vxor.u32 %v809, 2147483648
    %v820 = vsel %vm818, %v819, %v810
    %v821 = vsel %vm814, %v817, %v820
    %v822 = vsel %vm811, nan, %v821
    %v823 = vand.u32 2147483647, %v173
    %vm824 = vcmp.le.f32.partialorder %v823, 0.7853982
    %vm825 = vcmp.lt.s32.totalorder %v173, 0
    %v826 = vand.u32 %v173, 2139095040
    %v827 = vshrl.u32 %v826, 23
    %v828 = vsub.s32 %v827, 127
    %v829 = vand.u32 2147483647, %v173
    %v830 = vand.u32 %v829, 8388607
    %v831 = vor.u32 %v830, 8388608
    %v832 = vsub.s32 0, %v831
    %v833 = vadd.s32 %v828, 1
    %vm834 = vcmp.gt.s32.totalorder %v833, 0
    %v835 = vsel %vm834, %v833, 0
    %v836 = vshrl.u32 %v835, 5
    %v837 = vand.u32 %v835, 31
    %v838 = vsub.s32 32, %v837
    %v839 = vshrl.u32 683565275, %v838
    %v840 = vshll.u32 683565275, %v837
    %v841 = vshrl.u32 2475754826, %v838
    %v842 = vor.u32 %v840, %v841
    %v843 = vshll.u32 2475754826, %v837
    %v844 = vshrl.u32 2131351028, %v838
    %v845 = vor.u32 %v843, %v844
    %v846 = vshll.u32 2131351028, %v837
    %v847 = vshrl.u32 2102212464, %v838
    %v848 = vor.u32 %v846, %v847
    %v849 = vshll.u32 2102212464, %v837
    %v850 = vshrl.u32 920167782, %v838
    %v851 = vor.u32 %v849, %v850
    %v852 = vshll.u32 920167782, %v837
    %v853 = vshrl.u32 1326507024, %v838
    %v854 = vor.u32 %v852, %v853
    %vm855 = vcmp.lt.s32.totalorder %v836, 1
    %vm856 = vcmp.lt.s32.totalorder %v836, 2
    %vm857 = vcmp.lt.s32.totalorder %v836, 3
    %vm858 = vcmp.lt.s32.totalorder %v836, 4
    %v859 = vsel %vm855, %v839, %v842
    %v860 = vsel %vm858, %v848, 2102212464
    %v861 = vsel %vm857, %v845, %v860
    %v862 = vsel %vm856, %v859, %v861
    %v863 = vsel %vm855, %v842, %v845
    %v864 = vsel %vm858, %v851, 920167782
    %v865 = vsel %vm857, %v848, %v864
    %v866 = vsel %vm856, %v863, %v865
    %v867 = vsel %vm855, %v845, %v848
    %v868 = vsel %vm858, %v854, 1326507024
    %v869 = vsel %vm857, %v851, %v868
    %v870 = vsel %vm856, %v867, %v869
    %v871 = vshll.u32 %v831, 8
    %v872 = vmul.u32.u64.compose %v871, %v870
    %v873 = vextract.low.u32 %v872
    %v874 = vextract.high.u32 %v872
    %v875 = vmul.u32.u64.compose %v871, %v866
    %v876 = vextract.low.u32 %v875
    %v877 = vextract.high.u32 %v875
    %v878 = vmul.u32 %v871, %v862
    %v879 = vadd.s32 %v874, %v876
    %vm880 = vc.u32 %v874, %v876
    %v881 = vadd.s32 %v877, 1
    %v882 = vsel %vm880, %v881, %v877
    %v883 = vadd.s32 %v878, %v882
    %v884 = vadd.s32 %v883, 536870912
    %v885 = vshrl.u32 %v884, 30
    %v886 = vshll.u32 %v885, 30
    %v887 = vsub.s32 %v883, %v886
    %vm888 = vcmp.lt.s32.totalorder %v887, 0
    %v889 = vsub.s32 0, %v887
    %v890 = vsel %vm888, %v889, %v887
    %v891 = vclz %v890
    %v892 = vsub.s32 %v891, 2
    %vm893 = vcmp.gt.s32.totalorder 0, %v892
    %v894 = vsel %vm893, 0, %v892
    %v895 = vsub.s32 32, %v894
    %v896 = vshll.u32 %v887, %v894
    %v897 = vshrl.u32 %v879, %v895
    %v898 = vor.u32 %v896, %v897
    %v899 = vsub.s32 4294967266, %v894
    %v900 = vadd.s32 %v899, 127
    %v901 = vshll.u32 %v900, 23
    %v902 = vor.u32 4788187, %v901
    %v903 = vand.u32 2147483647, %v902
    %v905 = vcvt.s32.f32 %v898
    %v906 = vmul.f32 %v905, %v903
    %v907 = vxor.u32 %v906, 2147483648
    %v908 = vsel %vm825, %v907, %v906
    %v909 = vsub.s32 4, %v885
    %v910 = vsel %vm825, %v909, %v885
    %v911 = vsel %vm824, %v173, %v908
    %v912 = vsel %vm824, 0, %v910
    %v913 = vcosq.f32.pop %v911
    %v914 = vsinq.f32.pop %v911
    %vm915 = vweird.f32 %v173
    %v916 = vadd.s32 %v912, 3
    %v917 = vand.u32 %v916, 3
    %vm918 = vcmp.lt.s32.totalorder %v917, 2
    %vm919 = vcmp.eq.s32.totalorder %v917, 0
    %v920 = vxor.u32 %v914, 2147483648
    %v921 = vsel %vm919, %v913, %v920
    %vm922 = vcmp.eq.s32.totalorder %v917, 2
    %v923 = vxor.u32 %v913, 2147483648
    %v924 = vsel %vm922, %v923, %v914
    %v925 = vsel %vm918, %v921, %v924
    %v926 = vsel %vm915, nan, %v925
    %v927 = vand.u32 2147483647, %v174
    %vm928 = vcmp.le.f32.partialorder %v927, 0.7853982
    %vm929 = vcmp.lt.s32.totalorder %v174, 0
    %v930 = vand.u32 %v174, 2139095040
    %v931 = vshrl.u32 %v930, 23
    %v932 = vsub.s32 %v931, 127
    %v933 = vand.u32 2147483647, %v174
    %v934 = vand.u32 %v933, 8388607
    %v935 = vor.u32 %v934, 8388608
    %v936 = vsub.s32 0, %v935
    %v937 = vadd.s32 %v932, 1
    %vm938 = vcmp.gt.s32.totalorder %v937, 0
    %v939 = vsel %vm938, %v937, 0
    %v940 = vshrl.u32 %v939, 5
    %v941 = vand.u32 %v939, 31
    %v942 = vsub.s32 32, %v941
    %v943 = vshrl.u32 683565275, %v942
    %v944 = vshll.u32 683565275, %v941
    %v945 = vshrl.u32 2475754826, %v942
    %v946 = vor.u32 %v944, %v945
    %v947 = vshll.u32 2475754826, %v941
    %v948 = vshrl.u32 2131351028, %v942
    %v949 = vor.u32 %v947, %v948
    %v950 = vshll.u32 2131351028, %v941
    %v951 = vshrl.u32 2102212464, %v942
    %v952 = vor.u32 %v950, %v951
    %v953 = vshll.u32 2102212464, %v941
    %v954 = vshrl.u32 920167782, %v942
    %v955 = vor.u32 %v953, %v954
    %v956 = vshll.u32 920167782, %v941
    %v957 = vshrl.u32 1326507024, %v942
    %v958 = vor.u32 %v956, %v957
    %vm959 = vcmp.lt.s32.totalorder %v940, 1
    %vm960 = vcmp.lt.s32.totalorder %v940, 2
    %vm961 = vcmp.lt.s32.totalorder %v940, 3
    %vm962 = vcmp.lt.s32.totalorder %v940, 4
    %v963 = vsel %vm959, %v943, %v946
    %v964 = vsel %vm962, %v952, 2102212464
    %v965 = vsel %vm961, %v949, %v964
    %v966 = vsel %vm960, %v963, %v965
    %v967 = vsel %vm959, %v946, %v949
    %v968 = vsel %vm962, %v955, 920167782
    %v969 = vsel %vm961, %v952, %v968
    %v970 = vsel %vm960, %v967, %v969
    %v971 = vsel %vm959, %v949, %v952
    %v972 = vsel %vm962, %v958, 1326507024
    %v973 = vsel %vm961, %v955, %v972
    %v974 = vsel %vm960, %v971, %v973
    %v975 = vshll.u32 %v935, 8
    %v976 = vmul.u32.u64.compose %v975, %v974
    %v977 = vextract.low.u32 %v976
    %v978 = vextract.high.u32 %v976
    %v979 = vmul.u32.u64.compose %v975, %v970
    %v980 = vextract.low.u32 %v979
    %v981 = vextract.high.u32 %v979
    %v982 = vmul.u32 %v975, %v966
    %v983 = vadd.s32 %v978, %v980
    %vm984 = vc.u32 %v978, %v980
    %v985 = vadd.s32 %v981, 1
    %v986 = vsel %vm984, %v985, %v981
    %v987 = vadd.s32 %v982, %v986
    %v988 = vadd.s32 %v987, 536870912
    %v989 = vshrl.u32 %v988, 30
    %v990 = vshll.u32 %v989, 30
    %v991 = vsub.s32 %v987, %v990
    %vm992 = vcmp.lt.s32.totalorder %v991, 0
    %v993 = vsub.s32 0, %v991
    %v994 = vsel %vm992, %v993, %v991
    %v995 = vclz %v994
    %v996 = vsub.s32 %v995, 2
    %vm997 = vcmp.gt.s32.totalorder 0, %v996
    %v998 = vsel %vm997, 0, %v996
    %v999 = vsub.s32 32, %v998
    %v1000 = vshll.u32 %v991, %v998
    %v1001 = vshrl.u32 %v983, %v999
    %v1002 = vor.u32 %v1000, %v1001
    %v1003 = vsub.s32 4294967266, %v998
    %v1004 = vadd.s32 %v1003, 127
    %v1005 = vshll.u32 %v1004, 23
    %v1006 = vor.u32 4788187, %v1005
    %v1007 = vand.u32 2147483647, %v1006
    %v1009 = vcvt.s32.f32 %v1002
    %v1010 = vmul.f32 %v1009, %v1007
    %v1011 = vxor.u32 %v1010, 2147483648
    %v1012 = vsel %vm929, %v1011, %v1010
    %v1013 = vsub.s32 4, %v989
    %v1014 = vsel %vm929, %v1013, %v989
    %v1015 = vsel %vm928, %v174, %v1012
    %v1016 = vsel %vm928, 0, %v1014
    %v1017 = vcosq.f32.pop %v1015
    %v1018 = vsinq.f32.pop %v1015
    %vm1019 = vweird.f32 %v174
    %v1020 = vadd.s32 %v1016, 3
    %v1021 = vand.u32 %v1020, 3
    %vm1022 = vcmp.lt.s32.totalorder %v1021, 2
    %vm1023 = vcmp.eq.s32.totalorder %v1021, 0
    %v1024 = vxor.u32 %v1018, 2147483648
    %v1025 = vsel %vm1023, %v1017, %v1024
    %vm1026 = vcmp.eq.s32.totalorder %v1021, 2
    %v1027 = vxor.u32 %v1017, 2147483648
    %v1028 = vsel %vm1026, %v1027, %v1018
    %v1029 = vsel %vm1022, %v1025, %v1028
    %v1030 = vsel %vm1019, nan, %v1029
    %v1031 = vand.u32 2147483647, %v175
    %vm1032 = vcmp.le.f32.partialorder %v1031, 0.7853982
    %vm1033 = vcmp.lt.s32.totalorder %v175, 0
    %v1034 = vand.u32 %v175, 2139095040
    %v1035 = vshrl.u32 %v1034, 23
    %v1036 = vsub.s32 %v1035, 127
    %v1037 = vand.u32 2147483647, %v175
    %v1038 = vand.u32 %v1037, 8388607
    %v1039 = vor.u32 %v1038, 8388608
    %v1040 = vsub.s32 0, %v1039
    %v1041 = vadd.s32 %v1036, 1
    %vm1042 = vcmp.gt.s32.totalorder %v1041, 0
    %v1043 = vsel %vm1042, %v1041, 0
    %v1044 = vshrl.u32 %v1043, 5
    %v1045 = vand.u32 %v1043, 31
    %v1046 = vsub.s32 32, %v1045
    %v1047 = vshrl.u32 683565275, %v1046
    %v1048 = vshll.u32 683565275, %v1045
    %v1049 = vshrl.u32 2475754826, %v1046
    %v1050 = vor.u32 %v1048, %v1049
    %v1051 = vshll.u32 2475754826, %v1045
    %v1052 = vshrl.u32 2131351028, %v1046
    %v1053 = vor.u32 %v1051, %v1052
    %v1054 = vshll.u32 2131351028, %v1045
    %v1055 = vshrl.u32 2102212464, %v1046
    %v1056 = vor.u32 %v1054, %v1055
    %v1057 = vshll.u32 2102212464, %v1045
    %v1058 = vshrl.u32 920167782, %v1046
    %v1059 = vor.u32 %v1057, %v1058
    %v1060 = vshll.u32 920167782, %v1045
    %v1061 = vshrl.u32 1326507024, %v1046
    %v1062 = vor.u32 %v1060, %v1061
    %vm1063 = vcmp.lt.s32.totalorder %v1044, 1
    %vm1064 = vcmp.lt.s32.totalorder %v1044, 2
    %vm1065 = vcmp.lt.s32.totalorder %v1044, 3
    %vm1066 = vcmp.lt.s32.totalorder %v1044, 4
    %v1067 = vsel %vm1063, %v1047, %v1050
    %v1068 = vsel %vm1066, %v1056, 2102212464
    %v1069 = vsel %vm1065, %v1053, %v1068
    %v1070 = vsel %vm1064, %v1067, %v1069
    %v1071 = vsel %vm1063, %v1050, %v1053
    %v1072 = vsel %vm1066, %v1059, 920167782
    %v1073 = vsel %vm1065, %v1056, %v1072
    %v1074 = vsel %vm1064, %v1071, %v1073
    %v1075 = vsel %vm1063, %v1053, %v1056
    %v1076 = vsel %vm1066, %v1062, 1326507024
    %v1077 = vsel %vm1065, %v1059, %v1076
    %v1078 = vsel %vm1064, %v1075, %v1077
    %v1079 = vshll.u32 %v1039, 8
    %v1080 = vmul.u32.u64.compose %v1079, %v1078
    %v1081 = vextract.low.u32 %v1080
    %v1082 = vextract.high.u32 %v1080
    %v1083 = vmul.u32.u64.compose %v1079, %v1074
    %v1084 = vextract.low.u32 %v1083
    %v1085 = vextract.high.u32 %v1083
    %v1086 = vmul.u32 %v1079, %v1070
    %v1087 = vadd.s32 %v1082, %v1084
    %vm1088 = vc.u32 %v1082, %v1084
    %v1089 = vadd.s32 %v1085, 1
    %v1090 = vsel %vm1088, %v1089, %v1085
    %v1091 = vadd.s32 %v1086, %v1090
    %v1092 = vadd.s32 %v1091, 536870912
    %v1093 = vshrl.u32 %v1092, 30
    %v1094 = vshll.u32 %v1093, 30
    %v1095 = vsub.s32 %v1091, %v1094
    %vm1096 = vcmp.lt.s32.totalorder %v1095, 0
    %v1097 = vsub.s32 0, %v1095
    %v1098 = vsel %vm1096, %v1097, %v1095
    %v1099 = vclz %v1098
    %v1100 = vsub.s32 %v1099, 2
    %vm1101 = vcmp.gt.s32.totalorder 0, %v1100
    %v1102 = vsel %vm1101, 0, %v1100
    %v1103 = vsub.s32 32, %v1102
    %v1104 = vshll.u32 %v1095, %v1102
    %v1105 = vshrl.u32 %v1087, %v1103
    %v1106 = vor.u32 %v1104, %v1105
    %v1107 = vsub.s32 4294967266, %v1102
    %v1108 = vadd.s32 %v1107, 127
    %v1109 = vshll.u32 %v1108, 23
    %v1110 = vor.u32 4788187, %v1109
    %v1111 = vand.u32 2147483647, %v1110
    %v1113 = vcvt.s32.f32 %v1106
    %v1114 = vmul.f32 %v1113, %v1111
    %v1115 = vxor.u32 %v1114, 2147483648
    %v1116 = vsel %vm1033, %v1115, %v1114
    %v1117 = vsub.s32 4, %v1093
    %v1118 = vsel %vm1033, %v1117, %v1093
    %v1119 = vsel %vm1032, %v175, %v1116
    %v1120 = vsel %vm1032, 0, %v1118
    %v1121 = vcosq.f32.pop %v1119
    %v1122 = vsinq.f32.pop %v1119
    %vm1123 = vweird.f32 %v175
    %v1124 = vadd.s32 %v1120, 3
    %v1125 = vand.u32 %v1124, 3
    %vm1126 = vcmp.lt.s32.totalorder %v1125, 2
    %vm1127 = vcmp.eq.s32.totalorder %v1125, 0
    %v1128 = vxor.u32 %v1122, 2147483648
    %v1129 = vsel %vm1127, %v1121, %v1128
    %vm1130 = vcmp.eq.s32.totalorder %v1125, 2
    %v1131 = vxor.u32 %v1121, 2147483648
    %v1132 = vsel %vm1130, %v1131, %v1122
    %v1133 = vsel %vm1126, %v1129, %v1132
    %v1134 = vsel %vm1123, nan, %v1133
    %v1135 = vand.u32 2147483647, %v176
    %vm1136 = vcmp.le.f32.partialorder %v1135, 0.7853982
    %vm1137 = vcmp.lt.s32.totalorder %v176, 0
    %v1138 = vand.u32 %v176, 2139095040
    %v1139 = vshrl.u32 %v1138, 23
    %v1140 = vsub.s32 %v1139, 127
    %v1141 = vand.u32 2147483647, %v176
    %v1142 = vand.u32 %v1141, 8388607
    %v1143 = vor.u32 %v1142, 8388608
    %v1144 = vsub.s32 0, %v1143
    %v1145 = vadd.s32 %v1140, 1
    %vm1146 = vcmp.gt.s32.totalorder %v1145, 0
    %v1147 = vsel %vm1146, %v1145, 0
    %v1148 = vshrl.u32 %v1147, 5
    %v1149 = vand.u32 %v1147, 31
    %v1150 = vsub.s32 32, %v1149
    %v1151 = vshrl.u32 683565275, %v1150
    %v1152 = vshll.u32 683565275, %v1149
    %v1153 = vshrl.u32 2475754826, %v1150
    %v1154 = vor.u32 %v1152, %v1153
    %v1155 = vshll.u32 2475754826, %v1149
    %v1156 = vshrl.u32 2131351028, %v1150
    %v1157 = vor.u32 %v1155, %v1156
    %v1158 = vshll.u32 2131351028, %v1149
    %v1159 = vshrl.u32 2102212464, %v1150
    %v1160 = vor.u32 %v1158, %v1159
    %v1161 = vshll.u32 2102212464, %v1149
    %v1162 = vshrl.u32 920167782, %v1150
    %v1163 = vor.u32 %v1161, %v1162
    %v1164 = vshll.u32 920167782, %v1149
    %v1165 = vshrl.u32 1326507024, %v1150
    %v1166 = vor.u32 %v1164, %v1165
    %vm1167 = vcmp.lt.s32.totalorder %v1148, 1
    %vm1168 = vcmp.lt.s32.totalorder %v1148, 2
    %vm1169 = vcmp.lt.s32.totalorder %v1148, 3
    %vm1170 = vcmp.lt.s32.totalorder %v1148, 4
    %v1171 = vsel %vm1167, %v1151, %v1154
    %v1172 = vsel %vm1170, %v1160, 2102212464
    %v1173 = vsel %vm1169, %v1157, %v1172
    %v1174 = vsel %vm1168, %v1171, %v1173
    %v1175 = vsel %vm1167, %v1154, %v1157
    %v1176 = vsel %vm1170, %v1163, 920167782
    %v1177 = vsel %vm1169, %v1160, %v1176
    %v1178 = vsel %vm1168, %v1175, %v1177
    %v1179 = vsel %vm1167, %v1157, %v1160
    %v1180 = vsel %vm1170, %v1166, 1326507024
    %v1181 = vsel %vm1169, %v1163, %v1180
    %v1182 = vsel %vm1168, %v1179, %v1181
    %v1183 = vshll.u32 %v1143, 8
    %v1184 = vmul.u32.u64.compose %v1183, %v1182
    %v1185 = vextract.low.u32 %v1184
    %v1186 = vextract.high.u32 %v1184
    %v1187 = vmul.u32.u64.compose %v1183, %v1178
    %v1188 = vextract.low.u32 %v1187
    %v1189 = vextract.high.u32 %v1187
    %v1190 = vmul.u32 %v1183, %v1174
    %v1191 = vadd.s32 %v1186, %v1188
    %vm1192 = vc.u32 %v1186, %v1188
    %v1193 = vadd.s32 %v1189, 1
    %v1194 = vsel %vm1192, %v1193, %v1189
    %v1195 = vadd.s32 %v1190, %v1194
    %v1196 = vadd.s32 %v1195, 536870912
    %v1197 = vshrl.u32 %v1196, 30
    %v1198 = vshll.u32 %v1197, 30
    %v1199 = vsub.s32 %v1195, %v1198
    %vm1200 = vcmp.lt.s32.totalorder %v1199, 0
    %v1201 = vsub.s32 0, %v1199
    %v1202 = vsel %vm1200, %v1201, %v1199
    %v1203 = vclz %v1202
    %v1204 = vsub.s32 %v1203, 2
    %vm1205 = vcmp.gt.s32.totalorder 0, %v1204
    %v1206 = vsel %vm1205, 0, %v1204
    %v1207 = vsub.s32 32, %v1206
    %v1208 = vshll.u32 %v1199, %v1206
    %v1209 = vshrl.u32 %v1191, %v1207
    %v1210 = vor.u32 %v1208, %v1209
    %v1211 = vsub.s32 4294967266, %v1206
    %v1212 = vadd.s32 %v1211, 127
    %v1213 = vshll.u32 %v1212, 23
    %v1214 = vor.u32 4788187, %v1213
    %v1215 = vand.u32 2147483647, %v1214
    %v1217 = vcvt.s32.f32 %v1210
    %v1218 = vmul.f32 %v1217, %v1215
    %v1219 = vxor.u32 %v1218, 2147483648
    %v1220 = vsel %vm1137, %v1219, %v1218
    %v1221 = vsub.s32 4, %v1197
    %v1222 = vsel %vm1137, %v1221, %v1197
    %v1223 = vsel %vm1136, %v176, %v1220
    %v1224 = vsel %vm1136, 0, %v1222
    %v1225 = vcosq.f32.pop %v1223
    %v1226 = vsinq.f32.pop %v1223
    %vm1227 = vweird.f32 %v176
    %v1228 = vadd.s32 %v1224, 3
    %v1229 = vand.u32 %v1228, 3
    %vm1230 = vcmp.lt.s32.totalorder %v1229, 2
    %vm1231 = vcmp.eq.s32.totalorder %v1229, 0
    %v1232 = vxor.u32 %v1226, 2147483648
    %v1233 = vsel %vm1231, %v1225, %v1232
    %vm1234 = vcmp.eq.s32.totalorder %v1229, 2
    %v1235 = vxor.u32 %v1225, 2147483648
    %v1236 = vsel %vm1234, %v1235, %v1226
    %v1237 = vsel %vm1230, %v1233, %v1236
    %v1238 = vsel %vm1227, nan, %v1237
    %v1239 = vand.u32 2147483647, %v177
    %vm1240 = vcmp.le.f32.partialorder %v1239, 0.7853982
    %vm1241 = vcmp.lt.s32.totalorder %v177, 0
    %v1242 = vand.u32 %v177, 2139095040
    %v1243 = vshrl.u32 %v1242, 23
    %v1244 = vsub.s32 %v1243, 127
    %v1245 = vand.u32 2147483647, %v177
    %v1246 = vand.u32 %v1245, 8388607
    %v1247 = vor.u32 %v1246, 8388608
    %v1248 = vsub.s32 0, %v1247
    %v1249 = vadd.s32 %v1244, 1
    %vm1250 = vcmp.gt.s32.totalorder %v1249, 0
    %v1251 = vsel %vm1250, %v1249, 0
    %v1252 = vshrl.u32 %v1251, 5
    %v1253 = vand.u32 %v1251, 31
    %v1254 = vsub.s32 32, %v1253
    %v1255 = vshrl.u32 683565275, %v1254
    %v1256 = vshll.u32 683565275, %v1253
    %v1257 = vshrl.u32 2475754826, %v1254
    %v1258 = vor.u32 %v1256, %v1257
    %v1259 = vshll.u32 2475754826, %v1253
    %v1260 = vshrl.u32 2131351028, %v1254
    %v1261 = vor.u32 %v1259, %v1260
    %v1262 = vshll.u32 2131351028, %v1253
    %v1263 = vshrl.u32 2102212464, %v1254
    %v1264 = vor.u32 %v1262, %v1263
    %v1265 = vshll.u32 2102212464, %v1253
    %v1266 = vshrl.u32 920167782, %v1254
    %v1267 = vor.u32 %v1265, %v1266
    %v1268 = vshll.u32 920167782, %v1253
    %v1269 = vshrl.u32 1326507024, %v1254
    %v1270 = vor.u32 %v1268, %v1269
    %vm1271 = vcmp.lt.s32.totalorder %v1252, 1
    %vm1272 = vcmp.lt.s32.totalorder %v1252, 2
    %vm1273 = vcmp.lt.s32.totalorder %v1252, 3
    %vm1274 = vcmp.lt.s32.totalorder %v1252, 4
    %v1275 = vsel %vm1271, %v1255, %v1258
    %v1276 = vsel %vm1274, %v1264, 2102212464
    %v1277 = vsel %vm1273, %v1261, %v1276
    %v1278 = vsel %vm1272, %v1275, %v1277
    %v1279 = vsel %vm1271, %v1258, %v1261
    %v1280 = vsel %vm1274, %v1267, 920167782
    %v1281 = vsel %vm1273, %v1264, %v1280
    %v1282 = vsel %vm1272, %v1279, %v1281
    %v1283 = vsel %vm1271, %v1261, %v1264
    %v1284 = vsel %vm1274, %v1270, 1326507024
    %v1285 = vsel %vm1273, %v1267, %v1284
    %v1286 = vsel %vm1272, %v1283, %v1285
    %v1287 = vshll.u32 %v1247, 8
    %v1288 = vmul.u32.u64.compose %v1287, %v1286
    %v1289 = vextract.low.u32 %v1288
    %v1290 = vextract.high.u32 %v1288
    %v1291 = vmul.u32.u64.compose %v1287, %v1282
    %v1292 = vextract.low.u32 %v1291
    %v1293 = vextract.high.u32 %v1291
    %v1294 = vmul.u32 %v1287, %v1278
    %v1295 = vadd.s32 %v1290, %v1292
    %vm1296 = vc.u32 %v1290, %v1292
    %v1297 = vadd.s32 %v1293, 1
    %v1298 = vsel %vm1296, %v1297, %v1293
    %v1299 = vadd.s32 %v1294, %v1298
    %v1300 = vadd.s32 %v1299, 536870912
    %v1301 = vshrl.u32 %v1300, 30
    %v1302 = vshll.u32 %v1301, 30
    %v1303 = vsub.s32 %v1299, %v1302
    %vm1304 = vcmp.lt.s32.totalorder %v1303, 0
    %v1305 = vsub.s32 0, %v1303
    %v1306 = vsel %vm1304, %v1305, %v1303
    %v1307 = vclz %v1306
    %v1308 = vsub.s32 %v1307, 2
    %vm1309 = vcmp.gt.s32.totalorder 0, %v1308
    %v1310 = vsel %vm1309, 0, %v1308
    %v1311 = vsub.s32 32, %v1310
    %v1312 = vshll.u32 %v1303, %v1310
    %v1313 = vshrl.u32 %v1295, %v1311
    %v1314 = vor.u32 %v1312, %v1313
    %v1315 = vsub.s32 4294967266, %v1310
    %v1316 = vadd.s32 %v1315, 127
    %v1317 = vshll.u32 %v1316, 23
    %v1318 = vor.u32 4788187, %v1317
    %v1319 = vand.u32 2147483647, %v1318
    %v1321 = vcvt.s32.f32 %v1314
    %v1322 = vmul.f32 %v1321, %v1319
    %v1323 = vxor.u32 %v1322, 2147483648
    %v1324 = vsel %vm1241, %v1323, %v1322
    %v1325 = vsub.s32 4, %v1301
    %v1326 = vsel %vm1241, %v1325, %v1301
    %v1327 = vsel %vm1240, %v177, %v1324
    %v1328 = vsel %vm1240, 0, %v1326
    %v1329 = vcosq.f32.pop %v1327
    %v1330 = vsinq.f32.pop %v1327
    %vm1331 = vweird.f32 %v177
    %v1332 = vadd.s32 %v1328, 3
    %v1333 = vand.u32 %v1332, 3
    %vm1334 = vcmp.lt.s32.totalorder %v1333, 2
    %vm1335 = vcmp.eq.s32.totalorder %v1333, 0
    %v1336 = vxor.u32 %v1330, 2147483648
    %v1337 = vsel %vm1335, %v1329, %v1336
    %vm1338 = vcmp.eq.s32.totalorder %v1333, 2
    %v1339 = vxor.u32 %v1329, 2147483648
    %v1340 = vsel %vm1338, %v1339, %v1330
    %v1341 = vsel %vm1334, %v1337, %v1340
    %v1342 = vsel %vm1331, nan, %v1341
    %v1343 = vand.u32 2147483647, %v178
    %vm1344 = vcmp.le.f32.partialorder %v1343, 0.7853982
    %vm1345 = vcmp.lt.s32.totalorder %v178, 0
    %v1346 = vand.u32 %v178, 2139095040
    %v1347 = vshrl.u32 %v1346, 23
    %v1348 = vsub.s32 %v1347, 127
    %v1349 = vand.u32 2147483647, %v178
    %v1350 = vand.u32 %v1349, 8388607
    %v1351 = vor.u32 %v1350, 8388608
    %v1352 = vsub.s32 0, %v1351
    %v1353 = vadd.s32 %v1348, 1
    %vm1354 = vcmp.gt.s32.totalorder %v1353, 0
    %v1355 = vsel %vm1354, %v1353, 0
    %v1356 = vshrl.u32 %v1355, 5
    %v1357 = vand.u32 %v1355, 31
    %v1358 = vsub.s32 32, %v1357
    %v1359 = vshrl.u32 683565275, %v1358
    %v1360 = vshll.u32 683565275, %v1357
    %v1361 = vshrl.u32 2475754826, %v1358
    %v1362 = vor.u32 %v1360, %v1361
    %v1363 = vshll.u32 2475754826, %v1357
    %v1364 = vshrl.u32 2131351028, %v1358
    %v1365 = vor.u32 %v1363, %v1364
    %v1366 = vshll.u32 2131351028, %v1357
    %v1367 = vshrl.u32 2102212464, %v1358
    %v1368 = vor.u32 %v1366, %v1367
    %v1369 = vshll.u32 2102212464, %v1357
    %v1370 = vshrl.u32 920167782, %v1358
    %v1371 = vor.u32 %v1369, %v1370
    %v1372 = vshll.u32 920167782, %v1357
    %v1373 = vshrl.u32 1326507024, %v1358
    %v1374 = vor.u32 %v1372, %v1373
    %vm1375 = vcmp.lt.s32.totalorder %v1356, 1
    %vm1376 = vcmp.lt.s32.totalorder %v1356, 2
    %vm1377 = vcmp.lt.s32.totalorder %v1356, 3
    %vm1378 = vcmp.lt.s32.totalorder %v1356, 4
    %v1379 = vsel %vm1375, %v1359, %v1362
    %v1380 = vsel %vm1378, %v1368, 2102212464
    %v1381 = vsel %vm1377, %v1365, %v1380
    %v1382 = vsel %vm1376, %v1379, %v1381
    %v1383 = vsel %vm1375, %v1362, %v1365
    %v1384 = vsel %vm1378, %v1371, 920167782
    %v1385 = vsel %vm1377, %v1368, %v1384
    %v1386 = vsel %vm1376, %v1383, %v1385
    %v1387 = vsel %vm1375, %v1365, %v1368
    %v1388 = vsel %vm1378, %v1374, 1326507024
    %v1389 = vsel %vm1377, %v1371, %v1388
    %v1390 = vsel %vm1376, %v1387, %v1389
    %v1391 = vshll.u32 %v1351, 8
    %v1392 = vmul.u32.u64.compose %v1391, %v1390
    %v1393 = vextract.low.u32 %v1392
    %v1394 = vextract.high.u32 %v1392
    %v1395 = vmul.u32.u64.compose %v1391, %v1386
    %v1396 = vextract.low.u32 %v1395
    %v1397 = vextract.high.u32 %v1395
    %v1398 = vmul.u32 %v1391, %v1382
    %v1399 = vadd.s32 %v1394, %v1396
    %vm1400 = vc.u32 %v1394, %v1396
    %v1401 = vadd.s32 %v1397, 1
    %v1402 = vsel %vm1400, %v1401, %v1397
    %v1403 = vadd.s32 %v1398, %v1402
    %v1404 = vadd.s32 %v1403, 536870912
    %v1405 = vshrl.u32 %v1404, 30
    %v1406 = vshll.u32 %v1405, 30
    %v1407 = vsub.s32 %v1403, %v1406
    %vm1408 = vcmp.lt.s32.totalorder %v1407, 0
    %v1409 = vsub.s32 0, %v1407
    %v1410 = vsel %vm1408, %v1409, %v1407
    %v1411 = vclz %v1410
    %v1412 = vsub.s32 %v1411, 2
    %vm1413 = vcmp.gt.s32.totalorder 0, %v1412
    %v1414 = vsel %vm1413, 0, %v1412
    %v1415 = vsub.s32 32, %v1414
    %v1416 = vshll.u32 %v1407, %v1414
    %v1417 = vshrl.u32 %v1399, %v1415
    %v1418 = vor.u32 %v1416, %v1417
    %v1419 = vsub.s32 4294967266, %v1414
    %v1420 = vadd.s32 %v1419, 127
    %v1421 = vshll.u32 %v1420, 23
    %v1422 = vor.u32 4788187, %v1421
    %v1423 = vand.u32 2147483647, %v1422
    %v1425 = vcvt.s32.f32 %v1418
    %v1426 = vmul.f32 %v1425, %v1423
    %v1427 = vxor.u32 %v1426, 2147483648
    %v1428 = vsel %vm1345, %v1427, %v1426
    %v1429 = vsub.s32 4, %v1405
    %v1430 = vsel %vm1345, %v1429, %v1405
    %v1431 = vsel %vm1344, %v178, %v1428
    %v1432 = vsel %vm1344, 0, %v1430
    %v1433 = vcosq.f32.pop %v1431
    %v1434 = vsinq.f32.pop %v1431
    %vm1435 = vweird.f32 %v178
    %v1436 = vadd.s32 %v1432, 3
    %v1437 = vand.u32 %v1436, 3
    %vm1438 = vcmp.lt.s32.totalorder %v1437, 2
    %vm1439 = vcmp.eq.s32.totalorder %v1437, 0
    %v1440 = vxor.u32 %v1434, 2147483648
    %v1441 = vsel %vm1439, %v1433, %v1440
    %vm1442 = vcmp.eq.s32.totalorder %v1437, 2
    %v1443 = vxor.u32 %v1433, 2147483648
    %v1444 = vsel %vm1442, %v1443, %v1434
    %v1445 = vsel %vm1438, %v1441, %v1444
    %v1446 = vsel %vm1435, nan, %v1445
    %v1447 = vand.u32 2147483647, %v179
    %vm1448 = vcmp.le.f32.partialorder %v1447, 0.7853982
    %vm1449 = vcmp.lt.s32.totalorder %v179, 0
    %v1450 = vand.u32 %v179, 2139095040
    %v1451 = vshrl.u32 %v1450, 23
    %v1452 = vsub.s32 %v1451, 127
    %v1453 = vand.u32 2147483647, %v179
    %v1454 = vand.u32 %v1453, 8388607
    %v1455 = vor.u32 %v1454, 8388608
    %v1456 = vsub.s32 0, %v1455
    %v1457 = vadd.s32 %v1452, 1
    %vm1458 = vcmp.gt.s32.totalorder %v1457, 0
    %v1459 = vsel %vm1458, %v1457, 0
    %v1460 = vshrl.u32 %v1459, 5
    %v1461 = vand.u32 %v1459, 31
    %v1462 = vsub.s32 32, %v1461
    %v1463 = vshrl.u32 683565275, %v1462
    %v1464 = vshll.u32 683565275, %v1461
    %v1465 = vshrl.u32 2475754826, %v1462
    %v1466 = vor.u32 %v1464, %v1465
    %v1467 = vshll.u32 2475754826, %v1461
    %v1468 = vshrl.u32 2131351028, %v1462
    %v1469 = vor.u32 %v1467, %v1468
    %v1470 = vshll.u32 2131351028, %v1461
    %v1471 = vshrl.u32 2102212464, %v1462
    %v1472 = vor.u32 %v1470, %v1471
    %v1473 = vshll.u32 2102212464, %v1461
    %v1474 = vshrl.u32 920167782, %v1462
    %v1475 = vor.u32 %v1473, %v1474
    %v1476 = vshll.u32 920167782, %v1461
    %v1477 = vshrl.u32 1326507024, %v1462
    %v1478 = vor.u32 %v1476, %v1477
    %vm1479 = vcmp.lt.s32.totalorder %v1460, 1
    %vm1480 = vcmp.lt.s32.totalorder %v1460, 2
    %vm1481 = vcmp.lt.s32.totalorder %v1460, 3
    %vm1482 = vcmp.lt.s32.totalorder %v1460, 4
    %v1483 = vsel %vm1479, %v1463, %v1466
    %v1484 = vsel %vm1482, %v1472, 2102212464
    %v1485 = vsel %vm1481, %v1469, %v1484
    %v1486 = vsel %vm1480, %v1483, %v1485
    %v1487 = vsel %vm1479, %v1466, %v1469
    %v1488 = vsel %vm1482, %v1475, 920167782
    %v1489 = vsel %vm1481, %v1472, %v1488
    %v1490 = vsel %vm1480, %v1487, %v1489
    %v1491 = vsel %vm1479, %v1469, %v1472
    %v1492 = vsel %vm1482, %v1478, 1326507024
    %v1493 = vsel %vm1481, %v1475, %v1492
    %v1494 = vsel %vm1480, %v1491, %v1493
    %v1495 = vshll.u32 %v1455, 8
    %v1496 = vmul.u32.u64.compose %v1495, %v1494
    %v1497 = vextract.low.u32 %v1496
    %v1498 = vextract.high.u32 %v1496
    %v1499 = vmul.u32.u64.compose %v1495, %v1490
    %v1500 = vextract.low.u32 %v1499
    %v1501 = vextract.high.u32 %v1499
    %v1502 = vmul.u32 %v1495, %v1486
    %v1503 = vadd.s32 %v1498, %v1500
    %vm1504 = vc.u32 %v1498, %v1500
    %v1505 = vadd.s32 %v1501, 1
    %v1506 = vsel %vm1504, %v1505, %v1501
    %v1507 = vadd.s32 %v1502, %v1506
    %v1508 = vadd.s32 %v1507, 536870912
    %v1509 = vshrl.u32 %v1508, 30
    %v1510 = vshll.u32 %v1509, 30
    %v1511 = vsub.s32 %v1507, %v1510
    %vm1512 = vcmp.lt.s32.totalorder %v1511, 0
    %v1513 = vsub.s32 0, %v1511
    %v1514 = vsel %vm1512, %v1513, %v1511
    %v1515 = vclz %v1514
    %v1516 = vsub.s32 %v1515, 2
    %vm1517 = vcmp.gt.s32.totalorder 0, %v1516
    %v1518 = vsel %vm1517, 0, %v1516
    %v1519 = vsub.s32 32, %v1518
    %v1520 = vshll.u32 %v1511, %v1518
    %v1521 = vshrl.u32 %v1503, %v1519
    %v1522 = vor.u32 %v1520, %v1521
    %v1523 = vsub.s32 4294967266, %v1518
    %v1524 = vadd.s32 %v1523, 127
    %v1525 = vshll.u32 %v1524, 23
    %v1526 = vor.u32 4788187, %v1525
    %v1527 = vand.u32 2147483647, %v1526
    %v1529 = vcvt.s32.f32 %v1522
    %v1530 = vmul.f32 %v1529, %v1527
    %v1531 = vxor.u32 %v1530, 2147483648
    %v1532 = vsel %vm1449, %v1531, %v1530
    %v1533 = vsub.s32 4, %v1509
    %v1534 = vsel %vm1449, %v1533, %v1509
    %v1535 = vsel %vm1448, %v179, %v1532
    %v1536 = vsel %vm1448, 0, %v1534
    %v1537 = vcosq.f32.pop %v1535
    %v1538 = vsinq.f32.pop %v1535
    %vm1539 = vweird.f32 %v179
    %v1540 = vadd.s32 %v1536, 3
    %v1541 = vand.u32 %v1540, 3
    %vm1542 = vcmp.lt.s32.totalorder %v1541, 2
    %vm1543 = vcmp.eq.s32.totalorder %v1541, 0
    %v1544 = vxor.u32 %v1538, 2147483648
    %v1545 = vsel %vm1543, %v1537, %v1544
    %vm1546 = vcmp.eq.s32.totalorder %v1541, 2
    %v1547 = vxor.u32 %v1537, 2147483648
    %v1548 = vsel %vm1546, %v1547, %v1538
    %v1549 = vsel %vm1542, %v1545, %v1548
    %v1550 = vsel %vm1539, nan, %v1549
    %v1551 = vand.u32 2147483647, %v180
    %vm1552 = vcmp.le.f32.partialorder %v1551, 0.7853982
    %vm1553 = vcmp.lt.s32.totalorder %v180, 0
    %v1554 = vand.u32 %v180, 2139095040
    %v1555 = vshrl.u32 %v1554, 23
    %v1556 = vsub.s32 %v1555, 127
    %v1557 = vand.u32 2147483647, %v180
    %v1558 = vand.u32 %v1557, 8388607
    %v1559 = vor.u32 %v1558, 8388608
    %v1560 = vsub.s32 0, %v1559
    %v1561 = vadd.s32 %v1556, 1
    %vm1562 = vcmp.gt.s32.totalorder %v1561, 0
    %v1563 = vsel %vm1562, %v1561, 0
    %v1564 = vshrl.u32 %v1563, 5
    %v1565 = vand.u32 %v1563, 31
    %v1566 = vsub.s32 32, %v1565
    %v1567 = vshrl.u32 683565275, %v1566
    %v1568 = vshll.u32 683565275, %v1565
    %v1569 = vshrl.u32 2475754826, %v1566
    %v1570 = vor.u32 %v1568, %v1569
    %v1571 = vshll.u32 2475754826, %v1565
    %v1572 = vshrl.u32 2131351028, %v1566
    %v1573 = vor.u32 %v1571, %v1572
    %v1574 = vshll.u32 2131351028, %v1565
    %v1575 = vshrl.u32 2102212464, %v1566
    %v1576 = vor.u32 %v1574, %v1575
    %v1577 = vshll.u32 2102212464, %v1565
    %v1578 = vshrl.u32 920167782, %v1566
    %v1579 = vor.u32 %v1577, %v1578
    %v1580 = vshll.u32 920167782, %v1565
    %v1581 = vshrl.u32 1326507024, %v1566
    %v1582 = vor.u32 %v1580, %v1581
    %vm1583 = vcmp.lt.s32.totalorder %v1564, 1
    %vm1584 = vcmp.lt.s32.totalorder %v1564, 2
    %vm1585 = vcmp.lt.s32.totalorder %v1564, 3
    %vm1586 = vcmp.lt.s32.totalorder %v1564, 4
    %v1587 = vsel %vm1583, %v1567, %v1570
    %v1588 = vsel %vm1586, %v1576, 2102212464
    %v1589 = vsel %vm1585, %v1573, %v1588
    %v1590 = vsel %vm1584, %v1587, %v1589
    %v1591 = vsel %vm1583, %v1570, %v1573
    %v1592 = vsel %vm1586, %v1579, 920167782
    %v1593 = vsel %vm1585, %v1576, %v1592
    %v1594 = vsel %vm1584, %v1591, %v1593
    %v1595 = vsel %vm1583, %v1573, %v1576
    %v1596 = vsel %vm1586, %v1582, 1326507024
    %v1597 = vsel %vm1585, %v1579, %v1596
    %v1598 = vsel %vm1584, %v1595, %v1597
    %v1599 = vshll.u32 %v1559, 8
    %v1600 = vmul.u32.u64.compose %v1599, %v1598
    %v1601 = vextract.low.u32 %v1600
    %v1602 = vextract.high.u32 %v1600
    %v1603 = vmul.u32.u64.compose %v1599, %v1594
    %v1604 = vextract.low.u32 %v1603
    %v1605 = vextract.high.u32 %v1603
    %v1606 = vmul.u32 %v1599, %v1590
    %v1607 = vadd.s32 %v1602, %v1604
    %vm1608 = vc.u32 %v1602, %v1604
    %v1609 = vadd.s32 %v1605, 1
    %v1610 = vsel %vm1608, %v1609, %v1605
    %v1611 = vadd.s32 %v1606, %v1610
    %v1612 = vadd.s32 %v1611, 536870912
    %v1613 = vshrl.u32 %v1612, 30
    %v1614 = vshll.u32 %v1613, 30
    %v1615 = vsub.s32 %v1611, %v1614
    %vm1616 = vcmp.lt.s32.totalorder %v1615, 0
    %v1617 = vsub.s32 0, %v1615
    %v1618 = vsel %vm1616, %v1617, %v1615
    %v1619 = vclz %v1618
    %v1620 = vsub.s32 %v1619, 2
    %vm1621 = vcmp.gt.s32.totalorder 0, %v1620
    %v1622 = vsel %vm1621, 0, %v1620
    %v1623 = vsub.s32 32, %v1622
    %v1624 = vshll.u32 %v1615, %v1622
    %v1625 = vshrl.u32 %v1607, %v1623
    %v1626 = vor.u32 %v1624, %v1625
    %v1627 = vsub.s32 4294967266, %v1622
    %v1628 = vadd.s32 %v1627, 127
    %v1629 = vshll.u32 %v1628, 23
    %v1630 = vor.u32 4788187, %v1629
    %v1631 = vand.u32 2147483647, %v1630
    %v1633 = vcvt.s32.f32 %v1626
    %v1634 = vmul.f32 %v1633, %v1631
    %v1635 = vxor.u32 %v1634, 2147483648
    %v1636 = vsel %vm1553, %v1635, %v1634
    %v1637 = vsub.s32 4, %v1613
    %v1638 = vsel %vm1553, %v1637, %v1613
    %v1639 = vsel %vm1552, %v180, %v1636
    %v1640 = vsel %vm1552, 0, %v1638
    %v1641 = vcosq.f32.pop %v1639
    %v1642 = vsinq.f32.pop %v1639
    %vm1643 = vweird.f32 %v180
    %v1644 = vadd.s32 %v1640, 3
    %v1645 = vand.u32 %v1644, 3
    %vm1646 = vcmp.lt.s32.totalorder %v1645, 2
    %vm1647 = vcmp.eq.s32.totalorder %v1645, 0
    %v1648 = vxor.u32 %v1642, 2147483648
    %v1649 = vsel %vm1647, %v1641, %v1648
    %vm1650 = vcmp.eq.s32.totalorder %v1645, 2
    %v1651 = vxor.u32 %v1641, 2147483648
    %v1652 = vsel %vm1650, %v1651, %v1642
    %v1653 = vsel %vm1646, %v1649, %v1652
    %v1654 = vsel %vm1643, nan, %v1653
    %v1655 = vand.u32 2147483647, %v181
    %vm1656 = vcmp.le.f32.partialorder %v1655, 0.7853982
    %vm1657 = vcmp.lt.s32.totalorder %v181, 0
    %v1658 = vand.u32 %v181, 2139095040
    %v1659 = vshrl.u32 %v1658, 23
    %v1660 = vsub.s32 %v1659, 127
    %v1661 = vand.u32 2147483647, %v181
    %v1662 = vand.u32 %v1661, 8388607
    %v1663 = vor.u32 %v1662, 8388608
    %v1664 = vsub.s32 0, %v1663
    %v1665 = vadd.s32 %v1660, 1
    %vm1666 = vcmp.gt.s32.totalorder %v1665, 0
    %v1667 = vsel %vm1666, %v1665, 0
    %v1668 = vshrl.u32 %v1667, 5
    %v1669 = vand.u32 %v1667, 31
    %v1670 = vsub.s32 32, %v1669
    %v1671 = vshrl.u32 683565275, %v1670
    %v1672 = vshll.u32 683565275, %v1669
    %v1673 = vshrl.u32 2475754826, %v1670
    %v1674 = vor.u32 %v1672, %v1673
    %v1675 = vshll.u32 2475754826, %v1669
    %v1676 = vshrl.u32 2131351028, %v1670
    %v1677 = vor.u32 %v1675, %v1676
    %v1678 = vshll.u32 2131351028, %v1669
    %v1679 = vshrl.u32 2102212464, %v1670
    %v1680 = vor.u32 %v1678, %v1679
    %v1681 = vshll.u32 2102212464, %v1669
    %v1682 = vshrl.u32 920167782, %v1670
    %v1683 = vor.u32 %v1681, %v1682
    %v1684 = vshll.u32 920167782, %v1669
    %v1685 = vshrl.u32 1326507024, %v1670
    %v1686 = vor.u32 %v1684, %v1685
    %vm1687 = vcmp.lt.s32.totalorder %v1668, 1
    %vm1688 = vcmp.lt.s32.totalorder %v1668, 2
    %vm1689 = vcmp.lt.s32.totalorder %v1668, 3
    %vm1690 = vcmp.lt.s32.totalorder %v1668, 4
    %v1691 = vsel %vm1687, %v1671, %v1674
    %v1692 = vsel %vm1690, %v1680, 2102212464
    %v1693 = vsel %vm1689, %v1677, %v1692
    %v1694 = vsel %vm1688, %v1691, %v1693
    %v1695 = vsel %vm1687, %v1674, %v1677
    %v1696 = vsel %vm1690, %v1683, 920167782
    %v1697 = vsel %vm1689, %v1680, %v1696
    %v1698 = vsel %vm1688, %v1695, %v1697
    %v1699 = vsel %vm1687, %v1677, %v1680
    %v1700 = vsel %vm1690, %v1686, 1326507024
    %v1701 = vsel %vm1689, %v1683, %v1700
    %v1702 = vsel %vm1688, %v1699, %v1701
    %v1703 = vshll.u32 %v1663, 8
    %v1704 = vmul.u32.u64.compose %v1703, %v1702
    %v1705 = vextract.low.u32 %v1704
    %v1706 = vextract.high.u32 %v1704
    %v1707 = vmul.u32.u64.compose %v1703, %v1698
    %v1708 = vextract.low.u32 %v1707
    %v1709 = vextract.high.u32 %v1707
    %v1710 = vmul.u32 %v1703, %v1694
    %v1711 = vadd.s32 %v1706, %v1708
    %vm1712 = vc.u32 %v1706, %v1708
    %v1713 = vadd.s32 %v1709, 1
    %v1714 = vsel %vm1712, %v1713, %v1709
    %v1715 = vadd.s32 %v1710, %v1714
    %v1716 = vadd.s32 %v1715, 536870912
    %v1717 = vshrl.u32 %v1716, 30
    %v1718 = vshll.u32 %v1717, 30
    %v1719 = vsub.s32 %v1715, %v1718
    %vm1720 = vcmp.lt.s32.totalorder %v1719, 0
    %v1721 = vsub.s32 0, %v1719
    %v1722 = vsel %vm1720, %v1721, %v1719
    %v1723 = vclz %v1722
    %v1724 = vsub.s32 %v1723, 2
    %vm1725 = vcmp.gt.s32.totalorder 0, %v1724
    %v1726 = vsel %vm1725, 0, %v1724
    %v1727 = vsub.s32 32, %v1726
    %v1728 = vshll.u32 %v1719, %v1726
    %v1729 = vshrl.u32 %v1711, %v1727
    %v1730 = vor.u32 %v1728, %v1729
    %v1731 = vsub.s32 4294967266, %v1726
    %v1732 = vadd.s32 %v1731, 127
    %v1733 = vshll.u32 %v1732, 23
    %v1734 = vor.u32 4788187, %v1733
    %v1735 = vand.u32 2147483647, %v1734
    %v1737 = vcvt.s32.f32 %v1730
    %v1738 = vmul.f32 %v1737, %v1735
    %v1739 = vxor.u32 %v1738, 2147483648
    %v1740 = vsel %vm1657, %v1739, %v1738
    %v1741 = vsub.s32 4, %v1717
    %v1742 = vsel %vm1657, %v1741, %v1717
    %v1743 = vsel %vm1656, %v181, %v1740
    %v1744 = vsel %vm1656, 0, %v1742
    %v1745 = vcosq.f32.pop %v1743
    %v1746 = vsinq.f32.pop %v1743
    %vm1747 = vweird.f32 %v181
    %v1748 = vadd.s32 %v1744, 3
    %v1749 = vand.u32 %v1748, 3
    %vm1750 = vcmp.lt.s32.totalorder %v1749, 2
    %vm1751 = vcmp.eq.s32.totalorder %v1749, 0
    %v1752 = vxor.u32 %v1746, 2147483648
    %v1753 = vsel %vm1751, %v1745, %v1752
    %vm1754 = vcmp.eq.s32.totalorder %v1749, 2
    %v1755 = vxor.u32 %v1745, 2147483648
    %v1756 = vsel %vm1754, %v1755, %v1746
    %v1757 = vsel %vm1750, %v1753, %v1756
    %v1758 = vsel %vm1747, nan, %v1757
    %v1759 = vand.u32 2147483647, %v182
    %vm1760 = vcmp.le.f32.partialorder %v1759, 0.7853982
    %vm1761 = vcmp.lt.s32.totalorder %v182, 0
    %v1762 = vand.u32 %v182, 2139095040
    %v1763 = vshrl.u32 %v1762, 23
    %v1764 = vsub.s32 %v1763, 127
    %v1765 = vand.u32 2147483647, %v182
    %v1766 = vand.u32 %v1765, 8388607
    %v1767 = vor.u32 %v1766, 8388608
    %v1768 = vsub.s32 0, %v1767
    %v1769 = vadd.s32 %v1764, 1
    %vm1770 = vcmp.gt.s32.totalorder %v1769, 0
    %v1771 = vsel %vm1770, %v1769, 0
    %v1772 = vshrl.u32 %v1771, 5
    %v1773 = vand.u32 %v1771, 31
    %v1774 = vsub.s32 32, %v1773
    %v1775 = vshrl.u32 683565275, %v1774
    %v1776 = vshll.u32 683565275, %v1773
    %v1777 = vshrl.u32 2475754826, %v1774
    %v1778 = vor.u32 %v1776, %v1777
    %v1779 = vshll.u32 2475754826, %v1773
    %v1780 = vshrl.u32 2131351028, %v1774
    %v1781 = vor.u32 %v1779, %v1780
    %v1782 = vshll.u32 2131351028, %v1773
    %v1783 = vshrl.u32 2102212464, %v1774
    %v1784 = vor.u32 %v1782, %v1783
    %v1785 = vshll.u32 2102212464, %v1773
    %v1786 = vshrl.u32 920167782, %v1774
    %v1787 = vor.u32 %v1785, %v1786
    %v1788 = vshll.u32 920167782, %v1773
    %v1789 = vshrl.u32 1326507024, %v1774
    %v1790 = vor.u32 %v1788, %v1789
    %vm1791 = vcmp.lt.s32.totalorder %v1772, 1
    %vm1792 = vcmp.lt.s32.totalorder %v1772, 2
    %vm1793 = vcmp.lt.s32.totalorder %v1772, 3
    %vm1794 = vcmp.lt.s32.totalorder %v1772, 4
    %v1795 = vsel %vm1791, %v1775, %v1778
    %v1796 = vsel %vm1794, %v1784, 2102212464
    %v1797 = vsel %vm1793, %v1781, %v1796
    %v1798 = vsel %vm1792, %v1795, %v1797
    %v1799 = vsel %vm1791, %v1778, %v1781
    %v1800 = vsel %vm1794, %v1787, 920167782
    %v1801 = vsel %vm1793, %v1784, %v1800
    %v1802 = vsel %vm1792, %v1799, %v1801
    %v1803 = vsel %vm1791, %v1781, %v1784
    %v1804 = vsel %vm1794, %v1790, 1326507024
    %v1805 = vsel %vm1793, %v1787, %v1804
    %v1806 = vsel %vm1792, %v1803, %v1805
    %v1807 = vshll.u32 %v1767, 8
    %v1808 = vmul.u32.u64.compose %v1807, %v1806
    %v1809 = vextract.low.u32 %v1808
    %v1810 = vextract.high.u32 %v1808
    %v1811 = vmul.u32.u64.compose %v1807, %v1802
    %v1812 = vextract.low.u32 %v1811
    %v1813 = vextract.high.u32 %v1811
    %v1814 = vmul.u32 %v1807, %v1798
    %v1815 = vadd.s32 %v1810, %v1812
    %vm1816 = vc.u32 %v1810, %v1812
    %v1817 = vadd.s32 %v1813, 1
    %v1818 = vsel %vm1816, %v1817, %v1813
    %v1819 = vadd.s32 %v1814, %v1818
    %v1820 = vadd.s32 %v1819, 536870912
    %v1821 = vshrl.u32 %v1820, 30
    %v1822 = vshll.u32 %v1821, 30
    %v1823 = vsub.s32 %v1819, %v1822
    %vm1824 = vcmp.lt.s32.totalorder %v1823, 0
    %v1825 = vsub.s32 0, %v1823
    %v1826 = vsel %vm1824, %v1825, %v1823
    %v1827 = vclz %v1826
    %v1828 = vsub.s32 %v1827, 2
    %vm1829 = vcmp.gt.s32.totalorder 0, %v1828
    %v1830 = vsel %vm1829, 0, %v1828
    %v1831 = vsub.s32 32, %v1830
    %v1832 = vshll.u32 %v1823, %v1830
    %v1833 = vshrl.u32 %v1815, %v1831
    %v1834 = vor.u32 %v1832, %v1833
    %v1835 = vsub.s32 4294967266, %v1830
    %v1836 = vadd.s32 %v1835, 127
    %v1837 = vshll.u32 %v1836, 23
    %v1838 = vor.u32 4788187, %v1837
    %v1839 = vand.u32 2147483647, %v1838
    %v1841 = vcvt.s32.f32 %v1834
    %v1842 = vmul.f32 %v1841, %v1839
    %v1843 = vxor.u32 %v1842, 2147483648
    %v1844 = vsel %vm1761, %v1843, %v1842
    %v1845 = vsub.s32 4, %v1821
    %v1846 = vsel %vm1761, %v1845, %v1821
    %v1847 = vsel %vm1760, %v182, %v1844
    %v1848 = vsel %vm1760, 0, %v1846
    %v1849 = vcosq.f32.pop %v1847
    %v1850 = vsinq.f32.pop %v1847
    %vm1851 = vweird.f32 %v182
    %v1852 = vadd.s32 %v1848, 3
    %v1853 = vand.u32 %v1852, 3
    %vm1854 = vcmp.lt.s32.totalorder %v1853, 2
    %vm1855 = vcmp.eq.s32.totalorder %v1853, 0
    %v1856 = vxor.u32 %v1850, 2147483648
    %v1857 = vsel %vm1855, %v1849, %v1856
    %vm1858 = vcmp.eq.s32.totalorder %v1853, 2
    %v1859 = vxor.u32 %v1849, 2147483648
    %v1860 = vsel %vm1858, %v1859, %v1850
    %v1861 = vsel %vm1854, %v1857, %v1860
    %v1862 = vsel %vm1851, nan, %v1861
    %v1863 = vand.u32 2147483647, %v183
    %vm1864 = vcmp.le.f32.partialorder %v1863, 0.7853982
    %vm1865 = vcmp.lt.s32.totalorder %v183, 0
    %v1866 = vand.u32 %v183, 2139095040
    %v1867 = vshrl.u32 %v1866, 23
    %v1868 = vsub.s32 %v1867, 127
    %v1869 = vand.u32 2147483647, %v183
    %v1870 = vand.u32 %v1869, 8388607
    %v1871 = vor.u32 %v1870, 8388608
    %v1872 = vsub.s32 0, %v1871
    %v1873 = vadd.s32 %v1868, 1
    %vm1874 = vcmp.gt.s32.totalorder %v1873, 0
    %v1875 = vsel %vm1874, %v1873, 0
    %v1876 = vshrl.u32 %v1875, 5
    %v1877 = vand.u32 %v1875, 31
    %v1878 = vsub.s32 32, %v1877
    %v1879 = vshrl.u32 683565275, %v1878
    %v1880 = vshll.u32 683565275, %v1877
    %v1881 = vshrl.u32 2475754826, %v1878
    %v1882 = vor.u32 %v1880, %v1881
    %v1883 = vshll.u32 2475754826, %v1877
    %v1884 = vshrl.u32 2131351028, %v1878
    %v1885 = vor.u32 %v1883, %v1884
    %v1886 = vshll.u32 2131351028, %v1877
    %v1887 = vshrl.u32 2102212464, %v1878
    %v1888 = vor.u32 %v1886, %v1887
    %v1889 = vshll.u32 2102212464, %v1877
    %v1890 = vshrl.u32 920167782, %v1878
    %v1891 = vor.u32 %v1889, %v1890
    %v1892 = vshll.u32 920167782, %v1877
    %v1893 = vshrl.u32 1326507024, %v1878
    %v1894 = vor.u32 %v1892, %v1893
    %vm1895 = vcmp.lt.s32.totalorder %v1876, 1
    %vm1896 = vcmp.lt.s32.totalorder %v1876, 2
    %vm1897 = vcmp.lt.s32.totalorder %v1876, 3
    %vm1898 = vcmp.lt.s32.totalorder %v1876, 4
    %v1899 = vsel %vm1895, %v1879, %v1882
    %v1900 = vsel %vm1898, %v1888, 2102212464
    %v1901 = vsel %vm1897, %v1885, %v1900
    %v1902 = vsel %vm1896, %v1899, %v1901
    %v1903 = vsel %vm1895, %v1882, %v1885
    %v1904 = vsel %vm1898, %v1891, 920167782
    %v1905 = vsel %vm1897, %v1888, %v1904
    %v1906 = vsel %vm1896, %v1903, %v1905
    %v1907 = vsel %vm1895, %v1885, %v1888
    %v1908 = vsel %vm1898, %v1894, 1326507024
    %v1909 = vsel %vm1897, %v1891, %v1908
    %v1910 = vsel %vm1896, %v1907, %v1909
    %v1911 = vshll.u32 %v1871, 8
    %v1912 = vmul.u32.u64.compose %v1911, %v1910
    %v1913 = vextract.low.u32 %v1912
    %v1914 = vextract.high.u32 %v1912
    %v1915 = vmul.u32.u64.compose %v1911, %v1906
    %v1916 = vextract.low.u32 %v1915
    %v1917 = vextract.high.u32 %v1915
    %v1918 = vmul.u32 %v1911, %v1902
    %v1919 = vadd.s32 %v1914, %v1916
    %vm1920 = vc.u32 %v1914, %v1916
    %v1921 = vadd.s32 %v1917, 1
    %v1922 = vsel %vm1920, %v1921, %v1917
    %v1923 = vadd.s32 %v1918, %v1922
    %v1924 = vadd.s32 %v1923, 536870912
    %v1925 = vshrl.u32 %v1924, 30
    %v1926 = vshll.u32 %v1925, 30
    %v1927 = vsub.s32 %v1923, %v1926
    %vm1928 = vcmp.lt.s32.totalorder %v1927, 0
    %v1929 = vsub.s32 0, %v1927
    %v1930 = vsel %vm1928, %v1929, %v1927
    %v1931 = vclz %v1930
    %v1932 = vsub.s32 %v1931, 2
    %vm1933 = vcmp.gt.s32.totalorder 0, %v1932
    %v1934 = vsel %vm1933, 0, %v1932
    %v1935 = vsub.s32 32, %v1934
    %v1936 = vshll.u32 %v1927, %v1934
    %v1937 = vshrl.u32 %v1919, %v1935
    %v1938 = vor.u32 %v1936, %v1937
    %v1939 = vsub.s32 4294967266, %v1934
    %v1940 = vadd.s32 %v1939, 127
    %v1941 = vshll.u32 %v1940, 23
    %v1942 = vor.u32 4788187, %v1941
    %v1943 = vand.u32 2147483647, %v1942
    %v1945 = vcvt.s32.f32 %v1938
    %v1946 = vmul.f32 %v1945, %v1943
    %v1947 = vxor.u32 %v1946, 2147483648
    %v1948 = vsel %vm1865, %v1947, %v1946
    %v1949 = vsub.s32 4, %v1925
    %v1950 = vsel %vm1865, %v1949, %v1925
    %v1951 = vsel %vm1864, %v183, %v1948
    %v1952 = vsel %vm1864, 0, %v1950
    %v1953 = vcosq.f32.pop %v1951
    %v1954 = vsinq.f32.pop %v1951
    %vm1955 = vweird.f32 %v183
    %v1956 = vadd.s32 %v1952, 3
    %v1957 = vand.u32 %v1956, 3
    %vm1958 = vcmp.lt.s32.totalorder %v1957, 2
    %vm1959 = vcmp.eq.s32.totalorder %v1957, 0
    %v1960 = vxor.u32 %v1954, 2147483648
    %v1961 = vsel %vm1959, %v1953, %v1960
    %vm1962 = vcmp.eq.s32.totalorder %v1957, 2
    %v1963 = vxor.u32 %v1953, 2147483648
    %v1964 = vsel %vm1962, %v1963, %v1954
    %v1965 = vsel %vm1958, %v1961, %v1964
    %v1966 = vsel %vm1955, nan, %v1965
    %v1967 = vand.u32 2147483647, %v184
    %vm1968 = vcmp.le.f32.partialorder %v1967, 0.7853982
    %vm1969 = vcmp.lt.s32.totalorder %v184, 0
    %v1970 = vand.u32 %v184, 2139095040
    %v1971 = vshrl.u32 %v1970, 23
    %v1972 = vsub.s32 %v1971, 127
    %v1973 = vand.u32 2147483647, %v184
    %v1974 = vand.u32 %v1973, 8388607
    %v1975 = vor.u32 %v1974, 8388608
    %v1976 = vsub.s32 0, %v1975
    %v1977 = vadd.s32 %v1972, 1
    %vm1978 = vcmp.gt.s32.totalorder %v1977, 0
    %v1979 = vsel %vm1978, %v1977, 0
    %v1980 = vshrl.u32 %v1979, 5
    %v1981 = vand.u32 %v1979, 31
    %v1982 = vsub.s32 32, %v1981
    %v1983 = vshrl.u32 683565275, %v1982
    %v1984 = vshll.u32 683565275, %v1981
    %v1985 = vshrl.u32 2475754826, %v1982
    %v1986 = vor.u32 %v1984, %v1985
    %v1987 = vshll.u32 2475754826, %v1981
    %v1988 = vshrl.u32 2131351028, %v1982
    %v1989 = vor.u32 %v1987, %v1988
    %v1990 = vshll.u32 2131351028, %v1981
    %v1991 = vshrl.u32 2102212464, %v1982
    %v1992 = vor.u32 %v1990, %v1991
    %v1993 = vshll.u32 2102212464, %v1981
    %v1994 = vshrl.u32 920167782, %v1982
    %v1995 = vor.u32 %v1993, %v1994
    %v1996 = vshll.u32 920167782, %v1981
    %v1997 = vshrl.u32 1326507024, %v1982
    %v1998 = vor.u32 %v1996, %v1997
    %vm1999 = vcmp.lt.s32.totalorder %v1980, 1
    %vm2000 = vcmp.lt.s32.totalorder %v1980, 2
    %vm2001 = vcmp.lt.s32.totalorder %v1980, 3
    %vm2002 = vcmp.lt.s32.totalorder %v1980, 4
    %v2003 = vsel %vm1999, %v1983, %v1986
    %v2004 = vsel %vm2002, %v1992, 2102212464
    %v2005 = vsel %vm2001, %v1989, %v2004
    %v2006 = vsel %vm2000, %v2003, %v2005
    %v2007 = vsel %vm1999, %v1986, %v1989
    %v2008 = vsel %vm2002, %v1995, 920167782
    %v2009 = vsel %vm2001, %v1992, %v2008
    %v2010 = vsel %vm2000, %v2007, %v2009
    %v2011 = vsel %vm1999, %v1989, %v1992
    %v2012 = vsel %vm2002, %v1998, 1326507024
    %v2013 = vsel %vm2001, %v1995, %v2012
    %v2014 = vsel %vm2000, %v2011, %v2013
    %v2015 = vshll.u32 %v1975, 8
    %v2016 = vmul.u32.u64.compose %v2015, %v2014
    %v2017 = vextract.low.u32 %v2016
    %v2018 = vextract.high.u32 %v2016
    %v2019 = vmul.u32.u64.compose %v2015, %v2010
    %v2020 = vextract.low.u32 %v2019
    %v2021 = vextract.high.u32 %v2019
    %v2022 = vmul.u32 %v2015, %v2006
    %v2023 = vadd.s32 %v2018, %v2020
    %vm2024 = vc.u32 %v2018, %v2020
    %v2025 = vadd.s32 %v2021, 1
    %v2026 = vsel %vm2024, %v2025, %v2021
    %v2027 = vadd.s32 %v2022, %v2026
    %v2028 = vadd.s32 %v2027, 536870912
    %v2029 = vshrl.u32 %v2028, 30
    %v2030 = vshll.u32 %v2029, 30
    %v2031 = vsub.s32 %v2027, %v2030
    %vm2032 = vcmp.lt.s32.totalorder %v2031, 0
    %v2033 = vsub.s32 0, %v2031
    %v2034 = vsel %vm2032, %v2033, %v2031
    %v2035 = vclz %v2034
    %v2036 = vsub.s32 %v2035, 2
    %vm2037 = vcmp.gt.s32.totalorder 0, %v2036
    %v2038 = vsel %vm2037, 0, %v2036
    %v2039 = vsub.s32 32, %v2038
    %v2040 = vshll.u32 %v2031, %v2038
    %v2041 = vshrl.u32 %v2023, %v2039
    %v2042 = vor.u32 %v2040, %v2041
    %v2043 = vsub.s32 4294967266, %v2038
    %v2044 = vadd.s32 %v2043, 127
    %v2045 = vshll.u32 %v2044, 23
    %v2046 = vor.u32 4788187, %v2045
    %v2047 = vand.u32 2147483647, %v2046
    %v2049 = vcvt.s32.f32 %v2042
    %v2050 = vmul.f32 %v2049, %v2047
    %v2051 = vxor.u32 %v2050, 2147483648
    %v2052 = vsel %vm1969, %v2051, %v2050
    %v2053 = vsub.s32 4, %v2029
    %v2054 = vsel %vm1969, %v2053, %v2029
    %v2055 = vsel %vm1968, %v184, %v2052
    %v2056 = vsel %vm1968, 0, %v2054
    %v2057 = vcosq.f32.pop %v2055
    %v2058 = vsinq.f32.pop %v2055
    %vm2059 = vweird.f32 %v184
    %v2060 = vadd.s32 %v2056, 3
    %v2061 = vand.u32 %v2060, 3
    %vm2062 = vcmp.lt.s32.totalorder %v2061, 2
    %vm2063 = vcmp.eq.s32.totalorder %v2061, 0
    %v2064 = vxor.u32 %v2058, 2147483648
    %v2065 = vsel %vm2063, %v2057, %v2064
    %vm2066 = vcmp.eq.s32.totalorder %v2061, 2
    %v2067 = vxor.u32 %v2057, 2147483648
    %v2068 = vsel %vm2066, %v2067, %v2058
    %v2069 = vsel %vm2062, %v2065, %v2068
    %v2070 = vsel %vm2059, nan, %v2069
    %v2071 = vand.u32 2147483647, %v185
    %vm2072 = vcmp.le.f32.partialorder %v2071, 0.7853982
    %vm2073 = vcmp.lt.s32.totalorder %v185, 0
    %v2074 = vand.u32 %v185, 2139095040
    %v2075 = vshrl.u32 %v2074, 23
    %v2076 = vsub.s32 %v2075, 127
    %v2077 = vand.u32 2147483647, %v185
    %v2078 = vand.u32 %v2077, 8388607
    %v2079 = vor.u32 %v2078, 8388608
    %v2080 = vsub.s32 0, %v2079
    %v2081 = vadd.s32 %v2076, 1
    %vm2082 = vcmp.gt.s32.totalorder %v2081, 0
    %v2083 = vsel %vm2082, %v2081, 0
    %v2084 = vshrl.u32 %v2083, 5
    %v2085 = vand.u32 %v2083, 31
    %v2086 = vsub.s32 32, %v2085
    %v2087 = vshrl.u32 683565275, %v2086
    %v2088 = vshll.u32 683565275, %v2085
    %v2089 = vshrl.u32 2475754826, %v2086
    %v2090 = vor.u32 %v2088, %v2089
    %v2091 = vshll.u32 2475754826, %v2085
    %v2092 = vshrl.u32 2131351028, %v2086
    %v2093 = vor.u32 %v2091, %v2092
    %v2094 = vshll.u32 2131351028, %v2085
    %v2095 = vshrl.u32 2102212464, %v2086
    %v2096 = vor.u32 %v2094, %v2095
    %v2097 = vshll.u32 2102212464, %v2085
    %v2098 = vshrl.u32 920167782, %v2086
    %v2099 = vor.u32 %v2097, %v2098
    %v2100 = vshll.u32 920167782, %v2085
    %v2101 = vshrl.u32 1326507024, %v2086
    %v2102 = vor.u32 %v2100, %v2101
    %vm2103 = vcmp.lt.s32.totalorder %v2084, 1
    %vm2104 = vcmp.lt.s32.totalorder %v2084, 2
    %vm2105 = vcmp.lt.s32.totalorder %v2084, 3
    %vm2106 = vcmp.lt.s32.totalorder %v2084, 4
    %v2107 = vsel %vm2103, %v2087, %v2090
    %v2108 = vsel %vm2106, %v2096, 2102212464
    %v2109 = vsel %vm2105, %v2093, %v2108
    %v2110 = vsel %vm2104, %v2107, %v2109
    %v2111 = vsel %vm2103, %v2090, %v2093
    %v2112 = vsel %vm2106, %v2099, 920167782
    %v2113 = vsel %vm2105, %v2096, %v2112
    %v2114 = vsel %vm2104, %v2111, %v2113
    %v2115 = vsel %vm2103, %v2093, %v2096
    %v2116 = vsel %vm2106, %v2102, 1326507024
    %v2117 = vsel %vm2105, %v2099, %v2116
    %v2118 = vsel %vm2104, %v2115, %v2117
    %v2119 = vshll.u32 %v2079, 8
    %v2120 = vmul.u32.u64.compose %v2119, %v2118
    %v2121 = vextract.low.u32 %v2120
    %v2122 = vextract.high.u32 %v2120
    %v2123 = vmul.u32.u64.compose %v2119, %v2114
    %v2124 = vextract.low.u32 %v2123
    %v2125 = vextract.high.u32 %v2123
    %v2126 = vmul.u32 %v2119, %v2110
    %v2127 = vadd.s32 %v2122, %v2124
    %vm2128 = vc.u32 %v2122, %v2124
    %v2129 = vadd.s32 %v2125, 1
    %v2130 = vsel %vm2128, %v2129, %v2125
    %v2131 = vadd.s32 %v2126, %v2130
    %v2132 = vadd.s32 %v2131, 536870912
    %v2133 = vshrl.u32 %v2132, 30
    %v2134 = vshll.u32 %v2133, 30
    %v2135 = vsub.s32 %v2131, %v2134
    %vm2136 = vcmp.lt.s32.totalorder %v2135, 0
    %v2137 = vsub.s32 0, %v2135
    %v2138 = vsel %vm2136, %v2137, %v2135
    %v2139 = vclz %v2138
    %v2140 = vsub.s32 %v2139, 2
    %vm2141 = vcmp.gt.s32.totalorder 0, %v2140
    %v2142 = vsel %vm2141, 0, %v2140
    %v2143 = vsub.s32 32, %v2142
    %v2144 = vshll.u32 %v2135, %v2142
    %v2145 = vshrl.u32 %v2127, %v2143
    %v2146 = vor.u32 %v2144, %v2145
    %v2147 = vsub.s32 4294967266, %v2142
    %v2148 = vadd.s32 %v2147, 127
    %v2149 = vshll.u32 %v2148, 23
    %v2150 = vor.u32 4788187, %v2149
    %v2151 = vand.u32 2147483647, %v2150
    %v2153 = vcvt.s32.f32 %v2146
    %v2154 = vmul.f32 %v2153, %v2151
    %v2155 = vxor.u32 %v2154, 2147483648
    %v2156 = vsel %vm2073, %v2155, %v2154
    %v2157 = vsub.s32 4, %v2133
    %v2158 = vsel %vm2073, %v2157, %v2133
    %v2159 = vsel %vm2072, %v185, %v2156
    %v2160 = vsel %vm2072, 0, %v2158
    %v2161 = vcosq.f32.pop %v2159
    %v2162 = vsinq.f32.pop %v2159
    %vm2163 = vweird.f32 %v185
    %v2164 = vadd.s32 %v2160, 3
    %v2165 = vand.u32 %v2164, 3
    %vm2166 = vcmp.lt.s32.totalorder %v2165, 2
    %vm2167 = vcmp.eq.s32.totalorder %v2165, 0
    %v2168 = vxor.u32 %v2162, 2147483648
    %v2169 = vsel %vm2167, %v2161, %v2168
    %vm2170 = vcmp.eq.s32.totalorder %v2165, 2
    %v2171 = vxor.u32 %v2161, 2147483648
    %v2172 = vsel %vm2170, %v2171, %v2162
    %v2173 = vsel %vm2166, %v2169, %v2172
    %v2174 = vsel %vm2163, nan, %v2173
    %v2175 = vand.u32 2147483647, %v186
    %vm2176 = vcmp.le.f32.partialorder %v2175, 0.7853982
    %vm2177 = vcmp.lt.s32.totalorder %v186, 0
    %v2178 = vand.u32 %v186, 2139095040
    %v2179 = vshrl.u32 %v2178, 23
    %v2180 = vsub.s32 %v2179, 127
    %v2181 = vand.u32 2147483647, %v186
    %v2182 = vand.u32 %v2181, 8388607
    %v2183 = vor.u32 %v2182, 8388608
    %v2184 = vsub.s32 0, %v2183
    %v2185 = vadd.s32 %v2180, 1
    %vm2186 = vcmp.gt.s32.totalorder %v2185, 0
    %v2187 = vsel %vm2186, %v2185, 0
    %v2188 = vshrl.u32 %v2187, 5
    %v2189 = vand.u32 %v2187, 31
    %v2190 = vsub.s32 32, %v2189
    %v2191 = vshrl.u32 683565275, %v2190
    %v2192 = vshll.u32 683565275, %v2189
    %v2193 = vshrl.u32 2475754826, %v2190
    %v2194 = vor.u32 %v2192, %v2193
    %v2195 = vshll.u32 2475754826, %v2189
    %v2196 = vshrl.u32 2131351028, %v2190
    %v2197 = vor.u32 %v2195, %v2196
    %v2198 = vshll.u32 2131351028, %v2189
    %v2199 = vshrl.u32 2102212464, %v2190
    %v2200 = vor.u32 %v2198, %v2199
    %v2201 = vshll.u32 2102212464, %v2189
    %v2202 = vshrl.u32 920167782, %v2190
    %v2203 = vor.u32 %v2201, %v2202
    %v2204 = vshll.u32 920167782, %v2189
    %v2205 = vshrl.u32 1326507024, %v2190
    %v2206 = vor.u32 %v2204, %v2205
    %vm2207 = vcmp.lt.s32.totalorder %v2188, 1
    %vm2208 = vcmp.lt.s32.totalorder %v2188, 2
    %vm2209 = vcmp.lt.s32.totalorder %v2188, 3
    %vm2210 = vcmp.lt.s32.totalorder %v2188, 4
    %v2211 = vsel %vm2207, %v2191, %v2194
    %v2212 = vsel %vm2210, %v2200, 2102212464
    %v2213 = vsel %vm2209, %v2197, %v2212
    %v2214 = vsel %vm2208, %v2211, %v2213
    %v2215 = vsel %vm2207, %v2194, %v2197
    %v2216 = vsel %vm2210, %v2203, 920167782
    %v2217 = vsel %vm2209, %v2200, %v2216
    %v2218 = vsel %vm2208, %v2215, %v2217
    %v2219 = vsel %vm2207, %v2197, %v2200
    %v2220 = vsel %vm2210, %v2206, 1326507024
    %v2221 = vsel %vm2209, %v2203, %v2220
    %v2222 = vsel %vm2208, %v2219, %v2221
    %v2223 = vshll.u32 %v2183, 8
    %v2224 = vmul.u32.u64.compose %v2223, %v2222
    %v2225 = vextract.low.u32 %v2224
    %v2226 = vextract.high.u32 %v2224
    %v2227 = vmul.u32.u64.compose %v2223, %v2218
    %v2228 = vextract.low.u32 %v2227
    %v2229 = vextract.high.u32 %v2227
    %v2230 = vmul.u32 %v2223, %v2214
    %v2231 = vadd.s32 %v2226, %v2228
    %vm2232 = vc.u32 %v2226, %v2228
    %v2233 = vadd.s32 %v2229, 1
    %v2234 = vsel %vm2232, %v2233, %v2229
    %v2235 = vadd.s32 %v2230, %v2234
    %v2236 = vadd.s32 %v2235, 536870912
    %v2237 = vshrl.u32 %v2236, 30
    %v2238 = vshll.u32 %v2237, 30
    %v2239 = vsub.s32 %v2235, %v2238
    %vm2240 = vcmp.lt.s32.totalorder %v2239, 0
    %v2241 = vsub.s32 0, %v2239
    %v2242 = vsel %vm2240, %v2241, %v2239
    %v2243 = vclz %v2242
    %v2244 = vsub.s32 %v2243, 2
    %vm2245 = vcmp.gt.s32.totalorder 0, %v2244
    %v2246 = vsel %vm2245, 0, %v2244
    %v2247 = vsub.s32 32, %v2246
    %v2248 = vshll.u32 %v2239, %v2246
    %v2249 = vshrl.u32 %v2231, %v2247
    %v2250 = vor.u32 %v2248, %v2249
    %v2251 = vsub.s32 4294967266, %v2246
    %v2252 = vadd.s32 %v2251, 127
    %v2253 = vshll.u32 %v2252, 23
    %v2254 = vor.u32 4788187, %v2253
    %v2255 = vand.u32 2147483647, %v2254
    %v2257 = vcvt.s32.f32 %v2250
    %v2258 = vmul.f32 %v2257, %v2255
    %v2259 = vxor.u32 %v2258, 2147483648
    %v2260 = vsel %vm2177, %v2259, %v2258
    %v2261 = vsub.s32 4, %v2237
    %v2262 = vsel %vm2177, %v2261, %v2237
    %v2263 = vsel %vm2176, %v186, %v2260
    %v2264 = vsel %vm2176, 0, %v2262
    %v2265 = vcosq.f32.pop %v2263
    %v2266 = vsinq.f32.pop %v2263
    %vm2267 = vweird.f32 %v186
    %v2268 = vadd.s32 %v2264, 3
    %v2269 = vand.u32 %v2268, 3
    %vm2270 = vcmp.lt.s32.totalorder %v2269, 2
    %vm2271 = vcmp.eq.s32.totalorder %v2269, 0
    %v2272 = vxor.u32 %v2266, 2147483648
    %v2273 = vsel %vm2271, %v2265, %v2272
    %vm2274 = vcmp.eq.s32.totalorder %v2269, 2
    %v2275 = vxor.u32 %v2265, 2147483648
    %v2276 = vsel %vm2274, %v2275, %v2266
    %v2277 = vsel %vm2270, %v2273, %v2276
    %v2278 = vsel %vm2267, nan, %v2277
    %v2279 = vand.u32 2147483647, %v187
    %vm2280 = vcmp.le.f32.partialorder %v2279, 0.7853982
    %vm2281 = vcmp.lt.s32.totalorder %v187, 0
    %v2282 = vand.u32 %v187, 2139095040
    %v2283 = vshrl.u32 %v2282, 23
    %v2284 = vsub.s32 %v2283, 127
    %v2285 = vand.u32 2147483647, %v187
    %v2286 = vand.u32 %v2285, 8388607
    %v2287 = vor.u32 %v2286, 8388608
    %v2288 = vsub.s32 0, %v2287
    %v2289 = vadd.s32 %v2284, 1
    %vm2290 = vcmp.gt.s32.totalorder %v2289, 0
    %v2291 = vsel %vm2290, %v2289, 0
    %v2292 = vshrl.u32 %v2291, 5
    %v2293 = vand.u32 %v2291, 31
    %v2294 = vsub.s32 32, %v2293
    %v2295 = vshrl.u32 683565275, %v2294
    %v2296 = vshll.u32 683565275, %v2293
    %v2297 = vshrl.u32 2475754826, %v2294
    %v2298 = vor.u32 %v2296, %v2297
    %v2299 = vshll.u32 2475754826, %v2293
    %v2300 = vshrl.u32 2131351028, %v2294
    %v2301 = vor.u32 %v2299, %v2300
    %v2302 = vshll.u32 2131351028, %v2293
    %v2303 = vshrl.u32 2102212464, %v2294
    %v2304 = vor.u32 %v2302, %v2303
    %v2305 = vshll.u32 2102212464, %v2293
    %v2306 = vshrl.u32 920167782, %v2294
    %v2307 = vor.u32 %v2305, %v2306
    %v2308 = vshll.u32 920167782, %v2293
    %v2309 = vshrl.u32 1326507024, %v2294
    %v2310 = vor.u32 %v2308, %v2309
    %vm2311 = vcmp.lt.s32.totalorder %v2292, 1
    %vm2312 = vcmp.lt.s32.totalorder %v2292, 2
    %vm2313 = vcmp.lt.s32.totalorder %v2292, 3
    %vm2314 = vcmp.lt.s32.totalorder %v2292, 4
    %v2315 = vsel %vm2311, %v2295, %v2298
    %v2316 = vsel %vm2314, %v2304, 2102212464
    %v2317 = vsel %vm2313, %v2301, %v2316
    %v2318 = vsel %vm2312, %v2315, %v2317
    %v2319 = vsel %vm2311, %v2298, %v2301
    %v2320 = vsel %vm2314, %v2307, 920167782
    %v2321 = vsel %vm2313, %v2304, %v2320
    %v2322 = vsel %vm2312, %v2319, %v2321
    %v2323 = vsel %vm2311, %v2301, %v2304
    %v2324 = vsel %vm2314, %v2310, 1326507024
    %v2325 = vsel %vm2313, %v2307, %v2324
    %v2326 = vsel %vm2312, %v2323, %v2325
    %v2327 = vshll.u32 %v2287, 8
    %v2328 = vmul.u32.u64.compose %v2327, %v2326
    %v2329 = vextract.low.u32 %v2328
    %v2330 = vextract.high.u32 %v2328
    %v2331 = vmul.u32.u64.compose %v2327, %v2322
    %v2332 = vextract.low.u32 %v2331
    %v2333 = vextract.high.u32 %v2331
    %v2334 = vmul.u32 %v2327, %v2318
    %v2335 = vadd.s32 %v2330, %v2332
    %vm2336 = vc.u32 %v2330, %v2332
    %v2337 = vadd.s32 %v2333, 1
    %v2338 = vsel %vm2336, %v2337, %v2333
    %v2339 = vadd.s32 %v2334, %v2338
    %v2340 = vadd.s32 %v2339, 536870912
    %v2341 = vshrl.u32 %v2340, 30
    %v2342 = vshll.u32 %v2341, 30
    %v2343 = vsub.s32 %v2339, %v2342
    %vm2344 = vcmp.lt.s32.totalorder %v2343, 0
    %v2345 = vsub.s32 0, %v2343
    %v2346 = vsel %vm2344, %v2345, %v2343
    %v2347 = vclz %v2346
    %v2348 = vsub.s32 %v2347, 2
    %vm2349 = vcmp.gt.s32.totalorder 0, %v2348
    %v2350 = vsel %vm2349, 0, %v2348
    %v2351 = vsub.s32 32, %v2350
    %v2352 = vshll.u32 %v2343, %v2350
    %v2353 = vshrl.u32 %v2335, %v2351
    %v2354 = vor.u32 %v2352, %v2353
    %v2355 = vsub.s32 4294967266, %v2350
    %v2356 = vadd.s32 %v2355, 127
    %v2357 = vshll.u32 %v2356, 23
    %v2358 = vor.u32 4788187, %v2357
    %v2359 = vand.u32 2147483647, %v2358
    %v2361 = vcvt.s32.f32 %v2354
    %v2362 = vmul.f32 %v2361, %v2359
    %v2363 = vxor.u32 %v2362, 2147483648
    %v2364 = vsel %vm2281, %v2363, %v2362
    %v2365 = vsub.s32 4, %v2341
    %v2366 = vsel %vm2281, %v2365, %v2341
    %v2367 = vsel %vm2280, %v187, %v2364
    %v2368 = vsel %vm2280, 0, %v2366
    %v2369 = vcosq.f32.pop %v2367
    %v2370 = vsinq.f32.pop %v2367
    %vm2371 = vweird.f32 %v187
    %v2372 = vadd.s32 %v2368, 3
    %v2373 = vand.u32 %v2372, 3
    %vm2374 = vcmp.lt.s32.totalorder %v2373, 2
    %vm2375 = vcmp.eq.s32.totalorder %v2373, 0
    %v2376 = vxor.u32 %v2370, 2147483648
    %v2377 = vsel %vm2375, %v2369, %v2376
    %vm2378 = vcmp.eq.s32.totalorder %v2373, 2
    %v2379 = vxor.u32 %v2369, 2147483648
    %v2380 = vsel %vm2378, %v2379, %v2370
    %v2381 = vsel %vm2374, %v2377, %v2380
    %v2382 = vsel %vm2371, nan, %v2381
    %v2383 = vand.u32 2147483647, %v188
    %vm2384 = vcmp.le.f32.partialorder %v2383, 0.7853982
    %vm2385 = vcmp.lt.s32.totalorder %v188, 0
    %v2386 = vand.u32 %v188, 2139095040
    %v2387 = vshrl.u32 %v2386, 23
    %v2388 = vsub.s32 %v2387, 127
    %v2389 = vand.u32 2147483647, %v188
    %v2390 = vand.u32 %v2389, 8388607
    %v2391 = vor.u32 %v2390, 8388608
    %v2392 = vsub.s32 0, %v2391
    %v2393 = vadd.s32 %v2388, 1
    %vm2394 = vcmp.gt.s32.totalorder %v2393, 0
    %v2395 = vsel %vm2394, %v2393, 0
    %v2396 = vshrl.u32 %v2395, 5
    %v2397 = vand.u32 %v2395, 31
    %v2398 = vsub.s32 32, %v2397
    %v2399 = vshrl.u32 683565275, %v2398
    %v2400 = vshll.u32 683565275, %v2397
    %v2401 = vshrl.u32 2475754826, %v2398
    %v2402 = vor.u32 %v2400, %v2401
    %v2403 = vshll.u32 2475754826, %v2397
    %v2404 = vshrl.u32 2131351028, %v2398
    %v2405 = vor.u32 %v2403, %v2404
    %v2406 = vshll.u32 2131351028, %v2397
    %v2407 = vshrl.u32 2102212464, %v2398
    %v2408 = vor.u32 %v2406, %v2407
    %v2409 = vshll.u32 2102212464, %v2397
    %v2410 = vshrl.u32 920167782, %v2398
    %v2411 = vor.u32 %v2409, %v2410
    %v2412 = vshll.u32 920167782, %v2397
    %v2413 = vshrl.u32 1326507024, %v2398
    %v2414 = vor.u32 %v2412, %v2413
    %vm2415 = vcmp.lt.s32.totalorder %v2396, 1
    %vm2416 = vcmp.lt.s32.totalorder %v2396, 2
    %vm2417 = vcmp.lt.s32.totalorder %v2396, 3
    %vm2418 = vcmp.lt.s32.totalorder %v2396, 4
    %v2419 = vsel %vm2415, %v2399, %v2402
    %v2420 = vsel %vm2418, %v2408, 2102212464
    %v2421 = vsel %vm2417, %v2405, %v2420
    %v2422 = vsel %vm2416, %v2419, %v2421
    %v2423 = vsel %vm2415, %v2402, %v2405
    %v2424 = vsel %vm2418, %v2411, 920167782
    %v2425 = vsel %vm2417, %v2408, %v2424
    %v2426 = vsel %vm2416, %v2423, %v2425
    %v2427 = vsel %vm2415, %v2405, %v2408
    %v2428 = vsel %vm2418, %v2414, 1326507024
    %v2429 = vsel %vm2417, %v2411, %v2428
    %v2430 = vsel %vm2416, %v2427, %v2429
    %v2431 = vshll.u32 %v2391, 8
    %v2432 = vmul.u32.u64.compose %v2431, %v2430
    %v2433 = vextract.low.u32 %v2432
    %v2434 = vextract.high.u32 %v2432
    %v2435 = vmul.u32.u64.compose %v2431, %v2426
    %v2436 = vextract.low.u32 %v2435
    %v2437 = vextract.high.u32 %v2435
    %v2438 = vmul.u32 %v2431, %v2422
    %v2439 = vadd.s32 %v2434, %v2436
    %vm2440 = vc.u32 %v2434, %v2436
    %v2441 = vadd.s32 %v2437, 1
    %v2442 = vsel %vm2440, %v2441, %v2437
    %v2443 = vadd.s32 %v2438, %v2442
    %v2444 = vadd.s32 %v2443, 536870912
    %v2445 = vshrl.u32 %v2444, 30
    %v2446 = vshll.u32 %v2445, 30
    %v2447 = vsub.s32 %v2443, %v2446
    %vm2448 = vcmp.lt.s32.totalorder %v2447, 0
    %v2449 = vsub.s32 0, %v2447
    %v2450 = vsel %vm2448, %v2449, %v2447
    %v2451 = vclz %v2450
    %v2452 = vsub.s32 %v2451, 2
    %vm2453 = vcmp.gt.s32.totalorder 0, %v2452
    %v2454 = vsel %vm2453, 0, %v2452
    %v2455 = vsub.s32 32, %v2454
    %v2456 = vshll.u32 %v2447, %v2454
    %v2457 = vshrl.u32 %v2439, %v2455
    %v2458 = vor.u32 %v2456, %v2457
    %v2459 = vsub.s32 4294967266, %v2454
    %v2460 = vadd.s32 %v2459, 127
    %v2461 = vshll.u32 %v2460, 23
    %v2462 = vor.u32 4788187, %v2461
    %v2463 = vand.u32 2147483647, %v2462
    %v2465 = vcvt.s32.f32 %v2458
    %v2466 = vmul.f32 %v2465, %v2463
    %v2467 = vxor.u32 %v2466, 2147483648
    %v2468 = vsel %vm2385, %v2467, %v2466
    %v2469 = vsub.s32 4, %v2445
    %v2470 = vsel %vm2385, %v2469, %v2445
    %v2471 = vsel %vm2384, %v188, %v2468
    %v2472 = vsel %vm2384, 0, %v2470
    %v2473 = vcosq.f32.pop %v2471
    %v2474 = vsinq.f32.pop %v2471
    %vm2475 = vweird.f32 %v188
    %v2476 = vadd.s32 %v2472, 3
    %v2477 = vand.u32 %v2476, 3
    %vm2478 = vcmp.lt.s32.totalorder %v2477, 2
    %vm2479 = vcmp.eq.s32.totalorder %v2477, 0
    %v2480 = vxor.u32 %v2474, 2147483648
    %v2481 = vsel %vm2479, %v2473, %v2480
    %vm2482 = vcmp.eq.s32.totalorder %v2477, 2
    %v2483 = vxor.u32 %v2473, 2147483648
    %v2484 = vsel %vm2482, %v2483, %v2474
    %v2485 = vsel %vm2478, %v2481, %v2484
    %v2486 = vsel %vm2475, nan, %v2485
    %v2487 = vand.u32 2147483647, %v189
    %vm2488 = vcmp.le.f32.partialorder %v2487, 0.7853982
    %vm2489 = vcmp.lt.s32.totalorder %v189, 0
    %v2490 = vand.u32 %v189, 2139095040
    %v2491 = vshrl.u32 %v2490, 23
    %v2492 = vsub.s32 %v2491, 127
    %v2493 = vand.u32 2147483647, %v189
    %v2494 = vand.u32 %v2493, 8388607
    %v2495 = vor.u32 %v2494, 8388608
    %v2496 = vsub.s32 0, %v2495
    %v2497 = vadd.s32 %v2492, 1
    %vm2498 = vcmp.gt.s32.totalorder %v2497, 0
    %v2499 = vsel %vm2498, %v2497, 0
    %v2500 = vshrl.u32 %v2499, 5
    %v2501 = vand.u32 %v2499, 31
    %v2502 = vsub.s32 32, %v2501
    %v2503 = vshrl.u32 683565275, %v2502
    %v2504 = vshll.u32 683565275, %v2501
    %v2505 = vshrl.u32 2475754826, %v2502
    %v2506 = vor.u32 %v2504, %v2505
    %v2507 = vshll.u32 2475754826, %v2501
    %v2508 = vshrl.u32 2131351028, %v2502
    %v2509 = vor.u32 %v2507, %v2508
    %v2510 = vshll.u32 2131351028, %v2501
    %v2511 = vshrl.u32 2102212464, %v2502
    %v2512 = vor.u32 %v2510, %v2511
    %v2513 = vshll.u32 2102212464, %v2501
    %v2514 = vshrl.u32 920167782, %v2502
    %v2515 = vor.u32 %v2513, %v2514
    %v2516 = vshll.u32 920167782, %v2501
    %v2517 = vshrl.u32 1326507024, %v2502
    %v2518 = vor.u32 %v2516, %v2517
    %vm2519 = vcmp.lt.s32.totalorder %v2500, 1
    %vm2520 = vcmp.lt.s32.totalorder %v2500, 2
    %vm2521 = vcmp.lt.s32.totalorder %v2500, 3
    %vm2522 = vcmp.lt.s32.totalorder %v2500, 4
    %v2523 = vsel %vm2519, %v2503, %v2506
    %v2524 = vsel %vm2522, %v2512, 2102212464
    %v2525 = vsel %vm2521, %v2509, %v2524
    %v2526 = vsel %vm2520, %v2523, %v2525
    %v2527 = vsel %vm2519, %v2506, %v2509
    %v2528 = vsel %vm2522, %v2515, 920167782
    %v2529 = vsel %vm2521, %v2512, %v2528
    %v2530 = vsel %vm2520, %v2527, %v2529
    %v2531 = vsel %vm2519, %v2509, %v2512
    %v2532 = vsel %vm2522, %v2518, 1326507024
    %v2533 = vsel %vm2521, %v2515, %v2532
    %v2534 = vsel %vm2520, %v2531, %v2533
    %v2535 = vshll.u32 %v2495, 8
    %v2536 = vmul.u32.u64.compose %v2535, %v2534
    %v2537 = vextract.low.u32 %v2536
    %v2538 = vextract.high.u32 %v2536
    %v2539 = vmul.u32.u64.compose %v2535, %v2530
    %v2540 = vextract.low.u32 %v2539
    %v2541 = vextract.high.u32 %v2539
    %v2542 = vmul.u32 %v2535, %v2526
    %v2543 = vadd.s32 %v2538, %v2540
    %vm2544 = vc.u32 %v2538, %v2540
    %v2545 = vadd.s32 %v2541, 1
    %v2546 = vsel %vm2544, %v2545, %v2541
    %v2547 = vadd.s32 %v2542, %v2546
    %v2548 = vadd.s32 %v2547, 536870912
    %v2549 = vshrl.u32 %v2548, 30
    %v2550 = vshll.u32 %v2549, 30
    %v2551 = vsub.s32 %v2547, %v2550
    %vm2552 = vcmp.lt.s32.totalorder %v2551, 0
    %v2553 = vsub.s32 0, %v2551
    %v2554 = vsel %vm2552, %v2553, %v2551
    %v2555 = vclz %v2554
    %v2556 = vsub.s32 %v2555, 2
    %vm2557 = vcmp.gt.s32.totalorder 0, %v2556
    %v2558 = vsel %vm2557, 0, %v2556
    %v2559 = vsub.s32 32, %v2558
    %v2560 = vshll.u32 %v2551, %v2558
    %v2561 = vshrl.u32 %v2543, %v2559
    %v2562 = vor.u32 %v2560, %v2561
    %v2563 = vsub.s32 4294967266, %v2558
    %v2564 = vadd.s32 %v2563, 127
    %v2565 = vshll.u32 %v2564, 23
    %v2566 = vor.u32 4788187, %v2565
    %v2567 = vand.u32 2147483647, %v2566
    %v2569 = vcvt.s32.f32 %v2562
    %v2570 = vmul.f32 %v2569, %v2567
    %v2571 = vxor.u32 %v2570, 2147483648
    %v2572 = vsel %vm2489, %v2571, %v2570
    %v2573 = vsub.s32 4, %v2549
    %v2574 = vsel %vm2489, %v2573, %v2549
    %v2575 = vsel %vm2488, %v189, %v2572
    %v2576 = vsel %vm2488, 0, %v2574
    %v2577 = vcosq.f32.pop %v2575
    %v2578 = vsinq.f32.pop %v2575
    %vm2579 = vweird.f32 %v189
    %v2580 = vadd.s32 %v2576, 3
    %v2581 = vand.u32 %v2580, 3
    %vm2582 = vcmp.lt.s32.totalorder %v2581, 2
    %vm2583 = vcmp.eq.s32.totalorder %v2581, 0
    %v2584 = vxor.u32 %v2578, 2147483648
    %v2585 = vsel %vm2583, %v2577, %v2584
    %vm2586 = vcmp.eq.s32.totalorder %v2581, 2
    %v2587 = vxor.u32 %v2577, 2147483648
    %v2588 = vsel %vm2586, %v2587, %v2578
    %v2589 = vsel %vm2582, %v2585, %v2588
    %v2590 = vsel %vm2579, nan, %v2589
    %v2591 = vand.u32 2147483647, %v190
    %vm2592 = vcmp.le.f32.partialorder %v2591, 0.7853982
    %vm2593 = vcmp.lt.s32.totalorder %v190, 0
    %v2594 = vand.u32 %v190, 2139095040
    %v2595 = vshrl.u32 %v2594, 23
    %v2596 = vsub.s32 %v2595, 127
    %v2597 = vand.u32 2147483647, %v190
    %v2598 = vand.u32 %v2597, 8388607
    %v2599 = vor.u32 %v2598, 8388608
    %v2600 = vsub.s32 0, %v2599
    %v2601 = vadd.s32 %v2596, 1
    %vm2602 = vcmp.gt.s32.totalorder %v2601, 0
    %v2603 = vsel %vm2602, %v2601, 0
    %v2604 = vshrl.u32 %v2603, 5
    %v2605 = vand.u32 %v2603, 31
    %v2606 = vsub.s32 32, %v2605
    %v2607 = vshrl.u32 683565275, %v2606
    %v2608 = vshll.u32 683565275, %v2605
    %v2609 = vshrl.u32 2475754826, %v2606
    %v2610 = vor.u32 %v2608, %v2609
    %v2611 = vshll.u32 2475754826, %v2605
    %v2612 = vshrl.u32 2131351028, %v2606
    %v2613 = vor.u32 %v2611, %v2612
    %v2614 = vshll.u32 2131351028, %v2605
    %v2615 = vshrl.u32 2102212464, %v2606
    %v2616 = vor.u32 %v2614, %v2615
    %v2617 = vshll.u32 2102212464, %v2605
    %v2618 = vshrl.u32 920167782, %v2606
    %v2619 = vor.u32 %v2617, %v2618
    %v2620 = vshll.u32 920167782, %v2605
    %v2621 = vshrl.u32 1326507024, %v2606
    %v2622 = vor.u32 %v2620, %v2621
    %vm2623 = vcmp.lt.s32.totalorder %v2604, 1
    %vm2624 = vcmp.lt.s32.totalorder %v2604, 2
    %vm2625 = vcmp.lt.s32.totalorder %v2604, 3
    %vm2626 = vcmp.lt.s32.totalorder %v2604, 4
    %v2627 = vsel %vm2623, %v2607, %v2610
    %v2628 = vsel %vm2626, %v2616, 2102212464
    %v2629 = vsel %vm2625, %v2613, %v2628
    %v2630 = vsel %vm2624, %v2627, %v2629
    %v2631 = vsel %vm2623, %v2610, %v2613
    %v2632 = vsel %vm2626, %v2619, 920167782
    %v2633 = vsel %vm2625, %v2616, %v2632
    %v2634 = vsel %vm2624, %v2631, %v2633
    %v2635 = vsel %vm2623, %v2613, %v2616
    %v2636 = vsel %vm2626, %v2622, 1326507024
    %v2637 = vsel %vm2625, %v2619, %v2636
    %v2638 = vsel %vm2624, %v2635, %v2637
    %v2639 = vshll.u32 %v2599, 8
    %v2640 = vmul.u32.u64.compose %v2639, %v2638
    %v2641 = vextract.low.u32 %v2640
    %v2642 = vextract.high.u32 %v2640
    %v2643 = vmul.u32.u64.compose %v2639, %v2634
    %v2644 = vextract.low.u32 %v2643
    %v2645 = vextract.high.u32 %v2643
    %v2646 = vmul.u32 %v2639, %v2630
    %v2647 = vadd.s32 %v2642, %v2644
    %vm2648 = vc.u32 %v2642, %v2644
    %v2649 = vadd.s32 %v2645, 1
    %v2650 = vsel %vm2648, %v2649, %v2645
    %v2651 = vadd.s32 %v2646, %v2650
    %v2652 = vadd.s32 %v2651, 536870912
    %v2653 = vshrl.u32 %v2652, 30
    %v2654 = vshll.u32 %v2653, 30
    %v2655 = vsub.s32 %v2651, %v2654
    %vm2656 = vcmp.lt.s32.totalorder %v2655, 0
    %v2657 = vsub.s32 0, %v2655
    %v2658 = vsel %vm2656, %v2657, %v2655
    %v2659 = vclz %v2658
    %v2660 = vsub.s32 %v2659, 2
    %vm2661 = vcmp.gt.s32.totalorder 0, %v2660
    %v2662 = vsel %vm2661, 0, %v2660
    %v2663 = vsub.s32 32, %v2662
    %v2664 = vshll.u32 %v2655, %v2662
    %v2665 = vshrl.u32 %v2647, %v2663
    %v2666 = vor.u32 %v2664, %v2665
    %v2667 = vsub.s32 4294967266, %v2662
    %v2668 = vadd.s32 %v2667, 127
    %v2669 = vshll.u32 %v2668, 23
    %v2670 = vor.u32 4788187, %v2669
    %v2671 = vand.u32 2147483647, %v2670
    %v2673 = vcvt.s32.f32 %v2666
    %v2674 = vmul.f32 %v2673, %v2671
    %v2675 = vxor.u32 %v2674, 2147483648
    %v2676 = vsel %vm2593, %v2675, %v2674
    %v2677 = vsub.s32 4, %v2653
    %v2678 = vsel %vm2593, %v2677, %v2653
    %v2679 = vsel %vm2592, %v190, %v2676
    %v2680 = vsel %vm2592, 0, %v2678
    %v2681 = vcosq.f32.pop %v2679
    %v2682 = vsinq.f32.pop %v2679
    %vm2683 = vweird.f32 %v190
    %v2684 = vadd.s32 %v2680, 3
    %v2685 = vand.u32 %v2684, 3
    %vm2686 = vcmp.lt.s32.totalorder %v2685, 2
    %vm2687 = vcmp.eq.s32.totalorder %v2685, 0
    %v2688 = vxor.u32 %v2682, 2147483648
    %v2689 = vsel %vm2687, %v2681, %v2688
    %vm2690 = vcmp.eq.s32.totalorder %v2685, 2
    %v2691 = vxor.u32 %v2681, 2147483648
    %v2692 = vsel %vm2690, %v2691, %v2682
    %v2693 = vsel %vm2686, %v2689, %v2692
    %v2694 = vsel %vm2683, nan, %v2693
    %v2695 = vand.u32 2147483647, %v191
    %vm2696 = vcmp.le.f32.partialorder %v2695, 0.7853982
    %vm2697 = vcmp.lt.s32.totalorder %v191, 0
    %v2698 = vand.u32 %v191, 2139095040
    %v2699 = vshrl.u32 %v2698, 23
    %v2700 = vsub.s32 %v2699, 127
    %v2701 = vand.u32 2147483647, %v191
    %v2702 = vand.u32 %v2701, 8388607
    %v2703 = vor.u32 %v2702, 8388608
    %v2704 = vsub.s32 0, %v2703
    %v2705 = vadd.s32 %v2700, 1
    %vm2706 = vcmp.gt.s32.totalorder %v2705, 0
    %v2707 = vsel %vm2706, %v2705, 0
    %v2708 = vshrl.u32 %v2707, 5
    %v2709 = vand.u32 %v2707, 31
    %v2710 = vsub.s32 32, %v2709
    %v2711 = vshrl.u32 683565275, %v2710
    %v2712 = vshll.u32 683565275, %v2709
    %v2713 = vshrl.u32 2475754826, %v2710
    %v2714 = vor.u32 %v2712, %v2713
    %v2715 = vshll.u32 2475754826, %v2709
    %v2716 = vshrl.u32 2131351028, %v2710
    %v2717 = vor.u32 %v2715, %v2716
    %v2718 = vshll.u32 2131351028, %v2709
    %v2719 = vshrl.u32 2102212464, %v2710
    %v2720 = vor.u32 %v2718, %v2719
    %v2721 = vshll.u32 2102212464, %v2709
    %v2722 = vshrl.u32 920167782, %v2710
    %v2723 = vor.u32 %v2721, %v2722
    %v2724 = vshll.u32 920167782, %v2709
    %v2725 = vshrl.u32 1326507024, %v2710
    %v2726 = vor.u32 %v2724, %v2725
    %vm2727 = vcmp.lt.s32.totalorder %v2708, 1
    %vm2728 = vcmp.lt.s32.totalorder %v2708, 2
    %vm2729 = vcmp.lt.s32.totalorder %v2708, 3
    %vm2730 = vcmp.lt.s32.totalorder %v2708, 4
    %v2731 = vsel %vm2727, %v2711, %v2714
    %v2732 = vsel %vm2730, %v2720, 2102212464
    %v2733 = vsel %vm2729, %v2717, %v2732
    %v2734 = vsel %vm2728, %v2731, %v2733
    %v2735 = vsel %vm2727, %v2714, %v2717
    %v2736 = vsel %vm2730, %v2723, 920167782
    %v2737 = vsel %vm2729, %v2720, %v2736
    %v2738 = vsel %vm2728, %v2735, %v2737
    %v2739 = vsel %vm2727, %v2717, %v2720
    %v2740 = vsel %vm2730, %v2726, 1326507024
    %v2741 = vsel %vm2729, %v2723, %v2740
    %v2742 = vsel %vm2728, %v2739, %v2741
    %v2743 = vshll.u32 %v2703, 8
    %v2744 = vmul.u32.u64.compose %v2743, %v2742
    %v2745 = vextract.low.u32 %v2744
    %v2746 = vextract.high.u32 %v2744
    %v2747 = vmul.u32.u64.compose %v2743, %v2738
    %v2748 = vextract.low.u32 %v2747
    %v2749 = vextract.high.u32 %v2747
    %v2750 = vmul.u32 %v2743, %v2734
    %v2751 = vadd.s32 %v2746, %v2748
    %vm2752 = vc.u32 %v2746, %v2748
    %v2753 = vadd.s32 %v2749, 1
    %v2754 = vsel %vm2752, %v2753, %v2749
    %v2755 = vadd.s32 %v2750, %v2754
    %v2756 = vadd.s32 %v2755, 536870912
    %v2757 = vshrl.u32 %v2756, 30
    %v2758 = vshll.u32 %v2757, 30
    %v2759 = vsub.s32 %v2755, %v2758
    %vm2760 = vcmp.lt.s32.totalorder %v2759, 0
    %v2761 = vsub.s32 0, %v2759
    %v2762 = vsel %vm2760, %v2761, %v2759
    %v2763 = vclz %v2762
    %v2764 = vsub.s32 %v2763, 2
    %vm2765 = vcmp.gt.s32.totalorder 0, %v2764
    %v2766 = vsel %vm2765, 0, %v2764
    %v2767 = vsub.s32 32, %v2766
    %v2768 = vshll.u32 %v2759, %v2766
    %v2769 = vshrl.u32 %v2751, %v2767
    %v2770 = vor.u32 %v2768, %v2769
    %v2771 = vsub.s32 4294967266, %v2766
    %v2772 = vadd.s32 %v2771, 127
    %v2773 = vshll.u32 %v2772, 23
    %v2774 = vor.u32 4788187, %v2773
    %v2775 = vand.u32 2147483647, %v2774
    %v2777 = vcvt.s32.f32 %v2770
    %v2778 = vmul.f32 %v2777, %v2775
    %v2779 = vxor.u32 %v2778, 2147483648
    %v2780 = vsel %vm2697, %v2779, %v2778
    %v2781 = vsub.s32 4, %v2757
    %v2782 = vsel %vm2697, %v2781, %v2757
    %v2783 = vsel %vm2696, %v191, %v2780
    %v2784 = vsel %vm2696, 0, %v2782
    %v2785 = vcosq.f32.pop %v2783
    %v2786 = vsinq.f32.pop %v2783
    %vm2787 = vweird.f32 %v191
    %v2788 = vadd.s32 %v2784, 3
    %v2789 = vand.u32 %v2788, 3
    %vm2790 = vcmp.lt.s32.totalorder %v2789, 2
    %vm2791 = vcmp.eq.s32.totalorder %v2789, 0
    %v2792 = vxor.u32 %v2786, 2147483648
    %v2793 = vsel %vm2791, %v2785, %v2792
    %vm2794 = vcmp.eq.s32.totalorder %v2789, 2
    %v2795 = vxor.u32 %v2785, 2147483648
    %v2796 = vsel %vm2794, %v2795, %v2786
    %v2797 = vsel %vm2790, %v2793, %v2796
    %v2798 = vsel %vm2787, nan, %v2797
    %v2799 = vand.u32 2147483647, %v192
    %vm2800 = vcmp.le.f32.partialorder %v2799, 0.7853982
    %vm2801 = vcmp.lt.s32.totalorder %v192, 0
    %v2802 = vand.u32 %v192, 2139095040
    %v2803 = vshrl.u32 %v2802, 23
    %v2804 = vsub.s32 %v2803, 127
    %v2805 = vand.u32 2147483647, %v192
    %v2806 = vand.u32 %v2805, 8388607
    %v2807 = vor.u32 %v2806, 8388608
    %v2808 = vsub.s32 0, %v2807
    %v2809 = vadd.s32 %v2804, 1
    %vm2810 = vcmp.gt.s32.totalorder %v2809, 0
    %v2811 = vsel %vm2810, %v2809, 0
    %v2812 = vshrl.u32 %v2811, 5
    %v2813 = vand.u32 %v2811, 31
    %v2814 = vsub.s32 32, %v2813
    %v2815 = vshrl.u32 683565275, %v2814
    %v2816 = vshll.u32 683565275, %v2813
    %v2817 = vshrl.u32 2475754826, %v2814
    %v2818 = vor.u32 %v2816, %v2817
    %v2819 = vshll.u32 2475754826, %v2813
    %v2820 = vshrl.u32 2131351028, %v2814
    %v2821 = vor.u32 %v2819, %v2820
    %v2822 = vshll.u32 2131351028, %v2813
    %v2823 = vshrl.u32 2102212464, %v2814
    %v2824 = vor.u32 %v2822, %v2823
    %v2825 = vshll.u32 2102212464, %v2813
    %v2826 = vshrl.u32 920167782, %v2814
    %v2827 = vor.u32 %v2825, %v2826
    %v2828 = vshll.u32 920167782, %v2813
    %v2829 = vshrl.u32 1326507024, %v2814
    %v2830 = vor.u32 %v2828, %v2829
    %vm2831 = vcmp.lt.s32.totalorder %v2812, 1
    %vm2832 = vcmp.lt.s32.totalorder %v2812, 2
    %vm2833 = vcmp.lt.s32.totalorder %v2812, 3
    %vm2834 = vcmp.lt.s32.totalorder %v2812, 4
    %v2835 = vsel %vm2831, %v2815, %v2818
    %v2836 = vsel %vm2834, %v2824, 2102212464
    %v2837 = vsel %vm2833, %v2821, %v2836
    %v2838 = vsel %vm2832, %v2835, %v2837
    %v2839 = vsel %vm2831, %v2818, %v2821
    %v2840 = vsel %vm2834, %v2827, 920167782
    %v2841 = vsel %vm2833, %v2824, %v2840
    %v2842 = vsel %vm2832, %v2839, %v2841
    %v2843 = vsel %vm2831, %v2821, %v2824
    %v2844 = vsel %vm2834, %v2830, 1326507024
    %v2845 = vsel %vm2833, %v2827, %v2844
    %v2846 = vsel %vm2832, %v2843, %v2845
    %v2847 = vshll.u32 %v2807, 8
    %v2848 = vmul.u32.u64.compose %v2847, %v2846
    %v2849 = vextract.low.u32 %v2848
    %v2850 = vextract.high.u32 %v2848
    %v2851 = vmul.u32.u64.compose %v2847, %v2842
    %v2852 = vextract.low.u32 %v2851
    %v2853 = vextract.high.u32 %v2851
    %v2854 = vmul.u32 %v2847, %v2838
    %v2855 = vadd.s32 %v2850, %v2852
    %vm2856 = vc.u32 %v2850, %v2852
    %v2857 = vadd.s32 %v2853, 1
    %v2858 = vsel %vm2856, %v2857, %v2853
    %v2859 = vadd.s32 %v2854, %v2858
    %v2860 = vadd.s32 %v2859, 536870912
    %v2861 = vshrl.u32 %v2860, 30
    %v2862 = vshll.u32 %v2861, 30
    %v2863 = vsub.s32 %v2859, %v2862
    %vm2864 = vcmp.lt.s32.totalorder %v2863, 0
    %v2865 = vsub.s32 0, %v2863
    %v2866 = vsel %vm2864, %v2865, %v2863
    %v2867 = vclz %v2866
    %v2868 = vsub.s32 %v2867, 2
    %vm2869 = vcmp.gt.s32.totalorder 0, %v2868
    %v2870 = vsel %vm2869, 0, %v2868
    %v2871 = vsub.s32 32, %v2870
    %v2872 = vshll.u32 %v2863, %v2870
    %v2873 = vshrl.u32 %v2855, %v2871
    %v2874 = vor.u32 %v2872, %v2873
    %v2875 = vsub.s32 4294967266, %v2870
    %v2876 = vadd.s32 %v2875, 127
    %v2877 = vshll.u32 %v2876, 23
    %v2878 = vor.u32 4788187, %v2877
    %v2879 = vand.u32 2147483647, %v2878
    %v2881 = vcvt.s32.f32 %v2874
    %v2882 = vmul.f32 %v2881, %v2879
    %v2883 = vxor.u32 %v2882, 2147483648
    %v2884 = vsel %vm2801, %v2883, %v2882
    %v2885 = vsub.s32 4, %v2861
    %v2886 = vsel %vm2801, %v2885, %v2861
    %v2887 = vsel %vm2800, %v192, %v2884
    %v2888 = vsel %vm2800, 0, %v2886
    %v2889 = vcosq.f32.pop %v2887
    %v2890 = vsinq.f32.pop %v2887
    %vm2891 = vweird.f32 %v192
    %v2892 = vadd.s32 %v2888, 3
    %v2893 = vand.u32 %v2892, 3
    %vm2894 = vcmp.lt.s32.totalorder %v2893, 2
    %vm2895 = vcmp.eq.s32.totalorder %v2893, 0
    %v2896 = vxor.u32 %v2890, 2147483648
    %v2897 = vsel %vm2895, %v2889, %v2896
    %vm2898 = vcmp.eq.s32.totalorder %v2893, 2
    %v2899 = vxor.u32 %v2889, 2147483648
    %v2900 = vsel %vm2898, %v2899, %v2890
    %v2901 = vsel %vm2894, %v2897, %v2900
    %v2902 = vsel %vm2891, nan, %v2901
    %v2903 = vand.u32 2147483647, %v193
    %vm2904 = vcmp.le.f32.partialorder %v2903, 0.7853982
    %vm2905 = vcmp.lt.s32.totalorder %v193, 0
    %v2906 = vand.u32 %v193, 2139095040
    %v2907 = vshrl.u32 %v2906, 23
    %v2908 = vsub.s32 %v2907, 127
    %v2909 = vand.u32 2147483647, %v193
    %v2910 = vand.u32 %v2909, 8388607
    %v2911 = vor.u32 %v2910, 8388608
    %v2912 = vsub.s32 0, %v2911
    %v2913 = vadd.s32 %v2908, 1
    %vm2914 = vcmp.gt.s32.totalorder %v2913, 0
    %v2915 = vsel %vm2914, %v2913, 0
    %v2916 = vshrl.u32 %v2915, 5
    %v2917 = vand.u32 %v2915, 31
    %v2918 = vsub.s32 32, %v2917
    %v2919 = vshrl.u32 683565275, %v2918
    %v2920 = vshll.u32 683565275, %v2917
    %v2921 = vshrl.u32 2475754826, %v2918
    %v2922 = vor.u32 %v2920, %v2921
    %v2923 = vshll.u32 2475754826, %v2917
    %v2924 = vshrl.u32 2131351028, %v2918
    %v2925 = vor.u32 %v2923, %v2924
    %v2926 = vshll.u32 2131351028, %v2917
    %v2927 = vshrl.u32 2102212464, %v2918
    %v2928 = vor.u32 %v2926, %v2927
    %v2929 = vshll.u32 2102212464, %v2917
    %v2930 = vshrl.u32 920167782, %v2918
    %v2931 = vor.u32 %v2929, %v2930
    %v2932 = vshll.u32 920167782, %v2917
    %v2933 = vshrl.u32 1326507024, %v2918
    %v2934 = vor.u32 %v2932, %v2933
    %vm2935 = vcmp.lt.s32.totalorder %v2916, 1
    %vm2936 = vcmp.lt.s32.totalorder %v2916, 2
    %vm2937 = vcmp.lt.s32.totalorder %v2916, 3
    %vm2938 = vcmp.lt.s32.totalorder %v2916, 4
    %v2939 = vsel %vm2935, %v2919, %v2922
    %v2940 = vsel %vm2938, %v2928, 2102212464
    %v2941 = vsel %vm2937, %v2925, %v2940
    %v2942 = vsel %vm2936, %v2939, %v2941
    %v2943 = vsel %vm2935, %v2922, %v2925
    %v2944 = vsel %vm2938, %v2931, 920167782
    %v2945 = vsel %vm2937, %v2928, %v2944
    %v2946 = vsel %vm2936, %v2943, %v2945
    %v2947 = vsel %vm2935, %v2925, %v2928
    %v2948 = vsel %vm2938, %v2934, 1326507024
    %v2949 = vsel %vm2937, %v2931, %v2948
    %v2950 = vsel %vm2936, %v2947, %v2949
    %v2951 = vshll.u32 %v2911, 8
    %v2952 = vmul.u32.u64.compose %v2951, %v2950
    %v2953 = vextract.low.u32 %v2952
    %v2954 = vextract.high.u32 %v2952
    %v2955 = vmul.u32.u64.compose %v2951, %v2946
    %v2956 = vextract.low.u32 %v2955
    %v2957 = vextract.high.u32 %v2955
    %v2958 = vmul.u32 %v2951, %v2942
    %v2959 = vadd.s32 %v2954, %v2956
    %vm2960 = vc.u32 %v2954, %v2956
    %v2961 = vadd.s32 %v2957, 1
    %v2962 = vsel %vm2960, %v2961, %v2957
    %v2963 = vadd.s32 %v2958, %v2962
    %v2964 = vadd.s32 %v2963, 536870912
    %v2965 = vshrl.u32 %v2964, 30
    %v2966 = vshll.u32 %v2965, 30
    %v2967 = vsub.s32 %v2963, %v2966
    %vm2968 = vcmp.lt.s32.totalorder %v2967, 0
    %v2969 = vsub.s32 0, %v2967
    %v2970 = vsel %vm2968, %v2969, %v2967
    %v2971 = vclz %v2970
    %v2972 = vsub.s32 %v2971, 2
    %vm2973 = vcmp.gt.s32.totalorder 0, %v2972
    %v2974 = vsel %vm2973, 0, %v2972
    %v2975 = vsub.s32 32, %v2974
    %v2976 = vshll.u32 %v2967, %v2974
    %v2977 = vshrl.u32 %v2959, %v2975
    %v2978 = vor.u32 %v2976, %v2977
    %v2979 = vsub.s32 4294967266, %v2974
    %v2980 = vadd.s32 %v2979, 127
    %v2981 = vshll.u32 %v2980, 23
    %v2982 = vor.u32 4788187, %v2981
    %v2983 = vand.u32 2147483647, %v2982
    %v2985 = vcvt.s32.f32 %v2978
    %v2986 = vmul.f32 %v2985, %v2983
    %v2987 = vxor.u32 %v2986, 2147483648
    %v2988 = vsel %vm2905, %v2987, %v2986
    %v2989 = vsub.s32 4, %v2965
    %v2990 = vsel %vm2905, %v2989, %v2965
    %v2991 = vsel %vm2904, %v193, %v2988
    %v2992 = vsel %vm2904, 0, %v2990
    %v2993 = vcosq.f32.pop %v2991
    %v2994 = vsinq.f32.pop %v2991
    %vm2995 = vweird.f32 %v193
    %v2996 = vadd.s32 %v2992, 3
    %v2997 = vand.u32 %v2996, 3
    %vm2998 = vcmp.lt.s32.totalorder %v2997, 2
    %vm2999 = vcmp.eq.s32.totalorder %v2997, 0
    %v3000 = vxor.u32 %v2994, 2147483648
    %v3001 = vsel %vm2999, %v2993, %v3000
    %vm3002 = vcmp.eq.s32.totalorder %v2997, 2
    %v3003 = vxor.u32 %v2993, 2147483648
    %v3004 = vsel %vm3002, %v3003, %v2994
    %v3005 = vsel %vm2998, %v3001, %v3004
    %v3006 = vsel %vm2995, nan, %v3005
    %v3007 = vand.u32 2147483647, %v194
    %vm3008 = vcmp.le.f32.partialorder %v3007, 0.7853982
    %vm3009 = vcmp.lt.s32.totalorder %v194, 0
    %v3010 = vand.u32 %v194, 2139095040
    %v3011 = vshrl.u32 %v3010, 23
    %v3012 = vsub.s32 %v3011, 127
    %v3013 = vand.u32 2147483647, %v194
    %v3014 = vand.u32 %v3013, 8388607
    %v3015 = vor.u32 %v3014, 8388608
    %v3016 = vsub.s32 0, %v3015
    %v3017 = vadd.s32 %v3012, 1
    %vm3018 = vcmp.gt.s32.totalorder %v3017, 0
    %v3019 = vsel %vm3018, %v3017, 0
    %v3020 = vshrl.u32 %v3019, 5
    %v3021 = vand.u32 %v3019, 31
    %v3022 = vsub.s32 32, %v3021
    %v3023 = vshrl.u32 683565275, %v3022
    %v3024 = vshll.u32 683565275, %v3021
    %v3025 = vshrl.u32 2475754826, %v3022
    %v3026 = vor.u32 %v3024, %v3025
    %v3027 = vshll.u32 2475754826, %v3021
    %v3028 = vshrl.u32 2131351028, %v3022
    %v3029 = vor.u32 %v3027, %v3028
    %v3030 = vshll.u32 2131351028, %v3021
    %v3031 = vshrl.u32 2102212464, %v3022
    %v3032 = vor.u32 %v3030, %v3031
    %v3033 = vshll.u32 2102212464, %v3021
    %v3034 = vshrl.u32 920167782, %v3022
    %v3035 = vor.u32 %v3033, %v3034
    %v3036 = vshll.u32 920167782, %v3021
    %v3037 = vshrl.u32 1326507024, %v3022
    %v3038 = vor.u32 %v3036, %v3037
    %vm3039 = vcmp.lt.s32.totalorder %v3020, 1
    %vm3040 = vcmp.lt.s32.totalorder %v3020, 2
    %vm3041 = vcmp.lt.s32.totalorder %v3020, 3
    %vm3042 = vcmp.lt.s32.totalorder %v3020, 4
    %v3043 = vsel %vm3039, %v3023, %v3026
    %v3044 = vsel %vm3042, %v3032, 2102212464
    %v3045 = vsel %vm3041, %v3029, %v3044
    %v3046 = vsel %vm3040, %v3043, %v3045
    %v3047 = vsel %vm3039, %v3026, %v3029
    %v3048 = vsel %vm3042, %v3035, 920167782
    %v3049 = vsel %vm3041, %v3032, %v3048
    %v3050 = vsel %vm3040, %v3047, %v3049
    %v3051 = vsel %vm3039, %v3029, %v3032
    %v3052 = vsel %vm3042, %v3038, 1326507024
    %v3053 = vsel %vm3041, %v3035, %v3052
    %v3054 = vsel %vm3040, %v3051, %v3053
    %v3055 = vshll.u32 %v3015, 8
    %v3056 = vmul.u32.u64.compose %v3055, %v3054
    %v3057 = vextract.low.u32 %v3056
    %v3058 = vextract.high.u32 %v3056
    %v3059 = vmul.u32.u64.compose %v3055, %v3050
    %v3060 = vextract.low.u32 %v3059
    %v3061 = vextract.high.u32 %v3059
    %v3062 = vmul.u32 %v3055, %v3046
    %v3063 = vadd.s32 %v3058, %v3060
    %vm3064 = vc.u32 %v3058, %v3060
    %v3065 = vadd.s32 %v3061, 1
    %v3066 = vsel %vm3064, %v3065, %v3061
    %v3067 = vadd.s32 %v3062, %v3066
    %v3068 = vadd.s32 %v3067, 536870912
    %v3069 = vshrl.u32 %v3068, 30
    %v3070 = vshll.u32 %v3069, 30
    %v3071 = vsub.s32 %v3067, %v3070
    %vm3072 = vcmp.lt.s32.totalorder %v3071, 0
    %v3073 = vsub.s32 0, %v3071
    %v3074 = vsel %vm3072, %v3073, %v3071
    %v3075 = vclz %v3074
    %v3076 = vsub.s32 %v3075, 2
    %vm3077 = vcmp.gt.s32.totalorder 0, %v3076
    %v3078 = vsel %vm3077, 0, %v3076
    %v3079 = vsub.s32 32, %v3078
    %v3080 = vshll.u32 %v3071, %v3078
    %v3081 = vshrl.u32 %v3063, %v3079
    %v3082 = vor.u32 %v3080, %v3081
    %v3083 = vsub.s32 4294967266, %v3078
    %v3084 = vadd.s32 %v3083, 127
    %v3085 = vshll.u32 %v3084, 23
    %v3086 = vor.u32 4788187, %v3085
    %v3087 = vand.u32 2147483647, %v3086
    %v3089 = vcvt.s32.f32 %v3082
    %v3090 = vmul.f32 %v3089, %v3087
    %v3091 = vxor.u32 %v3090, 2147483648
    %v3092 = vsel %vm3009, %v3091, %v3090
    %v3093 = vsub.s32 4, %v3069
    %v3094 = vsel %vm3009, %v3093, %v3069
    %v3095 = vsel %vm3008, %v194, %v3092
    %v3096 = vsel %vm3008, 0, %v3094
    %v3097 = vcosq.f32.pop %v3095
    %v3098 = vsinq.f32.pop %v3095
    %vm3099 = vweird.f32 %v194
    %v3100 = vadd.s32 %v3096, 3
    %v3101 = vand.u32 %v3100, 3
    %vm3102 = vcmp.lt.s32.totalorder %v3101, 2
    %vm3103 = vcmp.eq.s32.totalorder %v3101, 0
    %v3104 = vxor.u32 %v3098, 2147483648
    %v3105 = vsel %vm3103, %v3097, %v3104
    %vm3106 = vcmp.eq.s32.totalorder %v3101, 2
    %v3107 = vxor.u32 %v3097, 2147483648
    %v3108 = vsel %vm3106, %v3107, %v3098
    %v3109 = vsel %vm3102, %v3105, %v3108
    %v3110 = vsel %vm3099, nan, %v3109
    %v3111 = vand.u32 2147483647, %v195
    %vm3112 = vcmp.le.f32.partialorder %v3111, 0.7853982
    %vm3113 = vcmp.lt.s32.totalorder %v195, 0
    %v3114 = vand.u32 %v195, 2139095040
    %v3115 = vshrl.u32 %v3114, 23
    %v3116 = vsub.s32 %v3115, 127
    %v3117 = vand.u32 2147483647, %v195
    %v3118 = vand.u32 %v3117, 8388607
    %v3119 = vor.u32 %v3118, 8388608
    %v3120 = vsub.s32 0, %v3119
    %v3121 = vadd.s32 %v3116, 1
    %vm3122 = vcmp.gt.s32.totalorder %v3121, 0
    %v3123 = vsel %vm3122, %v3121, 0
    %v3124 = vshrl.u32 %v3123, 5
    %v3125 = vand.u32 %v3123, 31
    %v3126 = vsub.s32 32, %v3125
    %v3127 = vshrl.u32 683565275, %v3126
    %v3128 = vshll.u32 683565275, %v3125
    %v3129 = vshrl.u32 2475754826, %v3126
    %v3130 = vor.u32 %v3128, %v3129
    %v3131 = vshll.u32 2475754826, %v3125
    %v3132 = vshrl.u32 2131351028, %v3126
    %v3133 = vor.u32 %v3131, %v3132
    %v3134 = vshll.u32 2131351028, %v3125
    %v3135 = vshrl.u32 2102212464, %v3126
    %v3136 = vor.u32 %v3134, %v3135
    %v3137 = vshll.u32 2102212464, %v3125
    %v3138 = vshrl.u32 920167782, %v3126
    %v3139 = vor.u32 %v3137, %v3138
    %v3140 = vshll.u32 920167782, %v3125
    %v3141 = vshrl.u32 1326507024, %v3126
    %v3142 = vor.u32 %v3140, %v3141
    %vm3143 = vcmp.lt.s32.totalorder %v3124, 1
    %vm3144 = vcmp.lt.s32.totalorder %v3124, 2
    %vm3145 = vcmp.lt.s32.totalorder %v3124, 3
    %vm3146 = vcmp.lt.s32.totalorder %v3124, 4
    %v3147 = vsel %vm3143, %v3127, %v3130
    %v3148 = vsel %vm3146, %v3136, 2102212464
    %v3149 = vsel %vm3145, %v3133, %v3148
    %v3150 = vsel %vm3144, %v3147, %v3149
    %v3151 = vsel %vm3143, %v3130, %v3133
    %v3152 = vsel %vm3146, %v3139, 920167782
    %v3153 = vsel %vm3145, %v3136, %v3152
    %v3154 = vsel %vm3144, %v3151, %v3153
    %v3155 = vsel %vm3143, %v3133, %v3136
    %v3156 = vsel %vm3146, %v3142, 1326507024
    %v3157 = vsel %vm3145, %v3139, %v3156
    %v3158 = vsel %vm3144, %v3155, %v3157
    %v3159 = vshll.u32 %v3119, 8
    %v3160 = vmul.u32.u64.compose %v3159, %v3158
    %v3161 = vextract.low.u32 %v3160
    %v3162 = vextract.high.u32 %v3160
    %v3163 = vmul.u32.u64.compose %v3159, %v3154
    %v3164 = vextract.low.u32 %v3163
    %v3165 = vextract.high.u32 %v3163
    %v3166 = vmul.u32 %v3159, %v3150
    %v3167 = vadd.s32 %v3162, %v3164
    %vm3168 = vc.u32 %v3162, %v3164
    %v3169 = vadd.s32 %v3165, 1
    %v3170 = vsel %vm3168, %v3169, %v3165
    %v3171 = vadd.s32 %v3166, %v3170
    %v3172 = vadd.s32 %v3171, 536870912
    %v3173 = vshrl.u32 %v3172, 30
    %v3174 = vshll.u32 %v3173, 30
    %v3175 = vsub.s32 %v3171, %v3174
    %vm3176 = vcmp.lt.s32.totalorder %v3175, 0
    %v3177 = vsub.s32 0, %v3175
    %v3178 = vsel %vm3176, %v3177, %v3175
    %v3179 = vclz %v3178
    %v3180 = vsub.s32 %v3179, 2
    %vm3181 = vcmp.gt.s32.totalorder 0, %v3180
    %v3182 = vsel %vm3181, 0, %v3180
    %v3183 = vsub.s32 32, %v3182
    %v3184 = vshll.u32 %v3175, %v3182
    %v3185 = vshrl.u32 %v3167, %v3183
    %v3186 = vor.u32 %v3184, %v3185
    %v3187 = vsub.s32 4294967266, %v3182
    %v3188 = vadd.s32 %v3187, 127
    %v3189 = vshll.u32 %v3188, 23
    %v3190 = vor.u32 4788187, %v3189
    %v3191 = vand.u32 2147483647, %v3190
    %v3193 = vcvt.s32.f32 %v3186
    %v3194 = vmul.f32 %v3193, %v3191
    %v3195 = vxor.u32 %v3194, 2147483648
    %v3196 = vsel %vm3113, %v3195, %v3194
    %v3197 = vsub.s32 4, %v3173
    %v3198 = vsel %vm3113, %v3197, %v3173
    %v3199 = vsel %vm3112, %v195, %v3196
    %v3200 = vsel %vm3112, 0, %v3198
    %v3201 = vcosq.f32.pop %v3199
    %v3202 = vsinq.f32.pop %v3199
    %vm3203 = vweird.f32 %v195
    %v3204 = vadd.s32 %v3200, 3
    %v3205 = vand.u32 %v3204, 3
    %vm3206 = vcmp.lt.s32.totalorder %v3205, 2
    %vm3207 = vcmp.eq.s32.totalorder %v3205, 0
    %v3208 = vxor.u32 %v3202, 2147483648
    %v3209 = vsel %vm3207, %v3201, %v3208
    %vm3210 = vcmp.eq.s32.totalorder %v3205, 2
    %v3211 = vxor.u32 %v3201, 2147483648
    %v3212 = vsel %vm3210, %v3211, %v3202
    %v3213 = vsel %vm3206, %v3209, %v3212
    %v3214 = vsel %vm3203, nan, %v3213
    %v3215 = vand.u32 2147483647, %v196
    %vm3216 = vcmp.le.f32.partialorder %v3215, 0.7853982
    %vm3217 = vcmp.lt.s32.totalorder %v196, 0
    %v3218 = vand.u32 %v196, 2139095040
    %v3219 = vshrl.u32 %v3218, 23
    %v3220 = vsub.s32 %v3219, 127
    %v3221 = vand.u32 2147483647, %v196
    %v3222 = vand.u32 %v3221, 8388607
    %v3223 = vor.u32 %v3222, 8388608
    %v3224 = vsub.s32 0, %v3223
    %v3225 = vadd.s32 %v3220, 1
    %vm3226 = vcmp.gt.s32.totalorder %v3225, 0
    %v3227 = vsel %vm3226, %v3225, 0
    %v3228 = vshrl.u32 %v3227, 5
    %v3229 = vand.u32 %v3227, 31
    %v3230 = vsub.s32 32, %v3229
    %v3231 = vshrl.u32 683565275, %v3230
    %v3232 = vshll.u32 683565275, %v3229
    %v3233 = vshrl.u32 2475754826, %v3230
    %v3234 = vor.u32 %v3232, %v3233
    %v3235 = vshll.u32 2475754826, %v3229
    %v3236 = vshrl.u32 2131351028, %v3230
    %v3237 = vor.u32 %v3235, %v3236
    %v3238 = vshll.u32 2131351028, %v3229
    %v3239 = vshrl.u32 2102212464, %v3230
    %v3240 = vor.u32 %v3238, %v3239
    %v3241 = vshll.u32 2102212464, %v3229
    %v3242 = vshrl.u32 920167782, %v3230
    %v3243 = vor.u32 %v3241, %v3242
    %v3244 = vshll.u32 920167782, %v3229
    %v3245 = vshrl.u32 1326507024, %v3230
    %v3246 = vor.u32 %v3244, %v3245
    %vm3247 = vcmp.lt.s32.totalorder %v3228, 1
    %vm3248 = vcmp.lt.s32.totalorder %v3228, 2
    %vm3249 = vcmp.lt.s32.totalorder %v3228, 3
    %vm3250 = vcmp.lt.s32.totalorder %v3228, 4
    %v3251 = vsel %vm3247, %v3231, %v3234
    %v3252 = vsel %vm3250, %v3240, 2102212464
    %v3253 = vsel %vm3249, %v3237, %v3252
    %v3254 = vsel %vm3248, %v3251, %v3253
    %v3255 = vsel %vm3247, %v3234, %v3237
    %v3256 = vsel %vm3250, %v3243, 920167782
    %v3257 = vsel %vm3249, %v3240, %v3256
    %v3258 = vsel %vm3248, %v3255, %v3257
    %v3259 = vsel %vm3247, %v3237, %v3240
    %v3260 = vsel %vm3250, %v3246, 1326507024
    %v3261 = vsel %vm3249, %v3243, %v3260
    %v3262 = vsel %vm3248, %v3259, %v3261
    %v3263 = vshll.u32 %v3223, 8
    %v3264 = vmul.u32.u64.compose %v3263, %v3262
    %v3265 = vextract.low.u32 %v3264
    %v3266 = vextract.high.u32 %v3264
    %v3267 = vmul.u32.u64.compose %v3263, %v3258
    %v3268 = vextract.low.u32 %v3267
    %v3269 = vextract.high.u32 %v3267
    %v3270 = vmul.u32 %v3263, %v3254
    %v3271 = vadd.s32 %v3266, %v3268
    %vm3272 = vc.u32 %v3266, %v3268
    %v3273 = vadd.s32 %v3269, 1
    %v3274 = vsel %vm3272, %v3273, %v3269
    %v3275 = vadd.s32 %v3270, %v3274
    %v3276 = vadd.s32 %v3275, 536870912
    %v3277 = vshrl.u32 %v3276, 30
    %v3278 = vshll.u32 %v3277, 30
    %v3279 = vsub.s32 %v3275, %v3278
    %vm3280 = vcmp.lt.s32.totalorder %v3279, 0
    %v3281 = vsub.s32 0, %v3279
    %v3282 = vsel %vm3280, %v3281, %v3279
    %v3283 = vclz %v3282
    %v3284 = vsub.s32 %v3283, 2
    %vm3285 = vcmp.gt.s32.totalorder 0, %v3284
    %v3286 = vsel %vm3285, 0, %v3284
    %v3287 = vsub.s32 32, %v3286
    %v3288 = vshll.u32 %v3279, %v3286
    %v3289 = vshrl.u32 %v3271, %v3287
    %v3290 = vor.u32 %v3288, %v3289
    %v3291 = vsub.s32 4294967266, %v3286
    %v3292 = vadd.s32 %v3291, 127
    %v3293 = vshll.u32 %v3292, 23
    %v3294 = vor.u32 4788187, %v3293
    %v3295 = vand.u32 2147483647, %v3294
    %v3297 = vcvt.s32.f32 %v3290
    %v3298 = vmul.f32 %v3297, %v3295
    %v3299 = vxor.u32 %v3298, 2147483648
    %v3300 = vsel %vm3217, %v3299, %v3298
    %v3301 = vsub.s32 4, %v3277
    %v3302 = vsel %vm3217, %v3301, %v3277
    %v3303 = vsel %vm3216, %v196, %v3300
    %v3304 = vsel %vm3216, 0, %v3302
    %v3305 = vcosq.f32.pop %v3303
    %v3306 = vsinq.f32.pop %v3303
    %vm3307 = vweird.f32 %v196
    %v3308 = vadd.s32 %v3304, 3
    %v3309 = vand.u32 %v3308, 3
    %vm3310 = vcmp.lt.s32.totalorder %v3309, 2
    %vm3311 = vcmp.eq.s32.totalorder %v3309, 0
    %v3312 = vxor.u32 %v3306, 2147483648
    %v3313 = vsel %vm3311, %v3305, %v3312
    %vm3314 = vcmp.eq.s32.totalorder %v3309, 2
    %v3315 = vxor.u32 %v3305, 2147483648
    %v3316 = vsel %vm3314, %v3315, %v3306
    %v3317 = vsel %vm3310, %v3313, %v3316
    %v3318 = vsel %vm3307, nan, %v3317
    %v3319 = vand.u32 2147483647, %v197
    %vm3320 = vcmp.le.f32.partialorder %v3319, 0.7853982
    %vm3321 = vcmp.lt.s32.totalorder %v197, 0
    %v3322 = vand.u32 %v197, 2139095040
    %v3323 = vshrl.u32 %v3322, 23
    %v3324 = vsub.s32 %v3323, 127
    %v3325 = vand.u32 2147483647, %v197
    %v3326 = vand.u32 %v3325, 8388607
    %v3327 = vor.u32 %v3326, 8388608
    %v3328 = vsub.s32 0, %v3327
    %v3329 = vadd.s32 %v3324, 1
    %vm3330 = vcmp.gt.s32.totalorder %v3329, 0
    %v3331 = vsel %vm3330, %v3329, 0
    %v3332 = vshrl.u32 %v3331, 5
    %v3333 = vand.u32 %v3331, 31
    %v3334 = vsub.s32 32, %v3333
    %v3335 = vshrl.u32 683565275, %v3334
    %v3336 = vshll.u32 683565275, %v3333
    %v3337 = vshrl.u32 2475754826, %v3334
    %v3338 = vor.u32 %v3336, %v3337
    %v3339 = vshll.u32 2475754826, %v3333
    %v3340 = vshrl.u32 2131351028, %v3334
    %v3341 = vor.u32 %v3339, %v3340
    %v3342 = vshll.u32 2131351028, %v3333
    %v3343 = vshrl.u32 2102212464, %v3334
    %v3344 = vor.u32 %v3342, %v3343
    %v3345 = vshll.u32 2102212464, %v3333
    %v3346 = vshrl.u32 920167782, %v3334
    %v3347 = vor.u32 %v3345, %v3346
    %v3348 = vshll.u32 920167782, %v3333
    %v3349 = vshrl.u32 1326507024, %v3334
    %v3350 = vor.u32 %v3348, %v3349
    %vm3351 = vcmp.lt.s32.totalorder %v3332, 1
    %vm3352 = vcmp.lt.s32.totalorder %v3332, 2
    %vm3353 = vcmp.lt.s32.totalorder %v3332, 3
    %vm3354 = vcmp.lt.s32.totalorder %v3332, 4
    %v3355 = vsel %vm3351, %v3335, %v3338
    %v3356 = vsel %vm3354, %v3344, 2102212464
    %v3357 = vsel %vm3353, %v3341, %v3356
    %v3358 = vsel %vm3352, %v3355, %v3357
    %v3359 = vsel %vm3351, %v3338, %v3341
    %v3360 = vsel %vm3354, %v3347, 920167782
    %v3361 = vsel %vm3353, %v3344, %v3360
    %v3362 = vsel %vm3352, %v3359, %v3361
    %v3363 = vsel %vm3351, %v3341, %v3344
    %v3364 = vsel %vm3354, %v3350, 1326507024
    %v3365 = vsel %vm3353, %v3347, %v3364
    %v3366 = vsel %vm3352, %v3363, %v3365
    %v3367 = vshll.u32 %v3327, 8
    %v3368 = vmul.u32.u64.compose %v3367, %v3366
    %v3369 = vextract.low.u32 %v3368
    %v3370 = vextract.high.u32 %v3368
    %v3371 = vmul.u32.u64.compose %v3367, %v3362
    %v3372 = vextract.low.u32 %v3371
    %v3373 = vextract.high.u32 %v3371
    %v3374 = vmul.u32 %v3367, %v3358
    %v3375 = vadd.s32 %v3370, %v3372
    %vm3376 = vc.u32 %v3370, %v3372
    %v3377 = vadd.s32 %v3373, 1
    %v3378 = vsel %vm3376, %v3377, %v3373
    %v3379 = vadd.s32 %v3374, %v3378
    %v3380 = vadd.s32 %v3379, 536870912
    %v3381 = vshrl.u32 %v3380, 30
    %v3382 = vshll.u32 %v3381, 30
    %v3383 = vsub.s32 %v3379, %v3382
    %vm3384 = vcmp.lt.s32.totalorder %v3383, 0
    %v3385 = vsub.s32 0, %v3383
    %v3386 = vsel %vm3384, %v3385, %v3383
    %v3387 = vclz %v3386
    %v3388 = vsub.s32 %v3387, 2
    %vm3389 = vcmp.gt.s32.totalorder 0, %v3388
    %v3390 = vsel %vm3389, 0, %v3388
    %v3391 = vsub.s32 32, %v3390
    %v3392 = vshll.u32 %v3383, %v3390
    %v3393 = vshrl.u32 %v3375, %v3391
    %v3394 = vor.u32 %v3392, %v3393
    %v3395 = vsub.s32 4294967266, %v3390
    %v3396 = vadd.s32 %v3395, 127
    %v3397 = vshll.u32 %v3396, 23
    %v3398 = vor.u32 4788187, %v3397
    %v3399 = vand.u32 2147483647, %v3398
    %v3401 = vcvt.s32.f32 %v3394
    %v3402 = vmul.f32 %v3401, %v3399
    %v3403 = vxor.u32 %v3402, 2147483648
    %v3404 = vsel %vm3321, %v3403, %v3402
    %v3405 = vsub.s32 4, %v3381
    %v3406 = vsel %vm3321, %v3405, %v3381
    %v3407 = vsel %vm3320, %v197, %v3404
    %v3408 = vsel %vm3320, 0, %v3406
    %v3409 = vcosq.f32.pop %v3407
    %v3410 = vsinq.f32.pop %v3407
    %vm3411 = vweird.f32 %v197
    %v3412 = vadd.s32 %v3408, 3
    %v3413 = vand.u32 %v3412, 3
    %vm3414 = vcmp.lt.s32.totalorder %v3413, 2
    %vm3415 = vcmp.eq.s32.totalorder %v3413, 0
    %v3416 = vxor.u32 %v3410, 2147483648
    %v3417 = vsel %vm3415, %v3409, %v3416
    %vm3418 = vcmp.eq.s32.totalorder %v3413, 2
    %v3419 = vxor.u32 %v3409, 2147483648
    %v3420 = vsel %vm3418, %v3419, %v3410
    %v3421 = vsel %vm3414, %v3417, %v3420
    %v3422 = vsel %vm3411, nan, %v3421
    %v3423 = vand.u32 2147483647, %v198
    %vm3424 = vcmp.le.f32.partialorder %v3423, 0.7853982
    %vm3425 = vcmp.lt.s32.totalorder %v198, 0
    %v3426 = vand.u32 %v198, 2139095040
    %v3427 = vshrl.u32 %v3426, 23
    %v3428 = vsub.s32 %v3427, 127
    %v3429 = vand.u32 2147483647, %v198
    %v3430 = vand.u32 %v3429, 8388607
    %v3431 = vor.u32 %v3430, 8388608
    %v3432 = vsub.s32 0, %v3431
    %v3433 = vadd.s32 %v3428, 1
    %vm3434 = vcmp.gt.s32.totalorder %v3433, 0
    %v3435 = vsel %vm3434, %v3433, 0
    %v3436 = vshrl.u32 %v3435, 5
    %v3437 = vand.u32 %v3435, 31
    %v3438 = vsub.s32 32, %v3437
    %v3439 = vshrl.u32 683565275, %v3438
    %v3440 = vshll.u32 683565275, %v3437
    %v3441 = vshrl.u32 2475754826, %v3438
    %v3442 = vor.u32 %v3440, %v3441
    %v3443 = vshll.u32 2475754826, %v3437
    %v3444 = vshrl.u32 2131351028, %v3438
    %v3445 = vor.u32 %v3443, %v3444
    %v3446 = vshll.u32 2131351028, %v3437
    %v3447 = vshrl.u32 2102212464, %v3438
    %v3448 = vor.u32 %v3446, %v3447
    %v3449 = vshll.u32 2102212464, %v3437
    %v3450 = vshrl.u32 920167782, %v3438
    %v3451 = vor.u32 %v3449, %v3450
    %v3452 = vshll.u32 920167782, %v3437
    %v3453 = vshrl.u32 1326507024, %v3438
    %v3454 = vor.u32 %v3452, %v3453
    %vm3455 = vcmp.lt.s32.totalorder %v3436, 1
    %vm3456 = vcmp.lt.s32.totalorder %v3436, 2
    %vm3457 = vcmp.lt.s32.totalorder %v3436, 3
    %vm3458 = vcmp.lt.s32.totalorder %v3436, 4
    %v3459 = vsel %vm3455, %v3439, %v3442
    %v3460 = vsel %vm3458, %v3448, 2102212464
    %v3461 = vsel %vm3457, %v3445, %v3460
    %v3462 = vsel %vm3456, %v3459, %v3461
    %v3463 = vsel %vm3455, %v3442, %v3445
    %v3464 = vsel %vm3458, %v3451, 920167782
    %v3465 = vsel %vm3457, %v3448, %v3464
    %v3466 = vsel %vm3456, %v3463, %v3465
    %v3467 = vsel %vm3455, %v3445, %v3448
    %v3468 = vsel %vm3458, %v3454, 1326507024
    %v3469 = vsel %vm3457, %v3451, %v3468
    %v3470 = vsel %vm3456, %v3467, %v3469
    %v3471 = vshll.u32 %v3431, 8
    %v3472 = vmul.u32.u64.compose %v3471, %v3470
    %v3473 = vextract.low.u32 %v3472
    %v3474 = vextract.high.u32 %v3472
    %v3475 = vmul.u32.u64.compose %v3471, %v3466
    %v3476 = vextract.low.u32 %v3475
    %v3477 = vextract.high.u32 %v3475
    %v3478 = vmul.u32 %v3471, %v3462
    %v3479 = vadd.s32 %v3474, %v3476
    %vm3480 = vc.u32 %v3474, %v3476
    %v3481 = vadd.s32 %v3477, 1
    %v3482 = vsel %vm3480, %v3481, %v3477
    %v3483 = vadd.s32 %v3478, %v3482
    %v3484 = vadd.s32 %v3483, 536870912
    %v3485 = vshrl.u32 %v3484, 30
    %v3486 = vshll.u32 %v3485, 30
    %v3487 = vsub.s32 %v3483, %v3486
    %vm3488 = vcmp.lt.s32.totalorder %v3487, 0
    %v3489 = vsub.s32 0, %v3487
    %v3490 = vsel %vm3488, %v3489, %v3487
    %v3491 = vclz %v3490
    %v3492 = vsub.s32 %v3491, 2
    %vm3493 = vcmp.gt.s32.totalorder 0, %v3492
    %v3494 = vsel %vm3493, 0, %v3492
    %v3495 = vsub.s32 32, %v3494
    %v3496 = vshll.u32 %v3487, %v3494
    %v3497 = vshrl.u32 %v3479, %v3495
    %v3498 = vor.u32 %v3496, %v3497
    %v3499 = vsub.s32 4294967266, %v3494
    %v3500 = vadd.s32 %v3499, 127
    %v3501 = vshll.u32 %v3500, 23
    %v3502 = vor.u32 4788187, %v3501
    %v3503 = vand.u32 2147483647, %v3502
    %v3505 = vcvt.s32.f32 %v3498
    %v3506 = vmul.f32 %v3505, %v3503
    %v3507 = vxor.u32 %v3506, 2147483648
    %v3508 = vsel %vm3425, %v3507, %v3506
    %v3509 = vsub.s32 4, %v3485
    %v3510 = vsel %vm3425, %v3509, %v3485
    %v3511 = vsel %vm3424, %v198, %v3508
    %v3512 = vsel %vm3424, 0, %v3510
    %v3513 = vcosq.f32.pop %v3511
    %v3514 = vsinq.f32.pop %v3511
    %vm3515 = vweird.f32 %v198
    %v3516 = vadd.s32 %v3512, 3
    %v3517 = vand.u32 %v3516, 3
    %vm3518 = vcmp.lt.s32.totalorder %v3517, 2
    %vm3519 = vcmp.eq.s32.totalorder %v3517, 0
    %v3520 = vxor.u32 %v3514, 2147483648
    %v3521 = vsel %vm3519, %v3513, %v3520
    %vm3522 = vcmp.eq.s32.totalorder %v3517, 2
    %v3523 = vxor.u32 %v3513, 2147483648
    %v3524 = vsel %vm3522, %v3523, %v3514
    %v3525 = vsel %vm3518, %v3521, %v3524
    %v3526 = vsel %vm3515, nan, %v3525
    %3527 = vst [vmem:[#allocation2] sm:$0xff] %v302
    %3528 = vst [vmem:[#allocation2 + $0x8] sm:$0xff] %v406
    %3529 = vst [vmem:[#allocation2 + $0x10] sm:$0xff] %v510
    %3530 = vst [vmem:[#allocation2 + $0x18] sm:$0xff] %v614
    %3531 = vst [vmem:[#allocation2 + $0x20] sm:$0xff] %v718
    %3532 = vst [vmem:[#allocation2 + $0x28] sm:$0xff] %v822
    %3533 = vst [vmem:[#allocation2 + $0x30] sm:$0xff] %v926
    %3534 = vst [vmem:[#allocation2 + $0x38] sm:$0xff] %v1030
    %3535 = vst [vmem:[#allocation2 + $0x40] sm:$0xff] %v1134
    %3536 = vst [vmem:[#allocation2 + $0x48] sm:$0xff] %v1238
    %3537 = vst [vmem:[#allocation2 + $0x50] sm:$0xff] %v1342
    %3538 = vst [vmem:[#allocation2 + $0x58] sm:$0xff] %v1446
    %3539 = vst [vmem:[#allocation2 + $0x60] sm:$0xff] %v1550
    %3540 = vst [vmem:[#allocation2 + $0x68] sm:$0xff] %v1654
    %3541 = vst [vmem:[#allocation2 + $0x70] sm:$0xff] %v1758
    %3542 = vst [vmem:[#allocation2 + $0x78] sm:$0xff] %v1862
    %3543 = vst [vmem:[#allocation2 + $0x80] sm:$0xff] %v1966
    %3544 = vst [vmem:[#allocation2 + $0x88] sm:$0xff] %v2070
    %3545 = vst [vmem:[#allocation2 + $0x90] sm:$0xff] %v2174
    %3546 = vst [vmem:[#allocation2 + $0x98] sm:$0xff] %v2278
    %3547 = vst [vmem:[#allocation2 + $0xa0] sm:$0xff] %v2382
    %3548 = vst [vmem:[#allocation2 + $0xa8] sm:$0xff] %v2486
    %3549 = vst [vmem:[#allocation2 + $0xb0] sm:$0xff] %v2590
    %3550 = vst [vmem:[#allocation2 + $0xb8] sm:$0xff] %v2694
    %3551 = vst [vmem:[#allocation2 + $0xc0] sm:$0xff] %v2798
    %3552 = vst [vmem:[#allocation2 + $0xc8] sm:$0xff] %v2902
    %3553 = vst [vmem:[#allocation2 + $0xd0] sm:$0xff] %v3006
    %3554 = vst [vmem:[#allocation2 + $0xd8] sm:$0xff] %v3110
    %3555 = vst [vmem:[#allocation2 + $0xe0] sm:$0xff] %v3214
    %3556 = vst [vmem:[#allocation2 + $0xe8] sm:$0xff] %v3318
    %3557 = vst [vmem:[#allocation2 + $0xf0] sm:$0xff] %v3422
    %3558 = vst [vmem:[#allocation2 + $0xf8] sm:$0xff] %v3526
    // Predicated region
    $region14: #{tpu_custom_call.1} parent=1 // pred_check
      _
    $region15: #{tpu_custom_call.1} parent=1 // pred_check_branch
      %3560 = sbr.rel (0) target = $region17
    $region16: #{tpu_custom_call.1} parent=1 // pred_region
      %s3562 = ssub.s32 4096, 4096
      %3563 = vsyncadd [#allocation3], %s3562
      %s3564 = sshll.u32 [#allocation2], 4
      %s3565 = int_to_ptr.vmem [resolvable:$true] %s3564
      %3570 = dma.vmem_to_hbm [thread:$0]  %s3565, 4096, %s3, [#allocation3], 256, 256, 16
    $region17: #{tpu_custom_call.1} parent=1 // pred_fallthru
      _
    // Predicated region
    $region18: #{tpu_custom_call.1} parent=1 // pred_check
      _
    $region19: #{tpu_custom_call.1} parent=1 // pred_check_branch
      %3572 = sbr.rel (0) target = $region21
    $region20: #{tpu_custom_call.1} parent=1 // pred_region
      %3573 = dma.done [#allocation3], 4096
    $region21: #{tpu_custom_call.1} parent=1 // pred_fallthru
      _
    %3574 = vsyncpa [#allocation3], 1

</llo_original>
